<compile_context>
chip_gen: v7x
topology: tpu7x:2x2x1
jax: 0.10.0
libtpu: 0.0.40
codegen_flags: <defaults>
</compile_context>

<pallas_src>
import jax
import jax.numpy as jnp
from jax import lax
from jax.experimental import pallas as pl
from jax.experimental.pallas import tpu as pltpu


_UNROLL = 4  # in-kernel unroll factor for the serial recurrence


# ---------------------------------------------------------------------------
# In-kernel building blocks
# ---------------------------------------------------------------------------
def _layer0_gates(x_ref, wih_ref, b_ref, gx_scr, L, Bp, cs):
    """Input->gate matmul for layer 0; the context window is never materialized.

    x_ref:   (S*Bp, E) bf16, time-major flattened (row = t*Bp + b)
    wih_ref: (cs, E, 8H) bf16, fused [W_ih_fwd^T | W_ih_bwd^T] per window slot
    b_ref:   (1, 8H) f32 combined bias
    gx_scr:  (L, Bp, 8H) f32 scratch, written with a single bulk store.
    window @ W_ih == sum_j x[t+j] @ W_ih[j]  -> shifted row-block matmuls.
    """
    gx = jnp.dot(x_ref[pl.ds(0, L * Bp), :], wih_ref[0],
                 preferred_element_type=jnp.float32)
    for j in range(1, cs):
        gx = gx + jnp.dot(x_ref[pl.ds(j * Bp, L * Bp), :], wih_ref[j],
                          preferred_element_type=jnp.float32)
    gx = gx + b_ref[...]
    gx_scr[...] = gx.reshape(gx_scr.shape)


def _stack_gates(act_f_scr, act_b_scr, wih_ref, b_ref, gx_scr, L, Bp, H):
    """Input->gate matmul for stacked layers (reads previous layer's VMEM slabs).

    wih_ref: (2H, 8H) bf16; rows [:H] multiply the fwd slab, [H:] the bwd slab
    (identical to concat([fwd, bwd], -1) @ W_ih, without the concat copy).
    """
    af = act_f_scr[...].reshape(L * Bp, H).astype(jnp.bfloat16)
    ab = act_b_scr[...].reshape(L * Bp, H).astype(jnp.bfloat16)
    gx = (jnp.dot(af, wih_ref[pl.ds(0, H), :],
                  preferred_element_type=jnp.float32)
          + jnp.dot(ab, wih_ref[pl.ds(H, H), :],
                    preferred_element_type=jnp.float32)
          + b_ref[...])
    gx_scr[...] = gx.reshape(gx_scr.shape)


def _bilstm_recurrence(gx_scr, whh_ref, out_f_ref, out_b_ref, h_scr, c_scr):
    """Bidirectional LSTM recurrence over precomputed input gates.

    gx_scr:  (L, Bp, 8H) f32; cols [:4H] fwd gates at t, [4H:] bwd gates at t,
             gate order i|f|o|g, bias already added.
    whh_ref: (2H, 4H) bf16 block-diagonal recurrent weights
             (rows [:H] = Whh_fwd^T, rows [H:] = Whh_bwd^T).
    out_f_ref / out_b_ref: (L, Bp, H) f32 outputs (forward time order).
    h_scr:   (2Bp, 2H) f32 block-diagonal h: rows [:Bp] = [h_f | 0],
             rows [Bp:] = [0 | h_b].
    c_scr:   (2Bp, H) f32.
    """
    L, Bp, H = out_f_ref.shape
    h_scr[...] = jnp.zeros_like(h_scr)
    c_scr[...] = jnp.zeros_like(c_scr)

    def step(t):
        t_rev = L - 1 - t
        # One MXU pass covers both directions exactly: (2Bp,2H) @ (2H,4H).
        hh = jnp.dot(h_scr[...].astype(jnp.bfloat16), whh_ref[...],
                     preferred_element_type=jnp.float32)           # (2Bp, 4H)
        # Paired input-gate tile -- gathered OFF the h->h serial chain.
        gx_t = jnp.concatenate([gx_scr[t][:, :4 * H],
                                gx_scr[t_rev][:, 4 * H:]], axis=0)  # (2Bp, 4H)
        gates = gx_t + hh
        # Permuted gate order i|f|o|g -> one sigmoid launch + one tanh launch.
        sig = jax.nn.sigmoid(gates[:, :3 * H])
        i_g = sig[:, 0 * H:1 * H]
        f_g = sig[:, 1 * H:2 * H]
        o_g = sig[:, 2 * H:3 * H]
        g_g = jnp.tanh(gates[:, 3 * H:4 * H])
        c_new = f_g * c_scr[...] + i_g * g_g
        h_new = o_g * jnp.tanh(c_new)                              # (2Bp, H)
        c_scr[...] = c_new
        # Keep h block-diagonal: only the diagonal blocks ever change.
        h_scr[0:Bp, 0:H] = h_new[0:Bp]
        h_scr[Bp:2 * Bp, H:2 * H] = h_new[Bp:2 * Bp]
        out_f_ref[t] = h_new[:Bp]
        out_b_ref[t_rev] = h_new[Bp:]

    unroll = max(1, min(_UNROLL, L))
    n_blk = L // unroll

    def blk(b, carry):
        base = b * unroll
        for u in range(unroll):          # Python-unrolled for LLO visibility
            step(base + u)
        return carry

    if n_blk > 0:
        lax.fori_loop(0, n_blk, blk, 0)
    for t in range(n_blk * unroll, L):   # static remainder steps
        step(t)


def _head(act_f_scr, act_b_scr, x_ref, w1l_ref, w1c_ref, b1_ref, w2_ref,
          b2_ref, o_ref, L, Bp, cs, H):
    """Linear([fwd|bwd|window]) -> max over time -> Linear, fully batched."""
    af = act_f_scr[...].reshape(L * Bp, H).astype(jnp.bfloat16)
    ab = act_b_scr[...].reshape(L * Bp, H).astype(jnp.bfloat16)
    # Split-row matmuls == concat([lstm_fwd, lstm_bwd, window]) @ w1, one big
    # M = L*Bp MXU pass, no concat / window materialization.
    lin = (jnp.dot(af, w1l_ref[pl.ds(0, H), :],
                   preferred_element_type=jnp.float32)
           + jnp.dot(ab, w1l_ref[pl.ds(H, H), :],
                     preferred_element_type=jnp.float32))
    for j in range(cs):
        lin = lin + jnp.dot(x_ref[pl.ds(j * Bp, L * Bp), :], w1c_ref[j],
                            preferred_element_type=jnp.float32)
    lin = lin + b1_ref[...]                                        # (L*Bp, Hh)
    # max_pool1d over time: log-depth reduce over the leading axis.
    m = jnp.max(lin.reshape(L, Bp, lin.shape[-1]), axis=0)         # (Bp, Hh)
    o_ref[...] = (jnp.dot(m.astype(jnp.bfloat16), w2_ref[...],
                          preferred_element_type=jnp.float32)
                  + b2_ref[...])                                   # (Bp, C)


def _make_fused_kernel(num_layers, L, Bp, cs, H):
    def kernel(x_ref, *refs):
        lw = refs[:3 * num_layers]
        (w1l_ref, w1c_ref, b1_ref, w2_ref, b2_ref,
         o_ref) = refs[3 * num_layers:3 * num_layers + 6]
        gx_scr, h_scr, c_scr, af_scr, ab_scr = refs[3 * num_layers + 6:]

        # Layer 0 (context window built implicitly from shifted row blocks).
        _layer0_gates(x_ref, lw[0], lw[2], gx_scr, L, Bp, cs)
        _bilstm_recurrence(gx_scr, lw[1], af_scr, ab_scr, h_scr, c_scr)
        # Stacked layers: gx is fully hoisted before the recurrence, so the
        # activation scratch can be overwritten in place.
        for l in range(1, num_layers):
            wih, whh, b = lw[3 * l], lw[3 * l + 1], lw[3 * l + 2]
            _stack_gates(af_scr, ab_scr, wih, b, gx_scr, L, Bp, H)
            _bilstm_recurrence(gx_scr, whh, af_scr, ab_scr, h_scr, c_scr)
        # Head.
        _head(af_scr, ab_scr, x_ref, w1l_ref, w1c_ref, b1_ref, w2_ref, b2_ref,
              o_ref, L, Bp, cs, H)
    return kernel


# ---------------------------------------------------------------------------
# Weight fusion / permutation (plain JAX, one-time)
# ---------------------------------------------------------------------------
def _permute_gate_cols(w, H):
    """PyTorch gate order i|f|g|o -> i|f|o|g along the last (gate) axis."""
    return jnp.concatenate([w[:, :2 * H], w[:, 3 * H:4 * H], w[:, 2 * H:3 * H]],
                           axis=1)


def _fuse_layer(layer, H):
    wih_f, whh_f, b_f = layer['fwd']
    wih_b, whh_b, b_b = layer['bwd']
    wih = jnp.concatenate([_permute_gate_cols(wih_f, H),
                           _permute_gate_cols(wih_b, H)], axis=1)   # (in, 8H)
    whh = jnp.concatenate([_permute_gate_cols(whh_f, H),
                           _permute_gate_cols(whh_b, H)], axis=0)   # (2H, 4H)
    b = jnp.concatenate([_permute_gate_cols(b_f, H),
                         _permute_gate_cols(b_b, H)], axis=1)       # (1, 8H)
    return wih.astype(jnp.bfloat16), whh.astype(jnp.bfloat16), b


# ---------------------------------------------------------------------------
# Full forward (glue in plain JAX, hot path in one Pallas call)
# ---------------------------------------------------------------------------
def brain_lstm_forward(x, params, context_size):
    B, S, E = x.shape
    cs = context_size
    L = S - cs + 1
    H = params['lstm'][0]['fwd'][1].shape[0]
    num_layers = len(params['lstm'])
    Hh = params['w1'].shape[1]
    C = params['w2'].shape[1]

    # Pad batch to a multiple of 16: sublane-aligned slices for bf16 and f32.
    Bp = ((B + 15) // 16) * 16
    xp = jnp.pad(x, ((0, Bp - B), (0, 0), (0, 0)))
    # time-major, flattened: row index = t*Bp + b
    x_flat = jnp.transpose(xp, (1, 0, 2)).reshape(S * Bp, E).astype(jnp.bfloat16)

    layer_args = []
    for li, layer in enumerate(params['lstm']):
        wih, whh, b = _fuse_layer(layer, H)
        if li == 0:
            wih = wih.reshape(cs, E, 8 * H)     # per-window-slot weight blocks
        layer_args += [wih, whh, b]

    w1 = params['w1']
    w1_lstm = w1[:2 * H].astype(jnp.bfloat16)                     # (2H, Hh)
    w1_ctx = w1[2 * H:].reshape(cs, E, Hh).astype(jnp.bfloat16)   # (cs, E, Hh)
    w2 = params['w2'].astype(jnp.bfloat16)

    inputs = [x_flat] + layer_args + [w1_lstm, w1_ctx, params['b1'],
                                      w2, params['b2']]

    vmem = pl.BlockSpec(memory_space=pltpu.MemorySpace.VMEM)
    scratch = [
        pltpu.VMEM((L, Bp, 8 * H), jnp.float32),   # gx (both directions)
        pltpu.VMEM((2 * Bp, 2 * H), jnp.float32),  # block-diagonal h
        pltpu.VMEM((2 * Bp, H), jnp.float32),      # c
        pltpu.VMEM((L, Bp, H), jnp.float32),       # activations fwd
        pltpu.VMEM((L, Bp, H), jnp.float32),       # activations bwd
    ]

    # Explicit VMEM budget from the actual resident set (with headroom),
    # capped below v7x's 64 MiB physical VMEM.
    in_bytes = sum(int(a.size) * a.dtype.itemsize for a in inputs)
    scr_bytes = 4 * (L * Bp * 8 * H + 2 * Bp * 2 * H + 2 * Bp * H
                     + 2 * L * Bp * H)
    out_bytes = 4 * Bp * C
    vmem_limit = int(min(48 << 20,
                         max(32 << 20, 2 * (in_bytes + scr_bytes + out_bytes))))

    out = pl.pallas_call(
        _make_fused_kernel(num_layers, L, Bp, cs, H),
        out_shape=jax.ShapeDtypeStruct((Bp, C), jnp.float32),
        in_specs=[vmem] * len(inputs),
        out_specs=vmem,
        scratch_shapes=scratch,
        compiler_params=pltpu.CompilerParams(vmem_limit_bytes=vmem_limit),
    )(*inputs)
    return out[:B]


# ---------------------------------------------------------------------------
# Pure-JAX reference (fp32, PyTorch semantics) for correctness check
# ---------------------------------------------------------------------------
def _lstm_ref_dir(x_tm, wih, whh, b):
    H = whh.shape[0]
    B = x_tm.shape[1]

    def step(carry, x_t):
        h, c = carry
        gates = x_t @ wih + h @ whh + b
        i_g = jax.nn.sigmoid(gates[:, :H])
        f_g = jax.nn.sigmoid(gates[:, H:2 * H])
        g_g = jnp.tanh(gates[:, 2 * H:3 * H])
        o_g = jax.nn.sigmoid(gates[:, 3 * H:])
        c = f_g * c + i_g * g_g
        h = o_g * jnp.tanh(c)
        return (h, c), h

    init = (jnp.zeros((B, H), jnp.float32), jnp.zeros((B, H), jnp.float32))
    _, hs = lax.scan(step, init, x_tm)
    return hs


def brain_lstm_ref(x, params, context_size):
    B, S, E = x.shape
    L = S - context_size + 1
    windows = jnp.stack(
        [x[:, t:t + context_size, :].reshape(B, context_size * E)
         for t in range(L)], axis=1)
    x_tm = jnp.transpose(windows, (1, 0, 2))
    inp = x_tm
    for layer in params['lstm']:
        fwd = _lstm_ref_dir(inp, *layer['fwd'])
        bwd = _lstm_ref_dir(inp[::-1], *layer['bwd'])[::-1]
        inp = jnp.concatenate([fwd, bwd], axis=-1)
    enc = jnp.transpose(jnp.concatenate([inp, x_tm], axis=-1), (1, 0, 2))
    h = enc @ params['w1'] + params['b1'][None]
    m = jnp.max(h, axis=1)
    return m @ params['w2'] + params['b2']


# ---------------------------------------------------------------------------
# Deterministic parameter init (PyTorch-style uniform(-1/sqrt(H), 1/sqrt(H)))
# ---------------------------------------------------------------------------
def init_params(key, embed_dim, hidden_dim, num_layers, context_size,
                combine_dim):
    H = hidden_dim
    cs_e = embed_dim * context_size
    k = 1.0 / float(H) ** 0.5
    keys = iter(jax.random.split(key, 6 * num_layers + 4))

    def u(shape):
        return jax.random.uniform(next(keys), shape, jnp.float32, -k, k)

    layers = []
    for l in range(num_layers):
        in_size = cs_e if l == 0 else 2 * H
        layers.append({
            # (W_ih^T, W_hh^T, combined bias) -- PyTorch gate order i|f|g|o
            'fwd': (u((in_size, 4 * H)), u((H, 4 * H)), u((1, 4 * H))),
            'bwd': (u((in_size, 4 * H)), u((H, 4 * H)), u((1, 4 * H))),
        })
    F = cs_e + 2 * H
    return {
        'lstm': layers,
        'w1': u((F, H)), 'b1': u((1, H)),
        'w2': u((H, combine_dim)), 'b2': u((1, combine_dim)),
    }


# ---------------------------------------------------------------------------
if __name__ == "__main__":
    embed_dim = 8
    hidden_dim = 32
    num_layers = 2
    context_size = 3
    combine_dim = 16
    batch, seq_len = 2, 10   # -> L = seq_len - context_size + 1 = 8

    key = jax.random.PRNGKey(0)
    kx, kp = jax.random.split(key)
    x = jax.random.normal(kx, (batch, seq_len, embed_dim), dtype=jnp.float32)
    params = init_params(kp, embed_dim, hidden_dim, num_layers, context_size,
                         combine_dim)

    fwd = jax.jit(brain_lstm_forward, static_argnums=2)
    out = fwd(x, params, context_size)
    out = jax.block_until_ready(out)

    ref = brain_lstm_ref(x, params, context_size)
    assert out.shape == (batch, combine_dim), out.shape
    max_err = float(jnp.max(jnp.abs(out - ref)))
    # Tolerance covers bf16 MXU operands (fp32 accumulation / gate math) and
    # f32 matmul re-association vs. the fp32 reference.
    assert jnp.allclose(out, ref, atol=5e-2, rtol=5e-2), f"max err {max_err}"

    print("KERNEL_OK")
</pallas_src>

<mosaic_0001>
module attributes {stable_mosaic.version = 11 : i64} {
  func.func @kernel(%arg0: memref<160x8xbf16, #tpu.memory_space<vmem>>, %arg1: memref<3x8x256xbf16, #tpu.memory_space<vmem>>, %arg2: memref<64x128xbf16, #tpu.memory_space<vmem>>, %arg3: memref<1x256xf32, #tpu.memory_space<vmem>>, %arg4: memref<64x256xbf16, #tpu.memory_space<vmem>>, %arg5: memref<64x128xbf16, #tpu.memory_space<vmem>>, %arg6: memref<1x256xf32, #tpu.memory_space<vmem>>, %arg7: memref<64x32xbf16, #tpu.memory_space<vmem>>, %arg8: memref<3x8x32xbf16, #tpu.memory_space<vmem>>, %arg9: memref<1x32xf32, #tpu.memory_space<vmem>>, %arg10: memref<32x16xbf16, #tpu.memory_space<vmem>>, %arg11: memref<1x16xf32, #tpu.memory_space<vmem>>, %arg12: memref<16x16xf32, #tpu.memory_space<vmem>>, %arg13: memref<8x16x256xf32, #tpu.memory_space<vmem>>, %arg14: memref<32x64xf32, #tpu.memory_space<vmem>>, %arg15: memref<32x32xf32, #tpu.memory_space<vmem>>, %arg16: memref<8x16x32xf32, #tpu.memory_space<vmem>>, %arg17: memref<8x16x32xf32, #tpu.memory_space<vmem>>) attributes {dimension_semantics = [], scalar_prefetch = 0 : i64, scratch_operands = 5 : i64, tpu.core_type = #tpu.core_type<tc>} {
    %c0 = arith.constant 0 : index
    %c0_0 = arith.constant 0 : index
    %0 = vector.load %arg0[%c0, %c0_0] : memref<160x8xbf16, #tpu.memory_space<vmem>>, vector<128x8xbf16>
    %c0_1 = arith.constant 0 : index
    %c0_2 = arith.constant 0 : index
    %c0_3 = arith.constant 0 : index
    %1 = vector.load %arg1[%c0_1, %c0_2, %c0_3] : memref<3x8x256xbf16, #tpu.memory_space<vmem>>, vector<1x8x256xbf16>
    %2 = vector.shape_cast %1 : vector<1x8x256xbf16> to vector<8x256xbf16>
    %cst = arith.constant dense<0.000000e+00> : vector<128x256xf32>
    %3 = tpu.matmul %0, %2, %cst {dimension_numbers = #tpu.dot_dimension_numbers<[1], [0], [0], [1], [0, 0, 1, 1], [], []>} : vector<128x8xbf16>, vector<8x256xbf16>, vector<128x256xf32> -> vector<128x256xf32>
    %c16 = arith.constant 16 : index
    %c0_4 = arith.constant 0 : index
    %4 = vector.load %arg0[%c16, %c0_4] : memref<160x8xbf16, #tpu.memory_space<vmem>>, vector<128x8xbf16>
    %c1 = arith.constant 1 : index
    %c0_5 = arith.constant 0 : index
    %c0_6 = arith.constant 0 : index
    %5 = vector.load %arg1[%c1, %c0_5, %c0_6] : memref<3x8x256xbf16, #tpu.memory_space<vmem>>, vector<1x8x256xbf16>
    %6 = vector.shape_cast %5 : vector<1x8x256xbf16> to vector<8x256xbf16>
    %cst_7 = arith.constant dense<0.000000e+00> : vector<128x256xf32>
    %7 = tpu.matmul %4, %6, %cst_7 {dimension_numbers = #tpu.dot_dimension_numbers<[1], [0], [0], [1], [0, 0, 1, 1], [], []>} : vector<128x8xbf16>, vector<8x256xbf16>, vector<128x256xf32> -> vector<128x256xf32>
    %8 = arith.addf %3, %7 : vector<128x256xf32>
    %c32 = arith.constant 32 : index
    %c0_8 = arith.constant 0 : index
    %9 = vector.load %arg0[%c32, %c0_8] : memref<160x8xbf16, #tpu.memory_space<vmem>>, vector<128x8xbf16>
    %c2 = arith.constant 2 : index
    %c0_9 = arith.constant 0 : index
    %c0_10 = arith.constant 0 : index
    %10 = vector.load %arg1[%c2, %c0_9, %c0_10] : memref<3x8x256xbf16, #tpu.memory_space<vmem>>, vector<1x8x256xbf16>
    %11 = vector.shape_cast %10 : vector<1x8x256xbf16> to vector<8x256xbf16>
    %cst_11 = arith.constant dense<0.000000e+00> : vector<128x256xf32>
    %12 = tpu.matmul %9, %11, %cst_11 {dimension_numbers = #tpu.dot_dimension_numbers<[1], [0], [0], [1], [0, 0, 1, 1], [], []>} : vector<128x8xbf16>, vector<8x256xbf16>, vector<128x256xf32> -> vector<128x256xf32>
    %13 = arith.addf %8, %12 : vector<128x256xf32>
    %c0_12 = arith.constant 0 : index
    %c0_13 = arith.constant 0 : index
    %14 = vector.load %arg3[%c0_12, %c0_13] : memref<1x256xf32, #tpu.memory_space<vmem>>, vector<1x256xf32>
    %15 = vector.broadcast %14 : vector<1x256xf32> to vector<128x256xf32>
    %16 = arith.addf %13, %15 : vector<128x256xf32>
    %17 = vector.shape_cast %16 : vector<128x256xf32> to vector<8x16x256xf32>
    %c0_14 = arith.constant 0 : index
    %c0_15 = arith.constant 0 : index
    %c0_16 = arith.constant 0 : index
    %18 = vector.load %arg13[%c0_14, %c0_15, %c0_16] : memref<8x16x256xf32, #tpu.memory_space<vmem>>, vector<8x16x256xf32>
    tpu.vector_store %arg13[%c0_14, %c0_15, %c0_16], %17 {strides = array<i32>} : memref<8x16x256xf32, #tpu.memory_space<vmem>>, vector<8x16x256xf32>,
    %cst_17 = arith.constant 0.000000e+00 : f32
    %19 = vector.broadcast %cst_17 : f32 to vector<32x64xf32>
    %c0_18 = arith.constant 0 : index
    %c0_19 = arith.constant 0 : index
    %20 = vector.load %arg14[%c0_18, %c0_19] : memref<32x64xf32, #tpu.memory_space<vmem>>, vector<32x64xf32>
    tpu.vector_store %arg14[%c0_18, %c0_19], %19 {strides = array<i32>} : memref<32x64xf32, #tpu.memory_space<vmem>>, vector<32x64xf32>,
    %cst_20 = arith.constant 0.000000e+00 : f32
    %21 = vector.broadcast %cst_20 : f32 to vector<32x32xf32>
    %c0_21 = arith.constant 0 : index
    %c0_22 = arith.constant 0 : index
    %22 = vector.load %arg15[%c0_21, %c0_22] : memref<32x32xf32, #tpu.memory_space<vmem>>, vector<32x32xf32>
    tpu.vector_store %arg15[%c0_21, %c0_22], %21 {strides = array<i32>} : memref<32x32xf32, #tpu.memory_space<vmem>>, vector<32x32xf32>,
    %c0_i32 = arith.constant 0 : i32
    %c2_i32 = arith.constant 2 : i32
    %23 = arith.addi %c0_i32, %c2_i32 : i32
    %c1_i32 = arith.constant 1 : i32
    scf.for %arg18 = %c0_i32 to %23 step %c1_i32  : i32 {
      %c4_i32 = arith.constant 4 : i32
      %83 = arith.muli %arg18, %c4_i32 : i32
      %c0_i32_91 = arith.constant 0 : i32
      %84 = arith.addi %83, %c0_i32_91 : i32
      %c7_i32 = arith.constant 7 : i32
      %85 = arith.subi %c7_i32, %84 : i32
      %c0_92 = arith.constant 0 : index
      %c0_93 = arith.constant 0 : index
      %86 = vector.load %arg14[%c0_92, %c0_93] : memref<32x64xf32, #tpu.memory_space<vmem>>, vector<32x64xf32>
      %87 = arith.truncf %86 : vector<32x64xf32> to vector<32x64xbf16>
      %c0_94 = arith.constant 0 : index
      %c0_95 = arith.constant 0 : index
      %88 = vector.load %arg2[%c0_94, %c0_95] : memref<64x128xbf16, #tpu.memory_space<vmem>>, vector<64x128xbf16>
      %cst_96 = arith.constant dense<0.000000e+00> : vector<32x128xf32>
      %89 = tpu.matmul %87, %88, %cst_96 {dimension_numbers = #tpu.dot_dimension_numbers<[1], [0], [0], [1], [0, 0, 1, 1], [], []>} : vector<32x64xbf16>, vector<64x128xbf16>, vector<32x128xf32> -> vector<32x128xf32>
      %90 = arith.index_cast %84 : i32 to index
      %c0_97 = arith.constant 0 : index
      %c0_98 = arith.constant 0 : index
      %91 = vector.load %arg13[%90, %c0_97, %c0_98] : memref<8x16x256xf32, #tpu.memory_space<vmem>>, vector<1x16x256xf32>
      %92 = vector.shape_cast %91 : vector<1x16x256xf32> to vector<16x256xf32>
      %93 = vector.extract_strided_slice %92 {offsets = [0, 0], sizes = [16, 128], strides = [1, 1]} : vector<16x256xf32> to vector<16x128xf32>
      %94 = arith.index_cast %85 : i32 to index
      %c0_99 = arith.constant 0 : index
      %c0_100 = arith.constant 0 : index
      %95 = vector.load %arg13[%94, %c0_99, %c0_100] : memref<8x16x256xf32, #tpu.memory_space<vmem>>, vector<1x16x256xf32>
      %96 = vector.shape_cast %95 : vector<1x16x256xf32> to vector<16x256xf32>
      %97 = vector.extract_strided_slice %96 {offsets = [0, 128], sizes = [16, 128], strides = [1, 1]} : vector<16x256xf32> to vector<16x128xf32>
      %98 = tpu.concatenate %93, %97 in 0 : vector<16x128xf32>, vector<16x128xf32> -> vector<32x128xf32>
      %99 = arith.addf %98, %89 : vector<32x128xf32>
      %100 = vector.extract_strided_slice %99 {offsets = [0, 0], sizes = [32, 96], strides = [1, 1]} : vector<32x128xf32> to vector<32x96xf32>
      %101 = arith.negf %100 : vector<32x96xf32>
      %102 = math.exp %101 : vector<32x96xf32>
      %cst_101 = arith.constant 1.000000e+00 : f32
      %103 = vector.broadcast %cst_101 : f32 to vector<32x96xf32>
      %104 = arith.addf %103, %102 : vector<32x96xf32>
      %105 = arith.divf %103, %104 : vector<32x96xf32>
      %106 = vector.extract_strided_slice %105 {offsets = [0, 0], sizes = [32, 32], strides = [1, 1]} : vector<32x96xf32> to vector<32x32xf32>
      %107 = vector.extract_strided_slice %105 {offsets = [0, 32], sizes = [32, 32], strides = [1, 1]} : vector<32x96xf32> to vector<32x32xf32>
      %108 = vector.extract_strided_slice %105 {offsets = [0, 64], sizes = [32, 32], strides = [1, 1]} : vector<32x96xf32> to vector<32x32xf32>
      %109 = vector.extract_strided_slice %99 {offsets = [0, 96], sizes = [32, 32], strides = [1, 1]} : vector<32x128xf32> to vector<32x32xf32>
      %110 = math.tanh %109 : vector<32x32xf32>
      %c0_102 = arith.constant 0 : index
      %c0_103 = arith.constant 0 : index
      %111 = vector.load %arg15[%c0_102, %c0_103] : memref<32x32xf32, #tpu.memory_space<vmem>>, vector<32x32xf32>
      %112 = arith.mulf %107, %111 : vector<32x32xf32>
      %113 = arith.mulf %106, %110 : vector<32x32xf32>
      %114 = arith.addf %112, %113 : vector<32x32xf32>
      %115 = math.tanh %114 : vector<32x32xf32>
      %116 = arith.mulf %108, %115 : vector<32x32xf32>
      %c0_104 = arith.constant 0 : index
      %c0_105 = arith.constant 0 : index
      %117 = vector.load %arg15[%c0_104, %c0_105] : memref<32x32xf32, #tpu.memory_space<vmem>>, vector<32x32xf32>
      tpu.vector_store %arg15[%c0_104, %c0_105], %114 {strides = array<i32>} : memref<32x32xf32, #tpu.memory_space<vmem>>, vector<32x32xf32>,
      %118 = vector.extract_strided_slice %116 {offsets = [0, 0], sizes = [16, 32], strides = [1, 1]} : vector<32x32xf32> to vector<16x32xf32>
      %c0_106 = arith.constant 0 : index
      %c0_107 = arith.constant 0 : index
      %119 = vector.load %arg14[%c0_106, %c0_107] : memref<32x64xf32, #tpu.memory_space<vmem>>, vector<16x32xf32>
      tpu.vector_store %arg14[%c0_106, %c0_107], %118 {strides = array<i32>} : memref<32x64xf32, #tpu.memory_space<vmem>>, vector<16x32xf32>,
      %120 = vector.extract_strided_slice %116 {offsets = [16, 0], sizes = [16, 32], strides = [1, 1]} : vector<32x32xf32> to vector<16x32xf32>
      %c16_108 = arith.constant 16 : index
      %c32_109 = arith.constant 32 : index
      %121 = vector.load %arg14[%c16_108, %c32_109] : memref<32x64xf32, #tpu.memory_space<vmem>>, vector<16x32xf32>
      tpu.vector_store %arg14[%c16_108, %c32_109], %120 {strides = array<i32>} : memref<32x64xf32, #tpu.memory_space<vmem>>, vector<16x32xf32>,
      %122 = vector.extract_strided_slice %116 {offsets = [0, 0], sizes = [16, 32], strides = [1, 1]} : vector<32x32xf32> to vector<16x32xf32>
      %123 = arith.index_cast %84 : i32 to index
      %c0_110 = arith.constant 0 : index
      %c0_111 = arith.constant 0 : index
      %124 = vector.load %arg16[%123, %c0_110, %c0_111] : memref<8x16x32xf32, #tpu.memory_space<vmem>>, vector<1x16x32xf32>
      %125 = vector.shape_cast %124 : vector<1x16x32xf32> to vector<16x32xf32>
      %126 = vector.shape_cast %122 : vector<16x32xf32> to vector<1x16x32xf32>
      tpu.vector_store %arg16[%123, %c0_110, %c0_111], %126 {strides = array<i32>} : memref<8x16x32xf32, #tpu.memory_space<vmem>>, vector<1x16x32xf32>,
      %127 = vector.extract_strided_slice %116 {offsets = [16, 0], sizes = [16, 32], strides = [1, 1]} : vector<32x32xf32> to vector<16x32xf32>
      %128 = arith.index_cast %85 : i32 to index
      %c0_112 = arith.constant 0 : index
      %c0_113 = arith.constant 0 : index
      %129 = vector.load %arg17[%128, %c0_112, %c0_113] : memref<8x16x32xf32, #tpu.memory_space<vmem>>, vector<1x16x32xf32>
      %130 = vector.shape_cast %129 : vector<1x16x32xf32> to vector<16x32xf32>
      %131 = vector.shape_cast %127 : vector<16x32xf32> to vector<1x16x32xf32>
      tpu.vector_store %arg17[%128, %c0_112, %c0_113], %131 {strides = array<i32>} : memref<8x16x32xf32, #tpu.memory_space<vmem>>, vector<1x16x32xf32>,
      %c1_i32_114 = arith.constant 1 : i32
      %132 = arith.addi %83, %c1_i32_114 : i32
      %c7_i32_115 = arith.constant 7 : i32
      %133 = arith.subi %c7_i32_115, %132 : i32
      %c0_116 = arith.constant 0 : index
      %c0_117 = arith.constant 0 : index
      %134 = vector.load %arg14[%c0_116, %c0_117] : memref<32x64xf32, #tpu.memory_space<vmem>>, vector<32x64xf32>
      %135 = arith.truncf %134 : vector<32x64xf32> to vector<32x64xbf16>
      %c0_118 = arith.constant 0 : index
      %c0_119 = arith.constant 0 : index
      %136 = vector.load %arg2[%c0_118, %c0_119] : memref<64x128xbf16, #tpu.memory_space<vmem>>, vector<64x128xbf16>
      %cst_120 = arith.constant dense<0.000000e+00> : vector<32x128xf32>
      %137 = tpu.matmul %135, %136, %cst_120 {dimension_numbers = #tpu.dot_dimension_numbers<[1], [0], [0], [1], [0, 0, 1, 1], [], []>} : vector<32x64xbf16>, vector<64x128xbf16>, vector<32x128xf32> -> vector<32x128xf32>
      %138 = arith.index_cast %132 : i32 to index
      %c0_121 = arith.constant 0 : index
      %c0_122 = arith.constant 0 : index
      %139 = vector.load %arg13[%138, %c0_121, %c0_122] : memref<8x16x256xf32, #tpu.memory_space<vmem>>, vector<1x16x256xf32>
      %140 = vector.shape_cast %139 : vector<1x16x256xf32> to vector<16x256xf32>
      %141 = vector.extract_strided_slice %140 {offsets = [0, 0], sizes = [16, 128], strides = [1, 1]} : vector<16x256xf32> to vector<16x128xf32>
      %142 = arith.index_cast %133 : i32 to index
      %c0_123 = arith.constant 0 : index
      %c0_124 = arith.constant 0 : index
      %143 = vector.load %arg13[%142, %c0_123, %c0_124] : memref<8x16x256xf32, #tpu.memory_space<vmem>>, vector<1x16x256xf32>
      %144 = vector.shape_cast %143 : vector<1x16x256xf32> to vector<16x256xf32>
      %145 = vector.extract_strided_slice %144 {offsets = [0, 128], sizes = [16, 128], strides = [1, 1]} : vector<16x256xf32> to vector<16x128xf32>
      %146 = tpu.concatenate %141, %145 in 0 : vector<16x128xf32>, vector<16x128xf32> -> vector<32x128xf32>
      %147 = arith.addf %146, %137 : vector<32x128xf32>
      %148 = vector.extract_strided_slice %147 {offsets = [0, 0], sizes = [32, 96], strides = [1, 1]} : vector<32x128xf32> to vector<32x96xf32>
      %149 = arith.negf %148 : vector<32x96xf32>
      %150 = math.exp %149 : vector<32x96xf32>
      %cst_125 = arith.constant 1.000000e+00 : f32
      %151 = vector.broadcast %cst_125 : f32 to vector<32x96xf32>
      %152 = arith.addf %151, %150 : vector<32x96xf32>
      %153 = arith.divf %151, %152 : vector<32x96xf32>
      %154 = vector.extract_strided_slice %153 {offsets = [0, 0], sizes = [32, 32], strides = [1, 1]} : vector<32x96xf32> to vector<32x32xf32>
      %155 = vector.extract_strided_slice %153 {offsets = [0, 32], sizes = [32, 32], strides = [1, 1]} : vector<32x96xf32> to vector<32x32xf32>
      %156 = vector.extract_strided_slice %153 {offsets = [0, 64], sizes = [32, 32], strides = [1, 1]} : vector<32x96xf32> to vector<32x32xf32>
      %157 = vector.extract_strided_slice %147 {offsets = [0, 96], sizes = [32, 32], strides = [1, 1]} : vector<32x128xf32> to vector<32x32xf32>
      %158 = math.tanh %157 : vector<32x32xf32>
      %c0_126 = arith.constant 0 : index
      %c0_127 = arith.constant 0 : index
      %159 = vector.load %arg15[%c0_126, %c0_127] : memref<32x32xf32, #tpu.memory_space<vmem>>, vector<32x32xf32>
      %160 = arith.mulf %155, %159 : vector<32x32xf32>
      %161 = arith.mulf %154, %158 : vector<32x32xf32>
      %162 = arith.addf %160, %161 : vector<32x32xf32>
      %163 = math.tanh %162 : vector<32x32xf32>
      %164 = arith.mulf %156, %163 : vector<32x32xf32>
      %c0_128 = arith.constant 0 : index
      %c0_129 = arith.constant 0 : index
      %165 = vector.load %arg15[%c0_128, %c0_129] : memref<32x32xf32, #tpu.memory_space<vmem>>, vector<32x32xf32>
      tpu.vector_store %arg15[%c0_128, %c0_129], %162 {strides = array<i32>} : memref<32x32xf32, #tpu.memory_space<vmem>>, vector<32x32xf32>,
      %166 = vector.extract_strided_slice %164 {offsets = [0, 0], sizes = [16, 32], strides = [1, 1]} : vector<32x32xf32> to vector<16x32xf32>
      %c0_130 = arith.constant 0 : index
      %c0_131 = arith.constant 0 : index
      %167 = vector.load %arg14[%c0_130, %c0_131] : memref<32x64xf32, #tpu.memory_space<vmem>>, vector<16x32xf32>
      tpu.vector_store %arg14[%c0_130, %c0_131], %166 {strides = array<i32>} : memref<32x64xf32, #tpu.memory_space<vmem>>, vector<16x32xf32>,
      %168 = vector.extract_strided_slice %164 {offsets = [16, 0], sizes = [16, 32], strides = [1, 1]} : vector<32x32xf32> to vector<16x32xf32>
      %c16_132 = arith.constant 16 : index
      %c32_133 = arith.constant 32 : index
      %169 = vector.load %arg14[%c16_132, %c32_133] : memref<32x64xf32, #tpu.memory_space<vmem>>, vector<16x32xf32>
      tpu.vector_store %arg14[%c16_132, %c32_133], %168 {strides = array<i32>} : memref<32x64xf32, #tpu.memory_space<vmem>>, vector<16x32xf32>,
      %170 = vector.extract_strided_slice %164 {offsets = [0, 0], sizes = [16, 32], strides = [1, 1]} : vector<32x32xf32> to vector<16x32xf32>
      %171 = arith.index_cast %132 : i32 to index
      %c0_134 = arith.constant 0 : index
      %c0_135 = arith.constant 0 : index
      %172 = vector.load %arg16[%171, %c0_134, %c0_135] : memref<8x16x32xf32, #tpu.memory_space<vmem>>, vector<1x16x32xf32>
      %173 = vector.shape_cast %172 : vector<1x16x32xf32> to vector<16x32xf32>
      %174 = vector.shape_cast %170 : vector<16x32xf32> to vector<1x16x32xf32>
      tpu.vector_store %arg16[%171, %c0_134, %c0_135], %174 {strides = array<i32>} : memref<8x16x32xf32, #tpu.memory_space<vmem>>, vector<1x16x32xf32>,
      %175 = vector.extract_strided_slice %164 {offsets = [16, 0], sizes = [16, 32], strides = [1, 1]} : vector<32x32xf32> to vector<16x32xf32>
      %176 = arith.index_cast %133 : i32 to index
      %c0_136 = arith.constant 0 : index
      %c0_137 = arith.constant 0 : index
      %177 = vector.load %arg17[%176, %c0_136, %c0_137] : memref<8x16x32xf32, #tpu.memory_space<vmem>>, vector<1x16x32xf32>
      %178 = vector.shape_cast %177 : vector<1x16x32xf32> to vector<16x32xf32>
      %179 = vector.shape_cast %175 : vector<16x32xf32> to vector<1x16x32xf32>
      tpu.vector_store %arg17[%176, %c0_136, %c0_137], %179 {strides = array<i32>} : memref<8x16x32xf32, #tpu.memory_space<vmem>>, vector<1x16x32xf32>,
      %c2_i32_138 = arith.constant 2 : i32
      %180 = arith.addi %83, %c2_i32_138 : i32
      %c7_i32_139 = arith.constant 7 : i32
      %181 = arith.subi %c7_i32_139, %180 : i32
      %c0_140 = arith.constant 0 : index
      %c0_141 = arith.constant 0 : index
      %182 = vector.load %arg14[%c0_140, %c0_141] : memref<32x64xf32, #tpu.memory_space<vmem>>, vector<32x64xf32>
      %183 = arith.truncf %182 : vector<32x64xf32> to vector<32x64xbf16>
      %c0_142 = arith.constant 0 : index
      %c0_143 = arith.constant 0 : index
      %184 = vector.load %arg2[%c0_142, %c0_143] : memref<64x128xbf16, #tpu.memory_space<vmem>>, vector<64x128xbf16>
      %cst_144 = arith.constant dense<0.000000e+00> : vector<32x128xf32>
      %185 = tpu.matmul %183, %184, %cst_144 {dimension_numbers = #tpu.dot_dimension_numbers<[1], [0], [0], [1], [0, 0, 1, 1], [], []>} : vector<32x64xbf16>, vector<64x128xbf16>, vector<32x128xf32> -> vector<32x128xf32>
      %186 = arith.index_cast %180 : i32 to index
      %c0_145 = arith.constant 0 : index
      %c0_146 = arith.constant 0 : index
      %187 = vector.load %arg13[%186, %c0_145, %c0_146] : memref<8x16x256xf32, #tpu.memory_space<vmem>>, vector<1x16x256xf32>
      %188 = vector.shape_cast %187 : vector<1x16x256xf32> to vector<16x256xf32>
      %189 = vector.extract_strided_slice %188 {offsets = [0, 0], sizes = [16, 128], strides = [1, 1]} : vector<16x256xf32> to vector<16x128xf32>
      %190 = arith.index_cast %181 : i32 to index
      %c0_147 = arith.constant 0 : index
      %c0_148 = arith.constant 0 : index
      %191 = vector.load %arg13[%190, %c0_147, %c0_148] : memref<8x16x256xf32, #tpu.memory_space<vmem>>, vector<1x16x256xf32>
      %192 = vector.shape_cast %191 : vector<1x16x256xf32> to vector<16x256xf32>
      %193 = vector.extract_strided_slice %192 {offsets = [0, 128], sizes = [16, 128], strides = [1, 1]} : vector<16x256xf32> to vector<16x128xf32>
      %194 = tpu.concatenate %189, %193 in 0 : vector<16x128xf32>, vector<16x128xf32> -> vector<32x128xf32>
      %195 = arith.addf %194, %185 : vector<32x128xf32>
      %196 = vector.extract_strided_slice %195 {offsets = [0, 0], sizes = [32, 96], strides = [1, 1]} : vector<32x128xf32> to vector<32x96xf32>
      %197 = arith.negf %196 : vector<32x96xf32>
      %198 = math.exp %197 : vector<32x96xf32>
      %cst_149 = arith.constant 1.000000e+00 : f32
      %199 = vector.broadcast %cst_149 : f32 to vector<32x96xf32>
      %200 = arith.addf %199, %198 : vector<32x96xf32>
      %201 = arith.divf %199, %200 : vector<32x96xf32>
      %202 = vector.extract_strided_slice %201 {offsets = [0, 0], sizes = [32, 32], strides = [1, 1]} : vector<32x96xf32> to vector<32x32xf32>
      %203 = vector.extract_strided_slice %201 {offsets = [0, 32], sizes = [32, 32], strides = [1, 1]} : vector<32x96xf32> to vector<32x32xf32>
      %204 = vector.extract_strided_slice %201 {offsets = [0, 64], sizes = [32, 32], strides = [1, 1]} : vector<32x96xf32> to vector<32x32xf32>
      %205 = vector.extract_strided_slice %195 {offsets = [0, 96], sizes = [32, 32], strides = [1, 1]} : vector<32x128xf32> to vector<32x32xf32>
      %206 = math.tanh %205 : vector<32x32xf32>
      %c0_150 = arith.constant 0 : index
      %c0_151 = arith.constant 0 : index
      %207 = vector.load %arg15[%c0_150, %c0_151] : memref<32x32xf32, #tpu.memory_space<vmem>>, vector<32x32xf32>
      %208 = arith.mulf %203, %207 : vector<32x32xf32>
      %209 = arith.mulf %202, %206 : vector<32x32xf32>
      %210 = arith.addf %208, %209 : vector<32x32xf32>
      %211 = math.tanh %210 : vector<32x32xf32>
      %212 = arith.mulf %204, %211 : vector<32x32xf32>
      %c0_152 = arith.constant 0 : index
      %c0_153 = arith.constant 0 : index
      %213 = vector.load %arg15[%c0_152, %c0_153] : memref<32x32xf32, #tpu.memory_space<vmem>>, vector<32x32xf32>
      tpu.vector_store %arg15[%c0_152, %c0_153], %210 {strides = array<i32>} : memref<32x32xf32, #tpu.memory_space<vmem>>, vector<32x32xf32>,
      %214 = vector.extract_strided_slice %212 {offsets = [0, 0], sizes = [16, 32], strides = [1, 1]} : vector<32x32xf32> to vector<16x32xf32>
      %c0_154 = arith.constant 0 : index
      %c0_155 = arith.constant 0 : index
      %215 = vector.load %arg14[%c0_154, %c0_155] : memref<32x64xf32, #tpu.memory_space<vmem>>, vector<16x32xf32>
      tpu.vector_store %arg14[%c0_154, %c0_155], %214 {strides = array<i32>} : memref<32x64xf32, #tpu.memory_space<vmem>>, vector<16x32xf32>,
      %216 = vector.extract_strided_slice %212 {offsets = [16, 0], sizes = [16, 32], strides = [1, 1]} : vector<32x32xf32> to vector<16x32xf32>
      %c16_156 = arith.constant 16 : index
      %c32_157 = arith.constant 32 : index
      %217 = vector.load %arg14[%c16_156, %c32_157] : memref<32x64xf32, #tpu.memory_space<vmem>>, vector<16x32xf32>
      tpu.vector_store %arg14[%c16_156, %c32_157], %216 {strides = array<i32>} : memref<32x64xf32, #tpu.memory_space<vmem>>, vector<16x32xf32>,
      %218 = vector.extract_strided_slice %212 {offsets = [0, 0], sizes = [16, 32], strides = [1, 1]} : vector<32x32xf32> to vector<16x32xf32>
      %219 = arith.index_cast %180 : i32 to index
      %c0_158 = arith.constant 0 : index
      %c0_159 = arith.constant 0 : index
      %220 = vector.load %arg16[%219, %c0_158, %c0_159] : memref<8x16x32xf32, #tpu.memory_space<vmem>>, vector<1x16x32xf32>
      %221 = vector.shape_cast %220 : vector<1x16x32xf32> to vector<16x32xf32>
      %222 = vector.shape_cast %218 : vector<16x32xf32> to vector<1x16x32xf32>
      tpu.vector_store %arg16[%219, %c0_158, %c0_159], %222 {strides = array<i32>} : memref<8x16x32xf32, #tpu.memory_space<vmem>>, vector<1x16x32xf32>,
      %223 = vector.extract_strided_slice %212 {offsets = [16, 0], sizes = [16, 32], strides = [1, 1]} : vector<32x32xf32> to vector<16x32xf32>
      %224 = arith.index_cast %181 : i32 to index
      %c0_160 = arith.constant 0 : index
      %c0_161 = arith.constant 0 : index
      %225 = vector.load %arg17[%224, %c0_160, %c0_161] : memref<8x16x32xf32, #tpu.memory_space<vmem>>, vector<1x16x32xf32>
      %226 = vector.shape_cast %225 : vector<1x16x32xf32> to vector<16x32xf32>
      %227 = vector.shape_cast %223 : vector<16x32xf32> to vector<1x16x32xf32>
      tpu.vector_store %arg17[%224, %c0_160, %c0_161], %227 {strides = array<i32>} : memref<8x16x32xf32, #tpu.memory_space<vmem>>, vector<1x16x32xf32>,
      %c3_i32 = arith.constant 3 : i32
      %228 = arith.addi %83, %c3_i32 : i32
      %c7_i32_162 = arith.constant 7 : i32
      %229 = arith.subi %c7_i32_162, %228 : i32
      %c0_163 = arith.constant 0 : index
      %c0_164 = arith.constant 0 : index
      %230 = vector.load %arg14[%c0_163, %c0_164] : memref<32x64xf32, #tpu.memory_space<vmem>>, vector<32x64xf32>
      %231 = arith.truncf %230 : vector<32x64xf32> to vector<32x64xbf16>
      %c0_165 = arith.constant 0 : index
      %c0_166 = arith.constant 0 : index
      %232 = vector.load %arg2[%c0_165, %c0_166] : memref<64x128xbf16, #tpu.memory_space<vmem>>, vector<64x128xbf16>
      %cst_167 = arith.constant dense<0.000000e+00> : vector<32x128xf32>
      %233 = tpu.matmul %231, %232, %cst_167 {dimension_numbers = #tpu.dot_dimension_numbers<[1], [0], [0], [1], [0, 0, 1, 1], [], []>} : vector<32x64xbf16>, vector<64x128xbf16>, vector<32x128xf32> -> vector<32x128xf32>
      %234 = arith.index_cast %228 : i32 to index
      %c0_168 = arith.constant 0 : index
      %c0_169 = arith.constant 0 : index
      %235 = vector.load %arg13[%234, %c0_168, %c0_169] : memref<8x16x256xf32, #tpu.memory_space<vmem>>, vector<1x16x256xf32>
      %236 = vector.shape_cast %235 : vector<1x16x256xf32> to vector<16x256xf32>
      %237 = vector.extract_strided_slice %236 {offsets = [0, 0], sizes = [16, 128], strides = [1, 1]} : vector<16x256xf32> to vector<16x128xf32>
      %238 = arith.index_cast %229 : i32 to index
      %c0_170 = arith.constant 0 : index
      %c0_171 = arith.constant 0 : index
      %239 = vector.load %arg13[%238, %c0_170, %c0_171] : memref<8x16x256xf32, #tpu.memory_space<vmem>>, vector<1x16x256xf32>
      %240 = vector.shape_cast %239 : vector<1x16x256xf32> to vector<16x256xf32>
      %241 = vector.extract_strided_slice %240 {offsets = [0, 128], sizes = [16, 128], strides = [1, 1]} : vector<16x256xf32> to vector<16x128xf32>
      %242 = tpu.concatenate %237, %241 in 0 : vector<16x128xf32>, vector<16x128xf32> -> vector<32x128xf32>
      %243 = arith.addf %242, %233 : vector<32x128xf32>
      %244 = vector.extract_strided_slice %243 {offsets = [0, 0], sizes = [32, 96], strides = [1, 1]} : vector<32x128xf32> to vector<32x96xf32>
      %245 = arith.negf %244 : vector<32x96xf32>
      %246 = math.exp %245 : vector<32x96xf32>
      %cst_172 = arith.constant 1.000000e+00 : f32
      %247 = vector.broadcast %cst_172 : f32 to vector<32x96xf32>
      %248 = arith.addf %247, %246 : vector<32x96xf32>
      %249 = arith.divf %247, %248 : vector<32x96xf32>
      %250 = vector.extract_strided_slice %249 {offsets = [0, 0], sizes = [32, 32], strides = [1, 1]} : vector<32x96xf32> to vector<32x32xf32>
      %251 = vector.extract_strided_slice %249 {offsets = [0, 32], sizes = [32, 32], strides = [1, 1]} : vector<32x96xf32> to vector<32x32xf32>
      %252 = vector.extract_strided_slice %249 {offsets = [0, 64], sizes = [32, 32], strides = [1, 1]} : vector<32x96xf32> to vector<32x32xf32>
      %253 = vector.extract_strided_slice %243 {offsets = [0, 96], sizes = [32, 32], strides = [1, 1]} : vector<32x128xf32> to vector<32x32xf32>
      %254 = math.tanh %253 : vector<32x32xf32>
      %c0_173 = arith.constant 0 : index
      %c0_174 = arith.constant 0 : index
      %255 = vector.load %arg15[%c0_173, %c0_174] : memref<32x32xf32, #tpu.memory_space<vmem>>, vector<32x32xf32>
      %256 = arith.mulf %251, %255 : vector<32x32xf32>
      %257 = arith.mulf %250, %254 : vector<32x32xf32>
      %258 = arith.addf %256, %257 : vector<32x32xf32>
      %259 = math.tanh %258 : vector<32x32xf32>
      %260 = arith.mulf %252, %259 : vector<32x32xf32>
      %c0_175 = arith.constant 0 : index
      %c0_176 = arith.constant 0 : index
      %261 = vector.load %arg15[%c0_175, %c0_176] : memref<32x32xf32, #tpu.memory_space<vmem>>, vector<32x32xf32>
      tpu.vector_store %arg15[%c0_175, %c0_176], %258 {strides = array<i32>} : memref<32x32xf32, #tpu.memory_space<vmem>>, vector<32x32xf32>,
      %262 = vector.extract_strided_slice %260 {offsets = [0, 0], sizes = [16, 32], strides = [1, 1]} : vector<32x32xf32> to vector<16x32xf32>
      %c0_177 = arith.constant 0 : index
      %c0_178 = arith.constant 0 : index
      %263 = vector.load %arg14[%c0_177, %c0_178] : memref<32x64xf32, #tpu.memory_space<vmem>>, vector<16x32xf32>
      tpu.vector_store %arg14[%c0_177, %c0_178], %262 {strides = array<i32>} : memref<32x64xf32, #tpu.memory_space<vmem>>, vector<16x32xf32>,
      %264 = vector.extract_strided_slice %260 {offsets = [16, 0], sizes = [16, 32], strides = [1, 1]} : vector<32x32xf32> to vector<16x32xf32>
      %c16_179 = arith.constant 16 : index
      %c32_180 = arith.constant 32 : index
      %265 = vector.load %arg14[%c16_179, %c32_180] : memref<32x64xf32, #tpu.memory_space<vmem>>, vector<16x32xf32>
      tpu.vector_store %arg14[%c16_179, %c32_180], %264 {strides = array<i32>} : memref<32x64xf32, #tpu.memory_space<vmem>>, vector<16x32xf32>,
      %266 = vector.extract_strided_slice %260 {offsets = [0, 0], sizes = [16, 32], strides = [1, 1]} : vector<32x32xf32> to vector<16x32xf32>
      %267 = arith.index_cast %228 : i32 to index
      %c0_181 = arith.constant 0 : index
      %c0_182 = arith.constant 0 : index
      %268 = vector.load %arg16[%267, %c0_181, %c0_182] : memref<8x16x32xf32, #tpu.memory_space<vmem>>, vector<1x16x32xf32>
      %269 = vector.shape_cast %268 : vector<1x16x32xf32> to vector<16x32xf32>
      %270 = vector.shape_cast %266 : vector<16x32xf32> to vector<1x16x32xf32>
      tpu.vector_store %arg16[%267, %c0_181, %c0_182], %270 {strides = array<i32>} : memref<8x16x32xf32, #tpu.memory_space<vmem>>, vector<1x16x32xf32>,
      %271 = vector.extract_strided_slice %260 {offsets = [16, 0], sizes = [16, 32], strides = [1, 1]} : vector<32x32xf32> to vector<16x32xf32>
      %272 = arith.index_cast %229 : i32 to index
      %c0_183 = arith.constant 0 : index
      %c0_184 = arith.constant 0 : index
      %273 = vector.load %arg17[%272, %c0_183, %c0_184] : memref<8x16x32xf32, #tpu.memory_space<vmem>>, vector<1x16x32xf32>
      %274 = vector.shape_cast %273 : vector<1x16x32xf32> to vector<16x32xf32>
      %275 = vector.shape_cast %271 : vector<16x32xf32> to vector<1x16x32xf32>
      tpu.vector_store %arg17[%272, %c0_183, %c0_184], %275 {strides = array<i32>} : memref<8x16x32xf32, #tpu.memory_space<vmem>>, vector<1x16x32xf32>,
    }
    %c2_i32_23 = arith.constant 2 : i32
    %c0_24 = arith.constant 0 : index
    %c0_25 = arith.constant 0 : index
    %c0_26 = arith.constant 0 : index
    %24 = vector.load %arg16[%c0_24, %c0_25, %c0_26] : memref<8x16x32xf32, #tpu.memory_space<vmem>>, vector<8x16x32xf32>
    %25 = vector.shape_cast %24 : vector<8x16x32xf32> to vector<128x32xf32>
    %26 = arith.truncf %25 : vector<128x32xf32> to vector<128x32xbf16>
    %c0_27 = arith.constant 0 : index
    %c0_28 = arith.constant 0 : index
    %c0_29 = arith.constant 0 : index
    %27 = vector.load %arg17[%c0_27, %c0_28, %c0_29] : memref<8x16x32xf32, #tpu.memory_space<vmem>>, vector<8x16x32xf32>
    %28 = vector.shape_cast %27 : vector<8x16x32xf32> to vector<128x32xf32>
    %29 = arith.truncf %28 : vector<128x32xf32> to vector<128x32xbf16>
    %c0_30 = arith.constant 0 : index
    %c0_31 = arith.constant 0 : index
    %30 = vector.load %arg4[%c0_30, %c0_31] : memref<64x256xbf16, #tpu.memory_space<vmem>>, vector<32x256xbf16>
    %cst_32 = arith.constant dense<0.000000e+00> : vector<128x256xf32>
    %31 = tpu.matmul %26, %30, %cst_32 {dimension_numbers = #tpu.dot_dimension_numbers<[1], [0], [0], [1], [0, 0, 1, 1], [], []>} : vector<128x32xbf16>, vector<32x256xbf16>, vector<128x256xf32> -> vector<128x256xf32>
    %c32_33 = arith.constant 32 : index
    %c0_34 = arith.constant 0 : index
    %32 = vector.load %arg4[%c32_33, %c0_34] : memref<64x256xbf16, #tpu.memory_space<vmem>>, vector<32x256xbf16>
    %cst_35 = arith.constant dense<0.000000e+00> : vector<128x256xf32>
    %33 = tpu.matmul %29, %32, %cst_35 {dimension_numbers = #tpu.dot_dimension_numbers<[1], [0], [0], [1], [0, 0, 1, 1], [], []>} : vector<128x32xbf16>, vector<32x256xbf16>, vector<128x256xf32> -> vector<128x256xf32>
    %34 = arith.addf %31, %33 : vector<128x256xf32>
    %c0_36 = arith.constant 0 : index
    %c0_37 = arith.constant 0 : index
    %35 = vector.load %arg6[%c0_36, %c0_37] : memref<1x256xf32, #tpu.memory_space<vmem>>, vector<1x256xf32>
    %36 = vector.broadcast %35 : vector<1x256xf32> to vector<128x256xf32>
    %37 = arith.addf %34, %36 : vector<128x256xf32>
    %38 = vector.shape_cast %37 : vector<128x256xf32> to vector<8x16x256xf32>
    %c0_38 = arith.constant 0 : index
    %c0_39 = arith.constant 0 : index
    %c0_40 = arith.constant 0 : index
    %39 = vector.load %arg13[%c0_38, %c0_39, %c0_40] : memref<8x16x256xf32, #tpu.memory_space<vmem>>, vector<8x16x256xf32>
    tpu.vector_store %arg13[%c0_38, %c0_39, %c0_40], %38 {strides = array<i32>} : memref<8x16x256xf32, #tpu.memory_space<vmem>>, vector<8x16x256xf32>,
    %cst_41 = arith.constant 0.000000e+00 : f32
    %40 = vector.broadcast %cst_41 : f32 to vector<32x64xf32>
    %c0_42 = arith.constant 0 : index
    %c0_43 = arith.constant 0 : index
    %41 = vector.load %arg14[%c0_42, %c0_43] : memref<32x64xf32, #tpu.memory_space<vmem>>, vector<32x64xf32>
    tpu.vector_store %arg14[%c0_42, %c0_43], %40 {strides = array<i32>} : memref<32x64xf32, #tpu.memory_space<vmem>>, vector<32x64xf32>,
    %cst_44 = arith.constant 0.000000e+00 : f32
    %42 = vector.broadcast %cst_44 : f32 to vector<32x32xf32>
    %c0_45 = arith.constant 0 : index
    %c0_46 = arith.constant 0 : index
    %43 = vector.load %arg15[%c0_45, %c0_46] : memref<32x32xf32, #tpu.memory_space<vmem>>, vector<32x32xf32>
    tpu.vector_store %arg15[%c0_45, %c0_46], %42 {strides = array<i32>} : memref<32x32xf32, #tpu.memory_space<vmem>>, vector<32x32xf32>,
    %c0_i32_47 = arith.constant 0 : i32
    %c2_i32_48 = arith.constant 2 : i32
    %44 = arith.addi %c0_i32_47, %c2_i32_48 : i32
    %c1_i32_49 = arith.constant 1 : i32
    scf.for %arg18 = %c0_i32_47 to %44 step %c1_i32_49  : i32 {
      %c4_i32 = arith.constant 4 : i32
      %83 = arith.muli %arg18, %c4_i32 : i32
      %c0_i32_91 = arith.constant 0 : i32
      %84 = arith.addi %83, %c0_i32_91 : i32
      %c7_i32 = arith.constant 7 : i32
      %85 = arith.subi %c7_i32, %84 : i32
      %c0_92 = arith.constant 0 : index
      %c0_93 = arith.constant 0 : index
      %86 = vector.load %arg14[%c0_92, %c0_93] : memref<32x64xf32, #tpu.memory_space<vmem>>, vector<32x64xf32>
      %87 = arith.truncf %86 : vector<32x64xf32> to vector<32x64xbf16>
      %c0_94 = arith.constant 0 : index
      %c0_95 = arith.constant 0 : index
      %88 = vector.load %arg5[%c0_94, %c0_95] : memref<64x128xbf16, #tpu.memory_space<vmem>>, vector<64x128xbf16>
      %cst_96 = arith.constant dense<0.000000e+00> : vector<32x128xf32>
      %89 = tpu.matmul %87, %88, %cst_96 {dimension_numbers = #tpu.dot_dimension_numbers<[1], [0], [0], [1], [0, 0, 1, 1], [], []>} : vector<32x64xbf16>, vector<64x128xbf16>, vector<32x128xf32> -> vector<32x128xf32>
      %90 = arith.index_cast %84 : i32 to index
      %c0_97 = arith.constant 0 : index
      %c0_98 = arith.constant 0 : index
      %91 = vector.load %arg13[%90, %c0_97, %c0_98] : memref<8x16x256xf32, #tpu.memory_space<vmem>>, vector<1x16x256xf32>
      %92 = vector.shape_cast %91 : vector<1x16x256xf32> to vector<16x256xf32>
      %93 = vector.extract_strided_slice %92 {offsets = [0, 0], sizes = [16, 128], strides = [1, 1]} : vector<16x256xf32> to vector<16x128xf32>
      %94 = arith.index_cast %85 : i32 to index
      %c0_99 = arith.constant 0 : index
      %c0_100 = arith.constant 0 : index
      %95 = vector.load %arg13[%94, %c0_99, %c0_100] : memref<8x16x256xf32, #tpu.memory_space<vmem>>, vector<1x16x256xf32>
      %96 = vector.shape_cast %95 : vector<1x16x256xf32> to vector<16x256xf32>
      %97 = vector.extract_strided_slice %96 {offsets = [0, 128], sizes = [16, 128], strides = [1, 1]} : vector<16x256xf32> to vector<16x128xf32>
      %98 = tpu.concatenate %93, %97 in 0 : vector<16x128xf32>, vector<16x128xf32> -> vector<32x128xf32>
      %99 = arith.addf %98, %89 : vector<32x128xf32>
      %100 = vector.extract_strided_slice %99 {offsets = [0, 0], sizes = [32, 96], strides = [1, 1]} : vector<32x128xf32> to vector<32x96xf32>
      %101 = arith.negf %100 : vector<32x96xf32>
      %102 = math.exp %101 : vector<32x96xf32>
      %cst_101 = arith.constant 1.000000e+00 : f32
      %103 = vector.broadcast %cst_101 : f32 to vector<32x96xf32>
      %104 = arith.addf %103, %102 : vector<32x96xf32>
      %105 = arith.divf %103, %104 : vector<32x96xf32>
      %106 = vector.extract_strided_slice %105 {offsets = [0, 0], sizes = [32, 32], strides = [1, 1]} : vector<32x96xf32> to vector<32x32xf32>
      %107 = vector.extract_strided_slice %105 {offsets = [0, 32], sizes = [32, 32], strides = [1, 1]} : vector<32x96xf32> to vector<32x32xf32>
      %108 = vector.extract_strided_slice %105 {offsets = [0, 64], sizes = [32, 32], strides = [1, 1]} : vector<32x96xf32> to vector<32x32xf32>
      %109 = vector.extract_strided_slice %99 {offsets = [0, 96], sizes = [32, 32], strides = [1, 1]} : vector<32x128xf32> to vector<32x32xf32>
      %110 = math.tanh %109 : vector<32x32xf32>
      %c0_102 = arith.constant 0 : index
      %c0_103 = arith.constant 0 : index
      %111 = vector.load %arg15[%c0_102, %c0_103] : memref<32x32xf32, #tpu.memory_space<vmem>>, vector<32x32xf32>
      %112 = arith.mulf %107, %111 : vector<32x32xf32>
      %113 = arith.mulf %106, %110 : vector<32x32xf32>
      %114 = arith.addf %112, %113 : vector<32x32xf32>
      %115 = math.tanh %114 : vector<32x32xf32>
      %116 = arith.mulf %108, %115 : vector<32x32xf32>
      %c0_104 = arith.constant 0 : index
      %c0_105 = arith.constant 0 : index
      %117 = vector.load %arg15[%c0_104, %c0_105] : memref<32x32xf32, #tpu.memory_space<vmem>>, vector<32x32xf32>
      tpu.vector_store %arg15[%c0_104, %c0_105], %114 {strides = array<i32>} : memref<32x32xf32, #tpu.memory_space<vmem>>, vector<32x32xf32>,
      %118 = vector.extract_strided_slice %116 {offsets = [0, 0], sizes = [16, 32], strides = [1, 1]} : vector<32x32xf32> to vector<16x32xf32>
      %c0_106 = arith.constant 0 : index
      %c0_107 = arith.constant 0 : index
      %119 = vector.load %arg14[%c0_106, %c0_107] : memref<32x64xf32, #tpu.memory_space<vmem>>, vector<16x32xf32>
      tpu.vector_store %arg14[%c0_106, %c0_107], %118 {strides = array<i32>} : memref<32x64xf32, #tpu.memory_space<vmem>>, vector<16x32xf32>,
      %120 = vector.extract_strided_slice %116 {offsets = [16, 0], sizes = [16, 32], strides = [1, 1]} : vector<32x32xf32> to vector<16x32xf32>
      %c16_108 = arith.constant 16 : index
      %c32_109 = arith.constant 32 : index
      %121 = vector.load %arg14[%c16_108, %c32_109] : memref<32x64xf32, #tpu.memory_space<vmem>>, vector<16x32xf32>
      tpu.vector_store %arg14[%c16_108, %c32_109], %120 {strides = array<i32>} : memref<32x64xf32, #tpu.memory_space<vmem>>, vector<16x32xf32>,
      %122 = vector.extract_strided_slice %116 {offsets = [0, 0], sizes = [16, 32], strides = [1, 1]} : vector<32x32xf32> to vector<16x32xf32>
      %123 = arith.index_cast %84 : i32 to index
      %c0_110 = arith.constant 0 : index
      %c0_111 = arith.constant 0 : index
      %124 = vector.load %arg16[%123, %c0_110, %c0_111] : memref<8x16x32xf32, #tpu.memory_space<vmem>>, vector<1x16x32xf32>
      %125 = vector.shape_cast %124 : vector<1x16x32xf32> to vector<16x32xf32>
      %126 = vector.shape_cast %122 : vector<16x32xf32> to vector<1x16x32xf32>
      tpu.vector_store %arg16[%123, %c0_110, %c0_111], %126 {strides = array<i32>} : memref<8x16x32xf32, #tpu.memory_space<vmem>>, vector<1x16x32xf32>,
      %127 = vector.extract_strided_slice %116 {offsets = [16, 0], sizes = [16, 32], strides = [1, 1]} : vector<32x32xf32> to vector<16x32xf32>
      %128 = arith.index_cast %85 : i32 to index
      %c0_112 = arith.constant 0 : index
      %c0_113 = arith.constant 0 : index
      %129 = vector.load %arg17[%128, %c0_112, %c0_113] : memref<8x16x32xf32, #tpu.memory_space<vmem>>, vector<1x16x32xf32>
      %130 = vector.shape_cast %129 : vector<1x16x32xf32> to vector<16x32xf32>
      %131 = vector.shape_cast %127 : vector<16x32xf32> to vector<1x16x32xf32>
      tpu.vector_store %arg17[%128, %c0_112, %c0_113], %131 {strides = array<i32>} : memref<8x16x32xf32, #tpu.memory_space<vmem>>, vector<1x16x32xf32>,
      %c1_i32_114 = arith.constant 1 : i32
      %132 = arith.addi %83, %c1_i32_114 : i32
      %c7_i32_115 = arith.constant 7 : i32
      %133 = arith.subi %c7_i32_115, %132 : i32
      %c0_116 = arith.constant 0 : index
      %c0_117 = arith.constant 0 : index
      %134 = vector.load %arg14[%c0_116, %c0_117] : memref<32x64xf32, #tpu.memory_space<vmem>>, vector<32x64xf32>
      %135 = arith.truncf %134 : vector<32x64xf32> to vector<32x64xbf16>
      %c0_118 = arith.constant 0 : index
      %c0_119 = arith.constant 0 : index
      %136 = vector.load %arg5[%c0_118, %c0_119] : memref<64x128xbf16, #tpu.memory_space<vmem>>, vector<64x128xbf16>
      %cst_120 = arith.constant dense<0.000000e+00> : vector<32x128xf32>
      %137 = tpu.matmul %135, %136, %cst_120 {dimension_numbers = #tpu.dot_dimension_numbers<[1], [0], [0], [1], [0, 0, 1, 1], [], []>} : vector<32x64xbf16>, vector<64x128xbf16>, vector<32x128xf32> -> vector<32x128xf32>
      %138 = arith.index_cast %132 : i32 to index
      %c0_121 = arith.constant 0 : index
      %c0_122 = arith.constant 0 : index
      %139 = vector.load %arg13[%138, %c0_121, %c0_122] : memref<8x16x256xf32, #tpu.memory_space<vmem>>, vector<1x16x256xf32>
      %140 = vector.shape_cast %139 : vector<1x16x256xf32> to vector<16x256xf32>
      %141 = vector.extract_strided_slice %140 {offsets = [0, 0], sizes = [16, 128], strides = [1, 1]} : vector<16x256xf32> to vector<16x128xf32>
      %142 = arith.index_cast %133 : i32 to index
      %c0_123 = arith.constant 0 : index
      %c0_124 = arith.constant 0 : index
      %143 = vector.load %arg13[%142, %c0_123, %c0_124] : memref<8x16x256xf32, #tpu.memory_space<vmem>>, vector<1x16x256xf32>
      %144 = vector.shape_cast %143 : vector<1x16x256xf32> to vector<16x256xf32>
      %145 = vector.extract_strided_slice %144 {offsets = [0, 128], sizes = [16, 128], strides = [1, 1]} : vector<16x256xf32> to vector<16x128xf32>
      %146 = tpu.concatenate %141, %145 in 0 : vector<16x128xf32>, vector<16x128xf32> -> vector<32x128xf32>
      %147 = arith.addf %146, %137 : vector<32x128xf32>
      %148 = vector.extract_strided_slice %147 {offsets = [0, 0], sizes = [32, 96], strides = [1, 1]} : vector<32x128xf32> to vector<32x96xf32>
      %149 = arith.negf %148 : vector<32x96xf32>
      %150 = math.exp %149 : vector<32x96xf32>
      %cst_125 = arith.constant 1.000000e+00 : f32
      %151 = vector.broadcast %cst_125 : f32 to vector<32x96xf32>
      %152 = arith.addf %151, %150 : vector<32x96xf32>
      %153 = arith.divf %151, %152 : vector<32x96xf32>
      %154 = vector.extract_strided_slice %153 {offsets = [0, 0], sizes = [32, 32], strides = [1, 1]} : vector<32x96xf32> to vector<32x32xf32>
      %155 = vector.extract_strided_slice %153 {offsets = [0, 32], sizes = [32, 32], strides = [1, 1]} : vector<32x96xf32> to vector<32x32xf32>
      %156 = vector.extract_strided_slice %153 {offsets = [0, 64], sizes = [32, 32], strides = [1, 1]} : vector<32x96xf32> to vector<32x32xf32>
      %157 = vector.extract_strided_slice %147 {offsets = [0, 96], sizes = [32, 32], strides = [1, 1]} : vector<32x128xf32> to vector<32x32xf32>
      %158 = math.tanh %157 : vector<32x32xf32>
      %c0_126 = arith.constant 0 : index
      %c0_127 = arith.constant 0 : index
      %159 = vector.load %arg15[%c0_126, %c0_127] : memref<32x32xf32, #tpu.memory_space<vmem>>, vector<32x32xf32>
      %160 = arith.mulf %155, %159 : vector<32x32xf32>
      %161 = arith.mulf %154, %158 : vector<32x32xf32>
      %162 = arith.addf %160, %161 : vector<32x32xf32>
      %163 = math.tanh %162 : vector<32x32xf32>
      %164 = arith.mulf %156, %163 : vector<32x32xf32>
      %c0_128 = arith.constant 0 : index
      %c0_129 = arith.constant 0 : index
      %165 = vector.load %arg15[%c0_128, %c0_129] : memref<32x32xf32, #tpu.memory_space<vmem>>, vector<32x32xf32>
      tpu.vector_store %arg15[%c0_128, %c0_129], %162 {strides = array<i32>} : memref<32x32xf32, #tpu.memory_space<vmem>>, vector<32x32xf32>,
      %166 = vector.extract_strided_slice %164 {offsets = [0, 0], sizes = [16, 32], strides = [1, 1]} : vector<32x32xf32> to vector<16x32xf32>
      %c0_130 = arith.constant 0 : index
      %c0_131 = arith.constant 0 : index
      %167 = vector.load %arg14[%c0_130, %c0_131] : memref<32x64xf32, #tpu.memory_space<vmem>>, vector<16x32xf32>
      tpu.vector_store %arg14[%c0_130, %c0_131], %166 {strides = array<i32>} : memref<32x64xf32, #tpu.memory_space<vmem>>, vector<16x32xf32>,
      %168 = vector.extract_strided_slice %164 {offsets = [16, 0], sizes = [16, 32], strides = [1, 1]} : vector<32x32xf32> to vector<16x32xf32>
      %c16_132 = arith.constant 16 : index
      %c32_133 = arith.constant 32 : index
      %169 = vector.load %arg14[%c16_132, %c32_133] : memref<32x64xf32, #tpu.memory_space<vmem>>, vector<16x32xf32>
      tpu.vector_store %arg14[%c16_132, %c32_133], %168 {strides = array<i32>} : memref<32x64xf32, #tpu.memory_space<vmem>>, vector<16x32xf32>,
      %170 = vector.extract_strided_slice %164 {offsets = [0, 0], sizes = [16, 32], strides = [1, 1]} : vector<32x32xf32> to vector<16x32xf32>
      %171 = arith.index_cast %132 : i32 to index
      %c0_134 = arith.constant 0 : index
      %c0_135 = arith.constant 0 : index
      %172 = vector.load %arg16[%171, %c0_134, %c0_135] : memref<8x16x32xf32, #tpu.memory_space<vmem>>, vector<1x16x32xf32>
      %173 = vector.shape_cast %172 : vector<1x16x32xf32> to vector<16x32xf32>
      %174 = vector.shape_cast %170 : vector<16x32xf32> to vector<1x16x32xf32>
      tpu.vector_store %arg16[%171, %c0_134, %c0_135], %174 {strides = array<i32>} : memref<8x16x32xf32, #tpu.memory_space<vmem>>, vector<1x16x32xf32>,
      %175 = vector.extract_strided_slice %164 {offsets = [16, 0], sizes = [16, 32], strides = [1, 1]} : vector<32x32xf32> to vector<16x32xf32>
      %176 = arith.index_cast %133 : i32 to index
      %c0_136 = arith.constant 0 : index
      %c0_137 = arith.constant 0 : index
      %177 = vector.load %arg17[%176, %c0_136, %c0_137] : memref<8x16x32xf32, #tpu.memory_space<vmem>>, vector<1x16x32xf32>
      %178 = vector.shape_cast %177 : vector<1x16x32xf32> to vector<16x32xf32>
      %179 = vector.shape_cast %175 : vector<16x32xf32> to vector<1x16x32xf32>
      tpu.vector_store %arg17[%176, %c0_136, %c0_137], %179 {strides = array<i32>} : memref<8x16x32xf32, #tpu.memory_space<vmem>>, vector<1x16x32xf32>,
      %c2_i32_138 = arith.constant 2 : i32
      %180 = arith.addi %83, %c2_i32_138 : i32
      %c7_i32_139 = arith.constant 7 : i32
      %181 = arith.subi %c7_i32_139, %180 : i32
      %c0_140 = arith.constant 0 : index
      %c0_141 = arith.constant 0 : index
      %182 = vector.load %arg14[%c0_140, %c0_141] : memref<32x64xf32, #tpu.memory_space<vmem>>, vector<32x64xf32>
      %183 = arith.truncf %182 : vector<32x64xf32> to vector<32x64xbf16>
      %c0_142 = arith.constant 0 : index
      %c0_143 = arith.constant 0 : index
      %184 = vector.load %arg5[%c0_142, %c0_143] : memref<64x128xbf16, #tpu.memory_space<vmem>>, vector<64x128xbf16>
      %cst_144 = arith.constant dense<0.000000e+00> : vector<32x128xf32>
      %185 = tpu.matmul %183, %184, %cst_144 {dimension_numbers = #tpu.dot_dimension_numbers<[1], [0], [0], [1], [0, 0, 1, 1], [], []>} : vector<32x64xbf16>, vector<64x128xbf16>, vector<32x128xf32> -> vector<32x128xf32>
      %186 = arith.index_cast %180 : i32 to index
      %c0_145 = arith.constant 0 : index
      %c0_146 = arith.constant 0 : index
      %187 = vector.load %arg13[%186, %c0_145, %c0_146] : memref<8x16x256xf32, #tpu.memory_space<vmem>>, vector<1x16x256xf32>
      %188 = vector.shape_cast %187 : vector<1x16x256xf32> to vector<16x256xf32>
      %189 = vector.extract_strided_slice %188 {offsets = [0, 0], sizes = [16, 128], strides = [1, 1]} : vector<16x256xf32> to vector<16x128xf32>
      %190 = arith.index_cast %181 : i32 to index
      %c0_147 = arith.constant 0 : index
      %c0_148 = arith.constant 0 : index
      %191 = vector.load %arg13[%190, %c0_147, %c0_148] : memref<8x16x256xf32, #tpu.memory_space<vmem>>, vector<1x16x256xf32>
      %192 = vector.shape_cast %191 : vector<1x16x256xf32> to vector<16x256xf32>
      %193 = vector.extract_strided_slice %192 {offsets = [0, 128], sizes = [16, 128], strides = [1, 1]} : vector<16x256xf32> to vector<16x128xf32>
      %194 = tpu.concatenate %189, %193 in 0 : vector<16x128xf32>, vector<16x128xf32> -> vector<32x128xf32>
      %195 = arith.addf %194, %185 : vector<32x128xf32>
      %196 = vector.extract_strided_slice %195 {offsets = [0, 0], sizes = [32, 96], strides = [1, 1]} : vector<32x128xf32> to vector<32x96xf32>
      %197 = arith.negf %196 : vector<32x96xf32>
      %198 = math.exp %197 : vector<32x96xf32>
      %cst_149 = arith.constant 1.000000e+00 : f32
      %199 = vector.broadcast %cst_149 : f32 to vector<32x96xf32>
      %200 = arith.addf %199, %198 : vector<32x96xf32>
      %201 = arith.divf %199, %200 : vector<32x96xf32>
      %202 = vector.extract_strided_slice %201 {offsets = [0, 0], sizes = [32, 32], strides = [1, 1]} : vector<32x96xf32> to vector<32x32xf32>
      %203 = vector.extract_strided_slice %201 {offsets = [0, 32], sizes = [32, 32], strides = [1, 1]} : vector<32x96xf32> to vector<32x32xf32>
      %204 = vector.extract_strided_slice %201 {offsets = [0, 64], sizes = [32, 32], strides = [1, 1]} : vector<32x96xf32> to vector<32x32xf32>
      %205 = vector.extract_strided_slice %195 {offsets = [0, 96], sizes = [32, 32], strides = [1, 1]} : vector<32x128xf32> to vector<32x32xf32>
      %206 = math.tanh %205 : vector<32x32xf32>
      %c0_150 = arith.constant 0 : index
      %c0_151 = arith.constant 0 : index
      %207 = vector.load %arg15[%c0_150, %c0_151] : memref<32x32xf32, #tpu.memory_space<vmem>>, vector<32x32xf32>
      %208 = arith.mulf %203, %207 : vector<32x32xf32>
      %209 = arith.mulf %202, %206 : vector<32x32xf32>
      %210 = arith.addf %208, %209 : vector<32x32xf32>
      %211 = math.tanh %210 : vector<32x32xf32>
      %212 = arith.mulf %204, %211 : vector<32x32xf32>
      %c0_152 = arith.constant 0 : index
      %c0_153 = arith.constant 0 : index
      %213 = vector.load %arg15[%c0_152, %c0_153] : memref<32x32xf32, #tpu.memory_space<vmem>>, vector<32x32xf32>
      tpu.vector_store %arg15[%c0_152, %c0_153], %210 {strides = array<i32>} : memref<32x32xf32, #tpu.memory_space<vmem>>, vector<32x32xf32>,
      %214 = vector.extract_strided_slice %212 {offsets = [0, 0], sizes = [16, 32], strides = [1, 1]} : vector<32x32xf32> to vector<16x32xf32>
      %c0_154 = arith.constant 0 : index
      %c0_155 = arith.constant 0 : index
      %215 = vector.load %arg14[%c0_154, %c0_155] : memref<32x64xf32, #tpu.memory_space<vmem>>, vector<16x32xf32>
      tpu.vector_store %arg14[%c0_154, %c0_155], %214 {strides = array<i32>} : memref<32x64xf32, #tpu.memory_space<vmem>>, vector<16x32xf32>,
      %216 = vector.extract_strided_slice %212 {offsets = [16, 0], sizes = [16, 32], strides = [1, 1]} : vector<32x32xf32> to vector<16x32xf32>
      %c16_156 = arith.constant 16 : index
      %c32_157 = arith.constant 32 : index
      %217 = vector.load %arg14[%c16_156, %c32_157] : memref<32x64xf32, #tpu.memory_space<vmem>>, vector<16x32xf32>
      tpu.vector_store %arg14[%c16_156, %c32_157], %216 {strides = array<i32>} : memref<32x64xf32, #tpu.memory_space<vmem>>, vector<16x32xf32>,
      %218 = vector.extract_strided_slice %212 {offsets = [0, 0], sizes = [16, 32], strides = [1, 1]} : vector<32x32xf32> to vector<16x32xf32>
      %219 = arith.index_cast %180 : i32 to index
      %c0_158 = arith.constant 0 : index
      %c0_159 = arith.constant 0 : index
      %220 = vector.load %arg16[%219, %c0_158, %c0_159] : memref<8x16x32xf32, #tpu.memory_space<vmem>>, vector<1x16x32xf32>
      %221 = vector.shape_cast %220 : vector<1x16x32xf32> to vector<16x32xf32>
      %222 = vector.shape_cast %218 : vector<16x32xf32> to vector<1x16x32xf32>
      tpu.vector_store %arg16[%219, %c0_158, %c0_159], %222 {strides = array<i32>} : memref<8x16x32xf32, #tpu.memory_space<vmem>>, vector<1x16x32xf32>,
      %223 = vector.extract_strided_slice %212 {offsets = [16, 0], sizes = [16, 32], strides = [1, 1]} : vector<32x32xf32> to vector<16x32xf32>
      %224 = arith.index_cast %181 : i32 to index
      %c0_160 = arith.constant 0 : index
      %c0_161 = arith.constant 0 : index
      %225 = vector.load %arg17[%224, %c0_160, %c0_161] : memref<8x16x32xf32, #tpu.memory_space<vmem>>, vector<1x16x32xf32>
      %226 = vector.shape_cast %225 : vector<1x16x32xf32> to vector<16x32xf32>
      %227 = vector.shape_cast %223 : vector<16x32xf32> to vector<1x16x32xf32>
      tpu.vector_store %arg17[%224, %c0_160, %c0_161], %227 {strides = array<i32>} : memref<8x16x32xf32, #tpu.memory_space<vmem>>, vector<1x16x32xf32>,
      %c3_i32 = arith.constant 3 : i32
      %228 = arith.addi %83, %c3_i32 : i32
      %c7_i32_162 = arith.constant 7 : i32
      %229 = arith.subi %c7_i32_162, %228 : i32
      %c0_163 = arith.constant 0 : index
      %c0_164 = arith.constant 0 : index
      %230 = vector.load %arg14[%c0_163, %c0_164] : memref<32x64xf32, #tpu.memory_space<vmem>>, vector<32x64xf32>
      %231 = arith.truncf %230 : vector<32x64xf32> to vector<32x64xbf16>
      %c0_165 = arith.constant 0 : index
      %c0_166 = arith.constant 0 : index
      %232 = vector.load %arg5[%c0_165, %c0_166] : memref<64x128xbf16, #tpu.memory_space<vmem>>, vector<64x128xbf16>
      %cst_167 = arith.constant dense<0.000000e+00> : vector<32x128xf32>
      %233 = tpu.matmul %231, %232, %cst_167 {dimension_numbers = #tpu.dot_dimension_numbers<[1], [0], [0], [1], [0, 0, 1, 1], [], []>} : vector<32x64xbf16>, vector<64x128xbf16>, vector<32x128xf32> -> vector<32x128xf32>
      %234 = arith.index_cast %228 : i32 to index
      %c0_168 = arith.constant 0 : index
      %c0_169 = arith.constant 0 : index
      %235 = vector.load %arg13[%234, %c0_168, %c0_169] : memref<8x16x256xf32, #tpu.memory_space<vmem>>, vector<1x16x256xf32>
      %236 = vector.shape_cast %235 : vector<1x16x256xf32> to vector<16x256xf32>
      %237 = vector.extract_strided_slice %236 {offsets = [0, 0], sizes = [16, 128], strides = [1, 1]} : vector<16x256xf32> to vector<16x128xf32>
      %238 = arith.index_cast %229 : i32 to index
      %c0_170 = arith.constant 0 : index
      %c0_171 = arith.constant 0 : index
      %239 = vector.load %arg13[%238, %c0_170, %c0_171] : memref<8x16x256xf32, #tpu.memory_space<vmem>>, vector<1x16x256xf32>
      %240 = vector.shape_cast %239 : vector<1x16x256xf32> to vector<16x256xf32>
      %241 = vector.extract_strided_slice %240 {offsets = [0, 128], sizes = [16, 128], strides = [1, 1]} : vector<16x256xf32> to vector<16x128xf32>
      %242 = tpu.concatenate %237, %241 in 0 : vector<16x128xf32>, vector<16x128xf32> -> vector<32x128xf32>
      %243 = arith.addf %242, %233 : vector<32x128xf32>
      %244 = vector.extract_strided_slice %243 {offsets = [0, 0], sizes = [32, 96], strides = [1, 1]} : vector<32x128xf32> to vector<32x96xf32>
      %245 = arith.negf %244 : vector<32x96xf32>
      %246 = math.exp %245 : vector<32x96xf32>
      %cst_172 = arith.constant 1.000000e+00 : f32
      %247 = vector.broadcast %cst_172 : f32 to vector<32x96xf32>
      %248 = arith.addf %247, %246 : vector<32x96xf32>
      %249 = arith.divf %247, %248 : vector<32x96xf32>
      %250 = vector.extract_strided_slice %249 {offsets = [0, 0], sizes = [32, 32], strides = [1, 1]} : vector<32x96xf32> to vector<32x32xf32>
      %251 = vector.extract_strided_slice %249 {offsets = [0, 32], sizes = [32, 32], strides = [1, 1]} : vector<32x96xf32> to vector<32x32xf32>
      %252 = vector.extract_strided_slice %249 {offsets = [0, 64], sizes = [32, 32], strides = [1, 1]} : vector<32x96xf32> to vector<32x32xf32>
      %253 = vector.extract_strided_slice %243 {offsets = [0, 96], sizes = [32, 32], strides = [1, 1]} : vector<32x128xf32> to vector<32x32xf32>
      %254 = math.tanh %253 : vector<32x32xf32>
      %c0_173 = arith.constant 0 : index
      %c0_174 = arith.constant 0 : index
      %255 = vector.load %arg15[%c0_173, %c0_174] : memref<32x32xf32, #tpu.memory_space<vmem>>, vector<32x32xf32>
      %256 = arith.mulf %251, %255 : vector<32x32xf32>
      %257 = arith.mulf %250, %254 : vector<32x32xf32>
      %258 = arith.addf %256, %257 : vector<32x32xf32>
      %259 = math.tanh %258 : vector<32x32xf32>
      %260 = arith.mulf %252, %259 : vector<32x32xf32>
      %c0_175 = arith.constant 0 : index
      %c0_176 = arith.constant 0 : index
      %261 = vector.load %arg15[%c0_175, %c0_176] : memref<32x32xf32, #tpu.memory_space<vmem>>, vector<32x32xf32>
      tpu.vector_store %arg15[%c0_175, %c0_176], %258 {strides = array<i32>} : memref<32x32xf32, #tpu.memory_space<vmem>>, vector<32x32xf32>,
      %262 = vector.extract_strided_slice %260 {offsets = [0, 0], sizes = [16, 32], strides = [1, 1]} : vector<32x32xf32> to vector<16x32xf32>
      %c0_177 = arith.constant 0 : index
      %c0_178 = arith.constant 0 : index
      %263 = vector.load %arg14[%c0_177, %c0_178] : memref<32x64xf32, #tpu.memory_space<vmem>>, vector<16x32xf32>
      tpu.vector_store %arg14[%c0_177, %c0_178], %262 {strides = array<i32>} : memref<32x64xf32, #tpu.memory_space<vmem>>, vector<16x32xf32>,
      %264 = vector.extract_strided_slice %260 {offsets = [16, 0], sizes = [16, 32], strides = [1, 1]} : vector<32x32xf32> to vector<16x32xf32>
      %c16_179 = arith.constant 16 : index
      %c32_180 = arith.constant 32 : index
      %265 = vector.load %arg14[%c16_179, %c32_180] : memref<32x64xf32, #tpu.memory_space<vmem>>, vector<16x32xf32>
      tpu.vector_store %arg14[%c16_179, %c32_180], %264 {strides = array<i32>} : memref<32x64xf32, #tpu.memory_space<vmem>>, vector<16x32xf32>,
      %266 = vector.extract_strided_slice %260 {offsets = [0, 0], sizes = [16, 32], strides = [1, 1]} : vector<32x32xf32> to vector<16x32xf32>
      %267 = arith.index_cast %228 : i32 to index
      %c0_181 = arith.constant 0 : index
      %c0_182 = arith.constant 0 : index
      %268 = vector.load %arg16[%267, %c0_181, %c0_182] : memref<8x16x32xf32, #tpu.memory_space<vmem>>, vector<1x16x32xf32>
      %269 = vector.shape_cast %268 : vector<1x16x32xf32> to vector<16x32xf32>
      %270 = vector.shape_cast %266 : vector<16x32xf32> to vector<1x16x32xf32>
      tpu.vector_store %arg16[%267, %c0_181, %c0_182], %270 {strides = array<i32>} : memref<8x16x32xf32, #tpu.memory_space<vmem>>, vector<1x16x32xf32>,
      %271 = vector.extract_strided_slice %260 {offsets = [16, 0], sizes = [16, 32], strides = [1, 1]} : vector<32x32xf32> to vector<16x32xf32>
      %272 = arith.index_cast %229 : i32 to index
      %c0_183 = arith.constant 0 : index
      %c0_184 = arith.constant 0 : index
      %273 = vector.load %arg17[%272, %c0_183, %c0_184] : memref<8x16x32xf32, #tpu.memory_space<vmem>>, vector<1x16x32xf32>
      %274 = vector.shape_cast %273 : vector<1x16x32xf32> to vector<16x32xf32>
      %275 = vector.shape_cast %271 : vector<16x32xf32> to vector<1x16x32xf32>
      tpu.vector_store %arg17[%272, %c0_183, %c0_184], %275 {strides = array<i32>} : memref<8x16x32xf32, #tpu.memory_space<vmem>>, vector<1x16x32xf32>,
    }
    %c2_i32_50 = arith.constant 2 : i32
    %c0_51 = arith.constant 0 : index
    %c0_52 = arith.constant 0 : index
    %c0_53 = arith.constant 0 : index
    %45 = vector.load %arg16[%c0_51, %c0_52, %c0_53] : memref<8x16x32xf32, #tpu.memory_space<vmem>>, vector<8x16x32xf32>
    %46 = vector.shape_cast %45 : vector<8x16x32xf32> to vector<128x32xf32>
    %47 = arith.truncf %46 : vector<128x32xf32> to vector<128x32xbf16>
    %c0_54 = arith.constant 0 : index
    %c0_55 = arith.constant 0 : index
    %c0_56 = arith.constant 0 : index
    %48 = vector.load %arg17[%c0_54, %c0_55, %c0_56] : memref<8x16x32xf32, #tpu.memory_space<vmem>>, vector<8x16x32xf32>
    %49 = vector.shape_cast %48 : vector<8x16x32xf32> to vector<128x32xf32>
    %50 = arith.truncf %49 : vector<128x32xf32> to vector<128x32xbf16>
    %c0_57 = arith.constant 0 : index
    %c0_58 = arith.constant 0 : index
    %51 = vector.load %arg7[%c0_57, %c0_58] : memref<64x32xbf16, #tpu.memory_space<vmem>>, vector<32x32xbf16>
    %cst_59 = arith.constant dense<0.000000e+00> : vector<128x32xf32>
    %52 = tpu.matmul %47, %51, %cst_59 {dimension_numbers = #tpu.dot_dimension_numbers<[1], [0], [0], [1], [0, 0, 1, 1], [], []>} : vector<128x32xbf16>, vector<32x32xbf16>, vector<128x32xf32> -> vector<128x32xf32>
    %c32_60 = arith.constant 32 : index
    %c0_61 = arith.constant 0 : index
    %53 = vector.load %arg7[%c32_60, %c0_61] : memref<64x32xbf16, #tpu.memory_space<vmem>>, vector<32x32xbf16>
    %cst_62 = arith.constant dense<0.000000e+00> : vector<128x32xf32>
    %54 = tpu.matmul %50, %53, %cst_62 {dimension_numbers = #tpu.dot_dimension_numbers<[1], [0], [0], [1], [0, 0, 1, 1], [], []>} : vector<128x32xbf16>, vector<32x32xbf16>, vector<128x32xf32> -> vector<128x32xf32>
    %55 = arith.addf %52, %54 : vector<128x32xf32>
    %c0_63 = arith.constant 0 : index
    %c0_64 = arith.constant 0 : index
    %56 = vector.load %arg0[%c0_63, %c0_64] : memref<160x8xbf16, #tpu.memory_space<vmem>>, vector<128x8xbf16>
    %c0_65 = arith.constant 0 : index
    %c0_66 = arith.constant 0 : index
    %c0_67 = arith.constant 0 : index
    %57 = vector.load %arg8[%c0_65, %c0_66, %c0_67] : memref<3x8x32xbf16, #tpu.memory_space<vmem>>, vector<1x8x32xbf16>
    %58 = vector.shape_cast %57 : vector<1x8x32xbf16> to vector<8x32xbf16>
    %cst_68 = arith.constant dense<0.000000e+00> : vector<128x32xf32>
    %59 = tpu.matmul %56, %58, %cst_68 {dimension_numbers = #tpu.dot_dimension_numbers<[1], [0], [0], [1], [0, 0, 1, 1], [], []>} : vector<128x8xbf16>, vector<8x32xbf16>, vector<128x32xf32> -> vector<128x32xf32>
    %60 = arith.addf %55, %59 : vector<128x32xf32>
    %c16_69 = arith.constant 16 : index
    %c0_70 = arith.constant 0 : index
    %61 = vector.load %arg0[%c16_69, %c0_70] : memref<160x8xbf16, #tpu.memory_space<vmem>>, vector<128x8xbf16>
    %c1_71 = arith.constant 1 : index
    %c0_72 = arith.constant 0 : index
    %c0_73 = arith.constant 0 : index
    %62 = vector.load %arg8[%c1_71, %c0_72, %c0_73] : memref<3x8x32xbf16, #tpu.memory_space<vmem>>, vector<1x8x32xbf16>
    %63 = vector.shape_cast %62 : vector<1x8x32xbf16> to vector<8x32xbf16>
    %cst_74 = arith.constant dense<0.000000e+00> : vector<128x32xf32>
    %64 = tpu.matmul %61, %63, %cst_74 {dimension_numbers = #tpu.dot_dimension_numbers<[1], [0], [0], [1], [0, 0, 1, 1], [], []>} : vector<128x8xbf16>, vector<8x32xbf16>, vector<128x32xf32> -> vector<128x32xf32>
    %65 = arith.addf %60, %64 : vector<128x32xf32>
    %c32_75 = arith.constant 32 : index
    %c0_76 = arith.constant 0 : index
    %66 = vector.load %arg0[%c32_75, %c0_76] : memref<160x8xbf16, #tpu.memory_space<vmem>>, vector<128x8xbf16>
    %c2_77 = arith.constant 2 : index
    %c0_78 = arith.constant 0 : index
    %c0_79 = arith.constant 0 : index
    %67 = vector.load %arg8[%c2_77, %c0_78, %c0_79] : memref<3x8x32xbf16, #tpu.memory_space<vmem>>, vector<1x8x32xbf16>
    %68 = vector.shape_cast %67 : vector<1x8x32xbf16> to vector<8x32xbf16>
    %cst_80 = arith.constant dense<0.000000e+00> : vector<128x32xf32>
    %69 = tpu.matmul %66, %68, %cst_80 {dimension_numbers = #tpu.dot_dimension_numbers<[1], [0], [0], [1], [0, 0, 1, 1], [], []>} : vector<128x8xbf16>, vector<8x32xbf16>, vector<128x32xf32> -> vector<128x32xf32>
    %70 = arith.addf %65, %69 : vector<128x32xf32>
    %c0_81 = arith.constant 0 : index
    %c0_82 = arith.constant 0 : index
    %71 = vector.load %arg9[%c0_81, %c0_82] : memref<1x32xf32, #tpu.memory_space<vmem>>, vector<1x32xf32>
    %72 = vector.broadcast %71 : vector<1x32xf32> to vector<128x32xf32>
    %73 = arith.addf %70, %72 : vector<128x32xf32>
    %74 = vector.shape_cast %73 : vector<128x32xf32> to vector<8x16x32xf32>
    %cst_83 = arith.constant dense<0xFF800000> : vector<16x32xf32>
    %75 = vector.multi_reduction <maximumf>, %74, %cst_83 [0] : vector<8x16x32xf32> to vector<16x32xf32>
    %76 = arith.truncf %75 : vector<16x32xf32> to vector<16x32xbf16>
    %c0_84 = arith.constant 0 : index
    %c0_85 = arith.constant 0 : index
    %77 = vector.load %arg10[%c0_84, %c0_85] : memref<32x16xbf16, #tpu.memory_space<vmem>>, vector<32x16xbf16>
    %cst_86 = arith.constant dense<0.000000e+00> : vector<16x16xf32>
    %78 = tpu.matmul %76, %77, %cst_86 {dimension_numbers = #tpu.dot_dimension_numbers<[1], [0], [0], [1], [0, 0, 1, 1], [], []>} : vector<16x32xbf16>, vector<32x16xbf16>, vector<16x16xf32> -> vector<16x16xf32>
    %c0_87 = arith.constant 0 : index
    %c0_88 = arith.constant 0 : index
    %79 = vector.load %arg11[%c0_87, %c0_88] : memref<1x16xf32, #tpu.memory_space<vmem>>, vector<1x16xf32>
    %80 = vector.broadcast %79 : vector<1x16xf32> to vector<16x16xf32>
    %81 = arith.addf %78, %80 : vector<16x16xf32>
    %c0_89 = arith.constant 0 : index
    %c0_90 = arith.constant 0 : index
    %82 = vector.load %arg12[%c0_89, %c0_90] : memref<16x16xf32, #tpu.memory_space<vmem>>, vector<16x16xf32>
    tpu.vector_store %arg12[%c0_89, %c0_90], %81 {strides = array<i32>} : memref<16x16xf32, #tpu.memory_space<vmem>>, vector<16x16xf32>,
    return
  }
}

</mosaic_0001>

<llo_original>
// kernel: brain_lstm_forward.1
$region0: #{brain_lstm_forward.1}
  #allocation0 [shape = 'u32[]', space=smem, size = 0x4, offset = 0x4, fixed_abs, tag = 'smem constant byte address 0x4 - core index']
  #allocation1 [shape = 'u32[144,128]{1,0:T(1,128)}', space=vmem, size = 0x12000, scoped, tag = 'internal scratch']
  #allocation2 [shape = 'f32[8,16,256]{2,1,0:T(8,128)}', space=vmem, size = 0x20000, scoped, tag = 'scratch operand']
  #allocation3 [shape = 'f32[32,64]{1,0:T(8,128)}', space=vmem, size = 0x4000, scoped, tag = 'scratch operand']
  #allocation4 [shape = 'f32[32,32]{1,0:T(8,128)}', space=vmem, size = 0x4000, scoped, tag = 'scratch operand']
  #allocation5 [shape = 'f32[8,16,32]{2,1,0:T(8,128)}', space=vmem, size = 0x10000, scoped, tag = 'scratch operand']
  #allocation6 [shape = 'f32[8,16,32]{2,1,0:T(8,128)}', space=vmem, size = 0x10000, scoped, tag = 'scratch operand']
  %s0 = inlined_call_operand.vmem [shape: bf16[160,8], index: 0, kind: input, shape index: {}]
  %s1 = inlined_call_operand.vmem [shape: bf16[3,8,256], index: 1, kind: input, shape index: {}]
  %s2 = inlined_call_operand.vmem [shape: bf16[64,128], index: 2, kind: input, shape index: {}]
  %s3 = inlined_call_operand.vmem [shape: f32[1,256], index: 3, kind: input, shape index: {}]
  %s4 = inlined_call_operand.vmem [shape: bf16[64,256], index: 4, kind: input, shape index: {}]
  %s5 = inlined_call_operand.vmem [shape: bf16[64,128], index: 5, kind: input, shape index: {}]
  %s6 = inlined_call_operand.vmem [shape: f32[1,256], index: 6, kind: input, shape index: {}]
  %s7 = inlined_call_operand.vmem [shape: bf16[64,32], index: 7, kind: input, shape index: {}]
  %s8 = inlined_call_operand.vmem [shape: bf16[3,8,32], index: 8, kind: input, shape index: {}]
  %s9 = inlined_call_operand.vmem [shape: f32[1,32], index: 9, kind: input, shape index: {}]
  %s10 = inlined_call_operand.vmem [shape: bf16[32,16], index: 10, kind: input, shape index: {}]
  %s11 = inlined_call_operand.vmem [shape: f32[1,16], index: 11, kind: input, shape index: {}]
  %s12 = inlined_call_operand.vmem [shape: f32[16,16], index: 12, kind: output, shape index: {}]
  %s13 = sld [smem:[#allocation0]]
  $region72: #{brain_lstm_forward.1} parent=0
    _
  %s15 = ssub.s32 1, %s13
  %s16 = scalar_select 0, %s15, %s13
  // Predicated region
  $region2: #{brain_lstm_forward.1} parent=0 // pred_check
    _
  $region3: #{brain_lstm_forward.1} parent=0 // pred_check_branch
    %18 = sbr.rel (0) target = $region5
  $region4: #{brain_lstm_forward.1} parent=0 // pred_region
    _
  $region5: #{brain_lstm_forward.1} parent=0 // pred_fallthru
    _
  // Predicated region
  $region6: #{brain_lstm_forward.1} parent=0 // pred_check
    _
  $region7: #{brain_lstm_forward.1} parent=0 // pred_check_branch
    %20 = sbr.rel (0) target = $region9
  $region8: #{brain_lstm_forward.1} parent=0 // pred_region
    _
  $region9: #{brain_lstm_forward.1} parent=0 // pred_fallthru
    _
  // Predicated region
  $region10: #{brain_lstm_forward.1} parent=0 // pred_check
    _
  $region11: #{brain_lstm_forward.1} parent=0 // pred_check_branch
    %22 = sbr.rel (0) target = $region13
  $region12: #{brain_lstm_forward.1} parent=0 // pred_region
    _
  $region13: #{brain_lstm_forward.1} parent=0 // pred_fallthru
    _
  // Predicated region
  $region14: #{brain_lstm_forward.1} parent=0 // pred_check
    _
  $region15: #{brain_lstm_forward.1} parent=0 // pred_check_branch
    %24 = sbr.rel (0) target = $region17
  $region16: #{brain_lstm_forward.1} parent=0 // pred_region
    _
  $region17: #{brain_lstm_forward.1} parent=0 // pred_fallthru
    _
  // Predicated region
  $region18: #{brain_lstm_forward.1} parent=0 // pred_check
    _
  $region19: #{brain_lstm_forward.1} parent=0 // pred_check_branch
    %26 = sbr.rel (0) target = $region21
  $region20: #{brain_lstm_forward.1} parent=0 // pred_region
    _
  $region21: #{brain_lstm_forward.1} parent=0 // pred_fallthru
    _
  // Predicated region
  $region22: #{brain_lstm_forward.1} parent=0 // pred_check
    _
  $region23: #{brain_lstm_forward.1} parent=0 // pred_check_branch
    %28 = sbr.rel (0) target = $region25
  $region24: #{brain_lstm_forward.1} parent=0 // pred_region
    _
  $region25: #{brain_lstm_forward.1} parent=0 // pred_fallthru
    _
  // Predicated region
  $region26: #{brain_lstm_forward.1} parent=0 // pred_check
    _
  $region27: #{brain_lstm_forward.1} parent=0 // pred_check_branch
    %30 = sbr.rel (0) target = $region29
  $region28: #{brain_lstm_forward.1} parent=0 // pred_region
    _
  $region29: #{brain_lstm_forward.1} parent=0 // pred_fallthru
    _
  // Predicated region
  $region30: #{brain_lstm_forward.1} parent=0 // pred_check
    _
  $region31: #{brain_lstm_forward.1} parent=0 // pred_check_branch
    %32 = sbr.rel (0) target = $region33
  $region32: #{brain_lstm_forward.1} parent=0 // pred_region
    _
  $region33: #{brain_lstm_forward.1} parent=0 // pred_fallthru
    _
  // Predicated region
  $region34: #{brain_lstm_forward.1} parent=0 // pred_check
    _
  $region35: #{brain_lstm_forward.1} parent=0 // pred_check_branch
    %34 = sbr.rel (0) target = $region37
  $region36: #{brain_lstm_forward.1} parent=0 // pred_region
    _
  $region37: #{brain_lstm_forward.1} parent=0 // pred_fallthru
    _
  // Predicated region
  $region38: #{brain_lstm_forward.1} parent=0 // pred_check
    _
  $region39: #{brain_lstm_forward.1} parent=0 // pred_check_branch
    %36 = sbr.rel (0) target = $region41
  $region40: #{brain_lstm_forward.1} parent=0 // pred_region
    _
  $region41: #{brain_lstm_forward.1} parent=0 // pred_fallthru
    _
  // Predicated region
  $region42: #{brain_lstm_forward.1} parent=0 // pred_check
    _
  $region43: #{brain_lstm_forward.1} parent=0 // pred_check_branch
    %38 = sbr.rel (0) target = $region45
  $region44: #{brain_lstm_forward.1} parent=0 // pred_region
    _
  $region45: #{brain_lstm_forward.1} parent=0 // pred_fallthru
    _
  // Predicated region
  $region46: #{brain_lstm_forward.1} parent=0 // pred_check
    _
  $region47: #{brain_lstm_forward.1} parent=0 // pred_check_branch
    %40 = sbr.rel (0) target = $region49
  $region48: #{brain_lstm_forward.1} parent=0 // pred_region
    _
  $region49: #{brain_lstm_forward.1} parent=0 // pred_fallthru
    _
  %v42 = vld [vmem:[%s0] sm:$0xf]
  %v43 = vld [vmem:[%s0 + $0x4] sm:$0xf]
  %v44 = vld [vmem:[%s0 + $0x8] sm:$0xf]
  %v45 = vld [vmem:[%s0 + $0xc] sm:$0xf]
  %v46 = vld [vmem:[%s0 + $0x10] sm:$0xf]
  %v47 = vld [vmem:[%s0 + $0x14] sm:$0xf]
  %v48 = vld [vmem:[%s0 + $0x18] sm:$0xf]
  %v49 = vld [vmem:[%s0 + $0x1c] sm:$0xf]
  %v50 = vld [vmem:[%s0 + $0x20] sm:$0xf]
  %v51 = vld [vmem:[%s0 + $0x24] sm:$0xf]
  %v52 = vld [vmem:[%s0 + $0x28] sm:$0xf]
  %v53 = vld [vmem:[%s0 + $0x2c] sm:$0xf]
  %v54 = vld [vmem:[%s0 + $0x30] sm:$0xf]
  %v55 = vld [vmem:[%s0 + $0x34] sm:$0xf]
  %v56 = vld [vmem:[%s0 + $0x38] sm:$0xf]
  %v57 = vld [vmem:[%s0 + $0x3c] sm:$0xf]
  %v58 = vld [vmem:[%s1] sm:$0xff]
  %v59 = vld [vmem:[%s0 + $0x40] sm:$0xf]
  %v60 = vld [vmem:[%s0 + $0x44] sm:$0xf]
  %s61 = scalar_lea.vmem %s1, 8
  %v62 = vld [vmem:[%s61] sm:$0xff]
  %v79 = vunpack.c.l.b16 %v44
  %v80 = vunpack.c.l.b16 %v45
  %v81 = vunpack.c.l.b16 %v46
  %v82 = vunpack.c.l.b16 %v47
  %v83 = vunpack.c.l.b16 %v48
  %v84 = vunpack.c.l.b16 %v49
  %v85 = vunpack.c.l.b16 %v50
  %v86 = vunpack.c.l.b16 %v51
  %v87 = vunpack.c.l.b16 %v52
  %v88 = vunpack.c.l.b16 %v53
  %v89 = vunpack.c.l.b16 %v54
  %v90 = vunpack.c.l.b16 %v55
  %v91 = vunpack.c.l.b16 %v56
  %v92 = vunpack.c.l.b16 %v57
  %v93 = vunpack.c.l.b16 %v59
  %v94 = vunpack.c.l.b16 %v60
  %v95 = vpack.c.b16 %v80, %v79
  %v96 = vpack.c.b16 %v82, %v81
  %v97 = vpack.c.b16 %v84, %v83
  %v98 = vpack.c.b16 %v86, %v85
  %v99 = vpack.c.b16 %v88, %v87
  %v100 = vpack.c.b16 %v90, %v89
  %v101 = vpack.c.b16 %v92, %v91
  %v102 = vpack.c.b16 %v94, %v93
  %v104 = vunpack.c.l.b16 %v62
  %v105 = vunpack.c.h.b16 %v62
  %v106 = vpack.c.b16 %v104, %v104
  %v107 = vpack.c.b16 %v105, %v105
  %vm108 = vcmask 64512
  %v110 = vsel %vm108, %v95, 0
  %v113 = vsel %vm108, %v96, 0
  %v116 = vsel %vm108, %v97, 0
  %v119 = vsel %vm108, %v98, 0
  %v122 = vsel %vm108, %v99, 0
  %v125 = vsel %vm108, %v100, 0
  %v128 = vsel %vm108, %v101, 0
  %v131 = vsel %vm108, %v102, 0
  %vm133 = vcmask 1043456
  %v135 = vsel %vm133, %v106, 0
  %v138 = vsel %vm133, %v107, 0
  %140 = vmatprep.subr.bf16.mxu0 %v138
  %141 = vmatpush1.bf16.msra.mxu0 %v135
  %142 = vmatprep.subr.bf16.mxu0 0
  %143 = vmatpush1.bf16.msra.mxu0 0
  %144 = vmatprep.subr.bf16.mxu0 0
  %145 = vmatpush1.bf16.msra.mxu0 0
  %146 = vmatprep.subr.bf16.mxu0 0
  %147 = vmatpush1.bf16.msra.mxu0 0
  %148 = vmatprep.subr.bf16.mxu0 0
  %149 = vmatpush1.bf16.msra.mxu0 0
  %150 = vmatprep.subr.bf16.mxu0 0
  %151 = vmatpush1.bf16.msra.mxu0 0
  %152 = vmatprep.subr.bf16.mxu0 0
  %153 = vmatpush1.bf16.msra.mxu0 0
  %154 = vmatprep.subr.bf16.mxu0 0
  %155 = vmatpush1.bf16.msra.mxu0 0
  %156 = vmatprep.subr.bf16.mxu0 0
  %157 = vmatpush1.bf16.msra.mxu0 0
  %158 = vmatprep.subr.bf16.mxu0 0
  %159 = vmatpush1.bf16.msra.mxu0 0
  %160 = vmatprep.subr.bf16.mxu0 0
  %161 = vmatpush1.bf16.msra.mxu0 0
  %162 = vmatprep.subr.bf16.mxu0 0
  %163 = vmatpush1.bf16.msra.mxu0 0
  %164 = vmatprep.subr.bf16.mxu0 0
  %165 = vmatpush1.bf16.msra.mxu0 0
  %166 = vmatprep.subr.bf16.mxu0 0
  %167 = vmatpush1.bf16.msra.mxu0 0
  %168 = vmatprep.subr.bf16.mxu0 0
  %169 = vmatpush1.bf16.msra.mxu0 0
  %170 = vmatprep.subr.bf16.mxu0 0
  %171 = vmatpush1.bf16.msra.mxu0 0
  %172 = vmatprep.mubr.bf16.mxu0 0
  %173 = vmatmul.mubr.bf16.gmra.mrb[0].mxu0 %v110
  %v174 = vpop.f32.mrb[0].mxu0
  %v175 = vadd.f32 0.0, %v174
  %v176 = vpop.f32.mrb[0].mxu0
  %v177 = vadd.f32 0.0, %v176
  %v178 = vpop.f32.mrb[0].mxu0
  %v179 = vadd.f32 0.0, %v178
  %v180 = vpop.f32.mrb[0].mxu0
  %v181 = vadd.f32 0.0, %v180
  %182 = vmatprep.mubr.bf16.mxu0 0
  %183 = vmatmul.mubr.bf16.gmra.mrb[0].mxu0 %v113
  %v184 = vpop.f32.mrb[0].mxu0
  %v185 = vadd.f32 0.0, %v184
  %v186 = vpop.f32.mrb[0].mxu0
  %v187 = vadd.f32 0.0, %v186
  %v188 = vpop.f32.mrb[0].mxu0
  %v189 = vadd.f32 0.0, %v188
  %v190 = vpop.f32.mrb[0].mxu0
  %v191 = vadd.f32 0.0, %v190
  %192 = vmatprep.mubr.bf16.mxu0 0
  %193 = vmatmul.mubr.bf16.gmra.mrb[0].mxu0 %v116
  %v194 = vpop.f32.mrb[0].mxu0
  %v195 = vadd.f32 0.0, %v194
  %v196 = vpop.f32.mrb[0].mxu0
  %v197 = vadd.f32 0.0, %v196
  %v198 = vpop.f32.mrb[0].mxu0
  %v199 = vadd.f32 0.0, %v198
  %v200 = vpop.f32.mrb[0].mxu0
  %v201 = vadd.f32 0.0, %v200
  %202 = vmatprep.mubr.bf16.mxu0 0
  %203 = vmatmul.mubr.bf16.gmra.mrb[0].mxu0 %v119
  %v204 = vpop.f32.mrb[0].mxu0
  %v205 = vadd.f32 0.0, %v204
  %v206 = vpop.f32.mrb[0].mxu0
  %v207 = vadd.f32 0.0, %v206
  %v208 = vpop.f32.mrb[0].mxu0
  %v209 = vadd.f32 0.0, %v208
  %v210 = vpop.f32.mrb[0].mxu0
  %v211 = vadd.f32 0.0, %v210
  %212 = vmatprep.mubr.bf16.mxu0 0
  %213 = vmatmul.mubr.bf16.gmra.mrb[0].mxu0 %v122
  %v214 = vpop.f32.mrb[0].mxu0
  %v215 = vadd.f32 0.0, %v214
  %v216 = vpop.f32.mrb[0].mxu0
  %v217 = vadd.f32 0.0, %v216
  %v218 = vpop.f32.mrb[0].mxu0
  %v219 = vadd.f32 0.0, %v218
  %v220 = vpop.f32.mrb[0].mxu0
  %v221 = vadd.f32 0.0, %v220
  %222 = vmatprep.mubr.bf16.mxu0 0
  %223 = vmatmul.mubr.bf16.gmra.mrb[0].mxu0 %v125
  %v224 = vpop.f32.mrb[0].mxu0
  %v225 = vadd.f32 0.0, %v224
  %v226 = vpop.f32.mrb[0].mxu0
  %v227 = vadd.f32 0.0, %v226
  %v228 = vpop.f32.mrb[0].mxu0
  %v229 = vadd.f32 0.0, %v228
  %v230 = vpop.f32.mrb[0].mxu0
  %v231 = vadd.f32 0.0, %v230
  %232 = vmatprep.mubr.bf16.mxu0 0
  %233 = vmatmul.mubr.bf16.gmra.mrb[0].mxu0 %v128
  %v234 = vpop.f32.mrb[0].mxu0
  %v235 = vadd.f32 0.0, %v234
  %v236 = vpop.f32.mrb[0].mxu0
  %v237 = vadd.f32 0.0, %v236
  %v238 = vpop.f32.mrb[0].mxu0
  %v239 = vadd.f32 0.0, %v238
  %v240 = vpop.f32.mrb[0].mxu0
  %v241 = vadd.f32 0.0, %v240
  %242 = vmatprep.mubr.bf16.mxu0 0
  %243 = vmatmul.mubr.bf16.gmra.mrb[0].mxu0 %v131
  %v244 = vpop.f32.mrb[0].mxu0
  %v245 = vadd.f32 0.0, %v244
  %v246 = vpop.f32.mrb[0].mxu0
  %v247 = vadd.f32 0.0, %v246
  %v248 = vpop.f32.mrb[0].mxu0
  %v249 = vadd.f32 0.0, %v248
  %v250 = vpop.f32.mrb[0].mxu0
  %v251 = vadd.f32 0.0, %v250
  %252 = vdwg.mxu0
  %v255 = vunpack.c.l.b16 %v42
  %v256 = vunpack.c.l.b16 %v43
  %v257 = vpack.c.b16 %v256, %v255
  %v259 = vunpack.c.l.b16 %v58
  %v260 = vunpack.c.h.b16 %v58
  %v261 = vpack.c.b16 %v259, %v259
  %v262 = vpack.c.b16 %v260, %v260
  %v264 = vsel %vm108, %v257, 0
  %v267 = vsel %vm133, %v261, 0
  %v270 = vsel %vm133, %v262, 0
  %272 = vmatprep.subr.bf16.mxu0 %v270
  %273 = vmatpush1.bf16.msra.mxu0 %v267
  %274 = vmatprep.subr.bf16.mxu0 0
  %275 = vmatpush1.bf16.msra.mxu0 0
  %276 = vmatprep.subr.bf16.mxu0 0
  %277 = vmatpush1.bf16.msra.mxu0 0
  %278 = vmatprep.subr.bf16.mxu0 0
  %279 = vmatpush1.bf16.msra.mxu0 0
  %280 = vmatprep.subr.bf16.mxu0 0
  %281 = vmatpush1.bf16.msra.mxu0 0
  %282 = vmatprep.subr.bf16.mxu0 0
  %283 = vmatpush1.bf16.msra.mxu0 0
  %284 = vmatprep.subr.bf16.mxu0 0
  %285 = vmatpush1.bf16.msra.mxu0 0
  %286 = vmatprep.subr.bf16.mxu0 0
  %287 = vmatpush1.bf16.msra.mxu0 0
  %288 = vmatprep.subr.bf16.mxu0 0
  %289 = vmatpush1.bf16.msra.mxu0 0
  %290 = vmatprep.subr.bf16.mxu0 0
  %291 = vmatpush1.bf16.msra.mxu0 0
  %292 = vmatprep.subr.bf16.mxu0 0
  %293 = vmatpush1.bf16.msra.mxu0 0
  %294 = vmatprep.subr.bf16.mxu0 0
  %295 = vmatpush1.bf16.msra.mxu0 0
  %296 = vmatprep.subr.bf16.mxu0 0
  %297 = vmatpush1.bf16.msra.mxu0 0
  %298 = vmatprep.subr.bf16.mxu0 0
  %299 = vmatpush1.bf16.msra.mxu0 0
  %300 = vmatprep.subr.bf16.mxu0 0
  %301 = vmatpush1.bf16.msra.mxu0 0
  %302 = vmatprep.subr.bf16.mxu0 0
  %303 = vmatpush1.bf16.msra.mxu0 0
  %304 = vmatprep.mubr.bf16.mxu0 0
  %305 = vmatmul.mubr.bf16.gmra.mrb[0].mxu0 %v264
  %v306 = vpop.f32.mrb[0].mxu0
  %v307 = vadd.f32 %v175, %v306
  %v308 = vpop.f32.mrb[0].mxu0
  %v309 = vadd.f32 %v177, %v308
  %v310 = vpop.f32.mrb[0].mxu0
  %v311 = vadd.f32 %v179, %v310
  %v312 = vpop.f32.mrb[0].mxu0
  %v313 = vadd.f32 %v181, %v312
  %314 = vmatprep.mubr.bf16.mxu0 0
  %315 = vmatmul.mubr.bf16.gmra.mrb[0].mxu0 %v110
  %v316 = vpop.f32.mrb[0].mxu0
  %v317 = vadd.f32 %v185, %v316
  %v318 = vpop.f32.mrb[0].mxu0
  %v319 = vadd.f32 %v187, %v318
  %v320 = vpop.f32.mrb[0].mxu0
  %v321 = vadd.f32 %v189, %v320
  %v322 = vpop.f32.mrb[0].mxu0
  %v323 = vadd.f32 %v191, %v322
  %324 = vmatprep.mubr.bf16.mxu0 0
  %325 = vmatmul.mubr.bf16.gmra.mrb[0].mxu0 %v113
  %v326 = vpop.f32.mrb[0].mxu0
  %v327 = vadd.f32 %v195, %v326
  %v328 = vpop.f32.mrb[0].mxu0
  %v329 = vadd.f32 %v197, %v328
  %v330 = vpop.f32.mrb[0].mxu0
  %v331 = vadd.f32 %v199, %v330
  %v332 = vpop.f32.mrb[0].mxu0
  %v333 = vadd.f32 %v201, %v332
  %334 = vmatprep.mubr.bf16.mxu0 0
  %335 = vmatmul.mubr.bf16.gmra.mrb[0].mxu0 %v116
  %v336 = vpop.f32.mrb[0].mxu0
  %v337 = vadd.f32 %v205, %v336
  %v338 = vpop.f32.mrb[0].mxu0
  %v339 = vadd.f32 %v207, %v338
  %v340 = vpop.f32.mrb[0].mxu0
  %v341 = vadd.f32 %v209, %v340
  %v342 = vpop.f32.mrb[0].mxu0
  %v343 = vadd.f32 %v211, %v342
  %344 = vmatprep.mubr.bf16.mxu0 0
  %345 = vmatmul.mubr.bf16.gmra.mrb[0].mxu0 %v119
  %v346 = vpop.f32.mrb[0].mxu0
  %v347 = vadd.f32 %v215, %v346
  %v348 = vpop.f32.mrb[0].mxu0
  %v349 = vadd.f32 %v217, %v348
  %v350 = vpop.f32.mrb[0].mxu0
  %v351 = vadd.f32 %v219, %v350
  %v352 = vpop.f32.mrb[0].mxu0
  %v353 = vadd.f32 %v221, %v352
  %354 = vmatprep.mubr.bf16.mxu0 0
  %355 = vmatmul.mubr.bf16.gmra.mrb[0].mxu0 %v122
  %v356 = vpop.f32.mrb[0].mxu0
  %v357 = vadd.f32 %v225, %v356
  %v358 = vpop.f32.mrb[0].mxu0
  %v359 = vadd.f32 %v227, %v358
  %v360 = vpop.f32.mrb[0].mxu0
  %v361 = vadd.f32 %v229, %v360
  %v362 = vpop.f32.mrb[0].mxu0
  %v363 = vadd.f32 %v231, %v362
  %364 = vmatprep.mubr.bf16.mxu0 0
  %365 = vmatmul.mubr.bf16.gmra.mrb[0].mxu0 %v125
  %v366 = vpop.f32.mrb[0].mxu0
  %v367 = vadd.f32 %v235, %v366
  %v368 = vpop.f32.mrb[0].mxu0
  %v369 = vadd.f32 %v237, %v368
  %v370 = vpop.f32.mrb[0].mxu0
  %v371 = vadd.f32 %v239, %v370
  %v372 = vpop.f32.mrb[0].mxu0
  %v373 = vadd.f32 %v241, %v372
  %374 = vmatprep.mubr.bf16.mxu0 0
  %375 = vmatmul.mubr.bf16.gmra.mrb[0].mxu0 %v128
  %v376 = vpop.f32.mrb[0].mxu0
  %v377 = vadd.f32 %v245, %v376
  %v378 = vpop.f32.mrb[0].mxu0
  %v379 = vadd.f32 %v247, %v378
  %v380 = vpop.f32.mrb[0].mxu0
  %v381 = vadd.f32 %v249, %v380
  %v382 = vpop.f32.mrb[0].mxu0
  %v383 = vadd.f32 %v251, %v382
  %384 = vdwg.mxu0
  %v385 = vld [vmem:[%s0 + $0x10] sm:$0xf]
  %v386 = vld [vmem:[%s0 + $0x14] sm:$0xf]
  %v387 = vld [vmem:[%s0 + $0x18] sm:$0xf]
  %v388 = vld [vmem:[%s0 + $0x1c] sm:$0xf]
  %v389 = vld [vmem:[%s0 + $0x20] sm:$0xf]
  %v390 = vld [vmem:[%s0 + $0x24] sm:$0xf]
  %v391 = vld [vmem:[%s0 + $0x28] sm:$0xf]
  %v392 = vld [vmem:[%s0 + $0x2c] sm:$0xf]
  %v393 = vld [vmem:[%s0 + $0x30] sm:$0xf]
  %v394 = vld [vmem:[%s0 + $0x34] sm:$0xf]
  %v395 = vld [vmem:[%s0 + $0x38] sm:$0xf]
  %v396 = vld [vmem:[%s0 + $0x3c] sm:$0xf]
  %v397 = vld [vmem:[%s0 + $0x40] sm:$0xf]
  %v398 = vld [vmem:[%s0 + $0x44] sm:$0xf]
  %v399 = vld [vmem:[%s0 + $0x48] sm:$0xf]
  %v400 = vld [vmem:[%s0 + $0x4c] sm:$0xf]
  %s401 = scalar_lea.vmem %s1, 16
  %v402 = vld [vmem:[%s401] sm:$0xff]
  %v419 = vunpack.c.l.b16 %v385
  %v420 = vunpack.c.l.b16 %v386
  %v421 = vunpack.c.l.b16 %v387
  %v422 = vunpack.c.l.b16 %v388
  %v423 = vunpack.c.l.b16 %v389
  %v424 = vunpack.c.l.b16 %v390
  %v425 = vunpack.c.l.b16 %v391
  %v426 = vunpack.c.l.b16 %v392
  %v427 = vunpack.c.l.b16 %v393
  %v428 = vunpack.c.l.b16 %v394
  %v429 = vunpack.c.l.b16 %v395
  %v430 = vunpack.c.l.b16 %v396
  %v431 = vunpack.c.l.b16 %v397
  %v432 = vunpack.c.l.b16 %v398
  %v433 = vunpack.c.l.b16 %v399
  %v434 = vunpack.c.l.b16 %v400
  %v435 = vpack.c.b16 %v420, %v419
  %v436 = vpack.c.b16 %v422, %v421
  %v437 = vpack.c.b16 %v424, %v423
  %v438 = vpack.c.b16 %v426, %v425
  %v439 = vpack.c.b16 %v428, %v427
  %v440 = vpack.c.b16 %v430, %v429
  %v441 = vpack.c.b16 %v432, %v431
  %v442 = vpack.c.b16 %v434, %v433
  %v444 = vunpack.c.l.b16 %v402
  %v445 = vunpack.c.h.b16 %v402
  %v446 = vpack.c.b16 %v444, %v444
  %v447 = vpack.c.b16 %v445, %v445
  %v449 = vsel %vm108, %v435, 0
  %v452 = vsel %vm108, %v436, 0
  %v455 = vsel %vm108, %v437, 0
  %v458 = vsel %vm108, %v438, 0
  %v461 = vsel %vm108, %v439, 0
  %v464 = vsel %vm108, %v440, 0
  %v467 = vsel %vm108, %v441, 0
  %v470 = vsel %vm108, %v442, 0
  %v473 = vsel %vm133, %v446, 0
  %v476 = vsel %vm133, %v447, 0
  %478 = vmatprep.subr.bf16.mxu0 %v476
  %479 = vmatpush1.bf16.msra.mxu0 %v473
  %480 = vmatprep.subr.bf16.mxu0 0
  %481 = vmatpush1.bf16.msra.mxu0 0
  %482 = vmatprep.subr.bf16.mxu0 0
  %483 = vmatpush1.bf16.msra.mxu0 0
  %484 = vmatprep.subr.bf16.mxu0 0
  %485 = vmatpush1.bf16.msra.mxu0 0
  %486 = vmatprep.subr.bf16.mxu0 0
  %487 = vmatpush1.bf16.msra.mxu0 0
  %488 = vmatprep.subr.bf16.mxu0 0
  %489 = vmatpush1.bf16.msra.mxu0 0
  %490 = vmatprep.subr.bf16.mxu0 0
  %491 = vmatpush1.bf16.msra.mxu0 0
  %492 = vmatprep.subr.bf16.mxu0 0
  %493 = vmatpush1.bf16.msra.mxu0 0
  %494 = vmatprep.subr.bf16.mxu0 0
  %495 = vmatpush1.bf16.msra.mxu0 0
  %496 = vmatprep.subr.bf16.mxu0 0
  %497 = vmatpush1.bf16.msra.mxu0 0
  %498 = vmatprep.subr.bf16.mxu0 0
  %499 = vmatpush1.bf16.msra.mxu0 0
  %500 = vmatprep.subr.bf16.mxu0 0
  %501 = vmatpush1.bf16.msra.mxu0 0
  %502 = vmatprep.subr.bf16.mxu0 0
  %503 = vmatpush1.bf16.msra.mxu0 0
  %504 = vmatprep.subr.bf16.mxu0 0
  %505 = vmatpush1.bf16.msra.mxu0 0
  %506 = vmatprep.subr.bf16.mxu0 0
  %507 = vmatpush1.bf16.msra.mxu0 0
  %508 = vmatprep.subr.bf16.mxu0 0
  %509 = vmatpush1.bf16.msra.mxu0 0
  %510 = vmatprep.mubr.bf16.mxu0 0
  %511 = vmatmul.mubr.bf16.gmra.mrb[0].mxu0 %v449
  %v512 = vpop.f32.mrb[0].mxu0
  %v513 = vadd.f32 0.0, %v512
  %v514 = vpop.f32.mrb[0].mxu0
  %v515 = vadd.f32 0.0, %v514
  %v516 = vpop.f32.mrb[0].mxu0
  %v517 = vadd.f32 0.0, %v516
  %v518 = vpop.f32.mrb[0].mxu0
  %v519 = vadd.f32 0.0, %v518
  %520 = vmatprep.mubr.bf16.mxu0 0
  %521 = vmatmul.mubr.bf16.gmra.mrb[0].mxu0 %v452
  %v522 = vpop.f32.mrb[0].mxu0
  %v523 = vadd.f32 0.0, %v522
  %v524 = vpop.f32.mrb[0].mxu0
  %v525 = vadd.f32 0.0, %v524
  %v526 = vpop.f32.mrb[0].mxu0
  %v527 = vadd.f32 0.0, %v526
  %v528 = vpop.f32.mrb[0].mxu0
  %v529 = vadd.f32 0.0, %v528
  %530 = vmatprep.mubr.bf16.mxu0 0
  %531 = vmatmul.mubr.bf16.gmra.mrb[0].mxu0 %v455
  %v532 = vpop.f32.mrb[0].mxu0
  %v533 = vadd.f32 0.0, %v532
  %v534 = vpop.f32.mrb[0].mxu0
  %v535 = vadd.f32 0.0, %v534
  %v536 = vpop.f32.mrb[0].mxu0
  %v537 = vadd.f32 0.0, %v536
  %v538 = vpop.f32.mrb[0].mxu0
  %v539 = vadd.f32 0.0, %v538
  %540 = vmatprep.mubr.bf16.mxu0 0
  %541 = vmatmul.mubr.bf16.gmra.mrb[0].mxu0 %v458
  %v542 = vpop.f32.mrb[0].mxu0
  %v543 = vadd.f32 0.0, %v542
  %v544 = vpop.f32.mrb[0].mxu0
  %v545 = vadd.f32 0.0, %v544
  %v546 = vpop.f32.mrb[0].mxu0
  %v547 = vadd.f32 0.0, %v546
  %v548 = vpop.f32.mrb[0].mxu0
  %v549 = vadd.f32 0.0, %v548
  %550 = vmatprep.mubr.bf16.mxu0 0
  %551 = vmatmul.mubr.bf16.gmra.mrb[0].mxu0 %v461
  %v552 = vpop.f32.mrb[0].mxu0
  %v553 = vadd.f32 0.0, %v552
  %v554 = vpop.f32.mrb[0].mxu0
  %v555 = vadd.f32 0.0, %v554
  %v556 = vpop.f32.mrb[0].mxu0
  %v557 = vadd.f32 0.0, %v556
  %v558 = vpop.f32.mrb[0].mxu0
  %v559 = vadd.f32 0.0, %v558
  %560 = vmatprep.mubr.bf16.mxu0 0
  %561 = vmatmul.mubr.bf16.gmra.mrb[0].mxu0 %v464
  %v562 = vpop.f32.mrb[0].mxu0
  %v563 = vadd.f32 0.0, %v562
  %v564 = vpop.f32.mrb[0].mxu0
  %v565 = vadd.f32 0.0, %v564
  %v566 = vpop.f32.mrb[0].mxu0
  %v567 = vadd.f32 0.0, %v566
  %v568 = vpop.f32.mrb[0].mxu0
  %v569 = vadd.f32 0.0, %v568
  %570 = vmatprep.mubr.bf16.mxu0 0
  %571 = vmatmul.mubr.bf16.gmra.mrb[0].mxu0 %v467
  %v572 = vpop.f32.mrb[0].mxu0
  %v573 = vadd.f32 0.0, %v572
  %v574 = vpop.f32.mrb[0].mxu0
  %v575 = vadd.f32 0.0, %v574
  %v576 = vpop.f32.mrb[0].mxu0
  %v577 = vadd.f32 0.0, %v576
  %v578 = vpop.f32.mrb[0].mxu0
  %v579 = vadd.f32 0.0, %v578
  %580 = vmatprep.mubr.bf16.mxu0 0
  %581 = vmatmul.mubr.bf16.gmra.mrb[0].mxu0 %v470
  %v582 = vpop.f32.mrb[0].mxu0
  %v583 = vadd.f32 0.0, %v582
  %v584 = vpop.f32.mrb[0].mxu0
  %v585 = vadd.f32 0.0, %v584
  %v586 = vpop.f32.mrb[0].mxu0
  %v587 = vadd.f32 0.0, %v586
  %v588 = vpop.f32.mrb[0].mxu0
  %v589 = vadd.f32 0.0, %v588
  %590 = vdwg.mxu0
  %v591 = vadd.f32 %v307, %v513
  %v592 = vadd.f32 %v309, %v515
  %v593 = vadd.f32 %v311, %v517
  %v594 = vadd.f32 %v313, %v519
  %v595 = vadd.f32 %v317, %v523
  %v596 = vadd.f32 %v319, %v525
  %v597 = vadd.f32 %v321, %v527
  %v598 = vadd.f32 %v323, %v529
  %v599 = vadd.f32 %v327, %v533
  %v600 = vadd.f32 %v329, %v535
  %v601 = vadd.f32 %v331, %v537
  %v602 = vadd.f32 %v333, %v539
  %v603 = vadd.f32 %v337, %v543
  %v604 = vadd.f32 %v339, %v545
  %v605 = vadd.f32 %v341, %v547
  %v606 = vadd.f32 %v343, %v549
  %v607 = vadd.f32 %v347, %v553
  %v608 = vadd.f32 %v349, %v555
  %v609 = vadd.f32 %v351, %v557
  %v610 = vadd.f32 %v353, %v559
  %v611 = vadd.f32 %v357, %v563
  %v612 = vadd.f32 %v359, %v565
  %v613 = vadd.f32 %v361, %v567
  %v614 = vadd.f32 %v363, %v569
  %v615 = vadd.f32 %v367, %v573
  %v616 = vadd.f32 %v369, %v575
  %v617 = vadd.f32 %v371, %v577
  %v618 = vadd.f32 %v373, %v579
  %v619 = vadd.f32 %v377, %v583
  %v620 = vadd.f32 %v379, %v585
  %v621 = vadd.f32 %v381, %v587
  %v622 = vadd.f32 %v383, %v589
  %v623 = vld [vmem:[%s3] sm:$0x3]
  %v625 = vlaneseq
  %v626 = vshrl.u32 %v625, 7
  %v627 = vsub.s32 0, %v626
  %v628 = vrot.slane %v623, %v627
  %v629 = vlaneseq
  %v630 = vshrl.u32 %v629, 7
  %v631 = vsub.s32 1, %v630
  %v632 = vrot.slane %v623, %v631
  %v635 = vadd.f32 %v591, %v628
  %v636 = vadd.f32 %v592, %v632
  %v637 = vadd.f32 %v593, %v628
  %v638 = vadd.f32 %v594, %v632
  %v639 = vadd.f32 %v595, %v628
  %v640 = vadd.f32 %v596, %v632
  %v641 = vadd.f32 %v597, %v628
  %v642 = vadd.f32 %v598, %v632
  %v643 = vadd.f32 %v599, %v628
  %v644 = vadd.f32 %v600, %v632
  %v645 = vadd.f32 %v601, %v628
  %v646 = vadd.f32 %v602, %v632
  %v647 = vadd.f32 %v603, %v628
  %v648 = vadd.f32 %v604, %v632
  %v649 = vadd.f32 %v605, %v628
  %v650 = vadd.f32 %v606, %v632
  %v651 = vadd.f32 %v607, %v628
  %v652 = vadd.f32 %v608, %v632
  %v653 = vadd.f32 %v609, %v628
  %v654 = vadd.f32 %v610, %v632
  %v655 = vadd.f32 %v611, %v628
  %v656 = vadd.f32 %v612, %v632
  %v657 = vadd.f32 %v613, %v628
  %v658 = vadd.f32 %v614, %v632
  %v659 = vadd.f32 %v615, %v628
  %v660 = vadd.f32 %v616, %v632
  %v661 = vadd.f32 %v617, %v628
  %v662 = vadd.f32 %v618, %v632
  %v663 = vadd.f32 %v619, %v628
  %v664 = vadd.f32 %v620, %v632
  %v665 = vadd.f32 %v621, %v628
  %v666 = vadd.f32 %v622, %v632
  %667 = vst [vmem:[#allocation2] sm:$0xff] %v635
  %668 = vst [vmem:[#allocation2 + $0x8] sm:$0xff] %v636
  %669 = vst [vmem:[#allocation2 + $0x10] sm:$0xff] %v637
  %670 = vst [vmem:[#allocation2 + $0x18] sm:$0xff] %v638
  %671 = vst [vmem:[#allocation2 + $0x20] sm:$0xff] %v639
  %672 = vst [vmem:[#allocation2 + $0x28] sm:$0xff] %v640
  %673 = vst [vmem:[#allocation2 + $0x30] sm:$0xff] %v641
  %674 = vst [vmem:[#allocation2 + $0x38] sm:$0xff] %v642
  %675 = vst [vmem:[#allocation2 + $0x40] sm:$0xff] %v643
  %676 = vst [vmem:[#allocation2 + $0x48] sm:$0xff] %v644
  %677 = vst [vmem:[#allocation2 + $0x50] sm:$0xff] %v645
  %678 = vst [vmem:[#allocation2 + $0x58] sm:$0xff] %v646
  %679 = vst [vmem:[#allocation2 + $0x60] sm:$0xff] %v647
  %680 = vst [vmem:[#allocation2 + $0x68] sm:$0xff] %v648
  %681 = vst [vmem:[#allocation2 + $0x70] sm:$0xff] %v649
  %682 = vst [vmem:[#allocation2 + $0x78] sm:$0xff] %v650
  %683 = vst [vmem:[#allocation2 + $0x80] sm:$0xff] %v651
  %684 = vst [vmem:[#allocation2 + $0x88] sm:$0xff] %v652
  %685 = vst [vmem:[#allocation2 + $0x90] sm:$0xff] %v653
  %686 = vst [vmem:[#allocation2 + $0x98] sm:$0xff] %v654
  %687 = vst [vmem:[#allocation2 + $0xa0] sm:$0xff] %v655
  %688 = vst [vmem:[#allocation2 + $0xa8] sm:$0xff] %v656
  %689 = vst [vmem:[#allocation2 + $0xb0] sm:$0xff] %v657
  %690 = vst [vmem:[#allocation2 + $0xb8] sm:$0xff] %v658
  %691 = vst [vmem:[#allocation2 + $0xc0] sm:$0xff] %v659
  %692 = vst [vmem:[#allocation2 + $0xc8] sm:$0xff] %v660
  %693 = vst [vmem:[#allocation2 + $0xd0] sm:$0xff] %v661
  %694 = vst [vmem:[#allocation2 + $0xd8] sm:$0xff] %v662
  %695 = vst [vmem:[#allocation2 + $0xe0] sm:$0xff] %v663
  %696 = vst [vmem:[#allocation2 + $0xe8] sm:$0xff] %v664
  %697 = vst [vmem:[#allocation2 + $0xf0] sm:$0xff] %v665
  %698 = vst [vmem:[#allocation2 + $0xf8] sm:$0xff] %v666
  %vm699 = vcmask 523264
  %700 = vst.msk [vmem:[#allocation3] sm:$0xff] %vm699, 0.0
  %701 = vst.msk [vmem:[#allocation3 + $0x8] sm:$0xff] %vm699, 0.0
  %702 = vst.msk [vmem:[#allocation3 + $0x10] sm:$0xff] %vm699, 0.0
  %703 = vst.msk [vmem:[#allocation3 + $0x18] sm:$0xff] %vm699, 0.0
  %vm704 = vcmask 261120
  %705 = vst.msk [vmem:[#allocation4] sm:$0xff] %vm704, 0.0
  %706 = vst.msk [vmem:[#allocation4 + $0x8] sm:$0xff] %vm704, 0.0
  %707 = vst.msk [vmem:[#allocation4 + $0x10] sm:$0xff] %vm704, 0.0
  %708 = vst.msk [vmem:[#allocation4 + $0x18] sm:$0xff] %vm704, 0.0
  loop: start=0, step=1, limit=2
  $region50: #{brain_lstm_forward.1} parent=0 // loop_pre_header
    _
  $region51: #{brain_lstm_forward.1} parent=0 // loop_header
    %s710 = sphi 0, %s714
    %p711 = scmp.ge.s32.totalorder %s710, 2
  $region52: #{brain_lstm_forward.1} parent=0 // loop_header_branch
    %713 = sbr.rel (%p711) target = $region56
  $region53: #{brain_lstm_forward.1} parent=0 // loop_body
    %s715 = smul.u32 %s710, 4
    %s716 = ssub.s32 7, %s715
    %v717 = vld [vmem:[#allocation3] sm:$0xff]
    %v718 = vld [vmem:[#allocation3 + $0x8] sm:$0xff]
    %v719 = vld [vmem:[#allocation3 + $0x10] sm:$0xff]
    %v720 = vld [vmem:[#allocation3 + $0x18] sm:$0xff]
    %v721 = vpack.c.bf16 %v718, %v717
    %v722 = vpack.c.bf16 %v720, %v719
    %v723 = vld [vmem:[%s2] sm:$0xf]
    %v724 = vld [vmem:[%s2 + $0x4] sm:$0xf]
    %v725 = vld [vmem:[%s2 + $0x8] sm:$0xf]
    %v726 = vld [vmem:[%s2 + $0xc] sm:$0xf]
    %v727 = vld [vmem:[%s2 + $0x10] sm:$0xf]
    %v728 = vld [vmem:[%s2 + $0x14] sm:$0xf]
    %v729 = vld [vmem:[%s2 + $0x18] sm:$0xf]
    %v730 = vld [vmem:[%s2 + $0x1c] sm:$0xf]
    %v739 = vunpack.c.l.b16 %v723
    %v740 = vunpack.c.l.b16 %v724
    %v741 = vunpack.c.l.b16 %v725
    %v742 = vunpack.c.l.b16 %v726
    %v743 = vunpack.c.l.b16 %v727
    %v744 = vunpack.c.l.b16 %v728
    %v745 = vunpack.c.l.b16 %v729
    %v746 = vunpack.c.l.b16 %v730
    %v747 = vpack.c.b16 %v740, %v739
    %v748 = vpack.c.b16 %v742, %v741
    %v749 = vpack.c.b16 %v744, %v743
    %v750 = vpack.c.b16 %v746, %v745
    %v756 = vsel %vm699, %v721, 0
    %v759 = vsel %vm699, %v722, 0
    %761 = vmatprep.subr.bf16.mxu0 0
    %762 = vmatpush1.bf16.msra.mxu0 %v747
    %763 = vmatprep.subr.bf16.mxu0 0
    %764 = vmatpush1.bf16.msra.mxu0 %v748
    %765 = vmatprep.subr.bf16.mxu0 0
    %766 = vmatpush1.bf16.msra.mxu0 %v749
    %767 = vmatprep.subr.bf16.mxu0 0
    %768 = vmatpush1.bf16.msra.mxu0 %v750
    %769 = vmatprep.subr.bf16.mxu0 0
    %770 = vmatpush1.bf16.msra.mxu0 0
    %771 = vmatprep.subr.bf16.mxu0 0
    %772 = vmatpush1.bf16.msra.mxu0 0
    %773 = vmatprep.subr.bf16.mxu0 0
    %774 = vmatpush1.bf16.msra.mxu0 0
    %775 = vmatprep.subr.bf16.mxu0 0
    %776 = vmatpush1.bf16.msra.mxu0 0
    %777 = vmatprep.subr.bf16.mxu0 0
    %778 = vmatpush1.bf16.msra.mxu0 0
    %779 = vmatprep.subr.bf16.mxu0 0
    %780 = vmatpush1.bf16.msra.mxu0 0
    %781 = vmatprep.subr.bf16.mxu0 0
    %782 = vmatpush1.bf16.msra.mxu0 0
    %783 = vmatprep.subr.bf16.mxu0 0
    %784 = vmatpush1.bf16.msra.mxu0 0
    %785 = vmatprep.subr.bf16.mxu0 0
    %786 = vmatpush1.bf16.msra.mxu0 0
    %787 = vmatprep.subr.bf16.mxu0 0
    %788 = vmatpush1.bf16.msra.mxu0 0
    %789 = vmatprep.subr.bf16.mxu0 0
    %790 = vmatpush1.bf16.msra.mxu0 0
    %791 = vmatprep.subr.bf16.mxu0 0
    %792 = vmatpush1.bf16.msra.mxu0 0
    %793 = vmatprep.mubr.bf16.mxu0 0
    %794 = vmatmul.mubr.bf16.gmra.mrb[0].mxu0 %v756
    %v795 = vpop.f32.mrb[0].mxu0
    %v796 = vadd.f32 0.0, %v795
    %v797 = vpop.f32.mrb[0].mxu0
    %v798 = vpop.f32.mrb[0].mxu0
    %v799 = vadd.f32 0.0, %v798
    %v800 = vpop.f32.mrb[0].mxu0
    %801 = vmatprep.mubr.bf16.mxu0 0
    %802 = vmatmul.mubr.bf16.gmra.mrb[0].mxu0 %v759
    %v803 = vpop.f32.mrb[0].mxu0
    %v804 = vadd.f32 0.0, %v803
    %v805 = vpop.f32.mrb[0].mxu0
    %v806 = vpop.f32.mrb[0].mxu0
    %v807 = vadd.f32 0.0, %v806
    %v808 = vpop.f32.mrb[0].mxu0
    %809 = vdwg.mxu0
    %s810 = smul.u32 %s715, 4
    %s811 = smul.addr %s810, 8
    %s812 = scalar_lea.vmem [#allocation2], %s811
    %v813 = vld [vmem:[%s812] sm:$0xff]
    %v814 = vld [vmem:[%s812 + $0x10] sm:$0xff]
    %s815 = smul.u32 %s716, 4
    %s816 = smul.addr %s815, 8
    %s817 = scalar_lea.vmem [#allocation2], %s816
    %v818 = vld [vmem:[%s817 + $0x8] sm:$0xff]
    %v819 = vld [vmem:[%s817 + $0x18] sm:$0xff]
    %v820 = vadd.f32 %v813, %v796
    %v821 = vadd.f32 %v814, %v799
    %v822 = vadd.f32 %v818, %v804
    %v823 = vadd.f32 %v819, %v807
    %v824 = vxor.u32 %v820, 2147483648
    %v825 = vxor.u32 %v821, 2147483648
    %v826 = vxor.u32 %v822, 2147483648
    %v827 = vxor.u32 %v823, 2147483648
    %v828 = vmul.f32 %v824, 1.442695
    %v829 = vpow.pop %v828
    %v830 = vmul.f32 %v825, 1.442695
    %v831 = vpow.pop %v830
    %v832 = vmul.f32 %v826, 1.442695
    %v833 = vpow.pop %v832
    %v834 = vmul.f32 %v827, 1.442695
    %v835 = vpow.pop %v834
    %v836 = vadd.f32 %v829, 1.0
    %v837 = vadd.f32 %v831, 1.0
    %v838 = vadd.f32 %v833, 1.0
    %v839 = vadd.f32 %v835, 1.0
    %v840 = vrcp.pop %v836
    %v841 = vmul.f32 1.0, %v840
    %v842 = vrcp.pop %v837
    %v843 = vmul.f32 1.0, %v842
    %v844 = vrcp.pop %v838
    %v845 = vmul.f32 1.0, %v844
    %v846 = vrcp.pop %v839
    %v847 = vmul.f32 1.0, %v846
    %v848 = vtanh.pop %v820
    %v849 = vtanh.pop %v821
    %v850 = vtanh.pop %v822
    %v851 = vtanh.pop %v823
    %v852 = vld [vmem:[#allocation4] sm:$0xff]
    %v853 = vld [vmem:[#allocation4 + $0x8] sm:$0xff]
    %v854 = vld [vmem:[#allocation4 + $0x10] sm:$0xff]
    %v855 = vld [vmem:[#allocation4 + $0x18] sm:$0xff]
    %860 = vrot.lane.b32.xlu0 %v852, 32
    %v861 = vpop.permute.xlu0 %860
    %862 = vrot.lane.b32.xlu0 %v853, 32
    %v863 = vpop.permute.xlu0 %862
    %864 = vrot.lane.b32.xlu0 %v854, 32
    %v865 = vpop.permute.xlu0 %864
    %866 = vrot.lane.b32.xlu0 %v855, 32
    %v867 = vpop.permute.xlu0 %866
    %v872 = vmul.f32 %v841, %v861
    %v873 = vmul.f32 %v843, %v863
    %v874 = vmul.f32 %v845, %v865
    %v875 = vmul.f32 %v847, %v867
    %880 = vrot.lane.b32.xlu0 %v848, 32
    %v881 = vpop.permute.xlu0 %880
    %882 = vrot.lane.b32.xlu0 %v849, 32
    %v883 = vpop.permute.xlu0 %882
    %884 = vrot.lane.b32.xlu0 %v850, 32
    %v885 = vpop.permute.xlu0 %884
    %886 = vrot.lane.b32.xlu0 %v851, 32
    %v887 = vpop.permute.xlu0 %886
    %v892 = vmul.f32 %v841, %v881
    %v893 = vmul.f32 %v843, %v883
    %v894 = vmul.f32 %v845, %v885
    %v895 = vmul.f32 %v847, %v887
    %900 = vrot.lane.b32.xlu0 %v892, 32
    %v901 = vpop.permute.xlu0 %900
    %902 = vrot.lane.b32.xlu0 %v893, 32
    %v903 = vpop.permute.xlu0 %902
    %904 = vrot.lane.b32.xlu0 %v894, 32
    %v905 = vpop.permute.xlu0 %904
    %906 = vrot.lane.b32.xlu0 %v895, 32
    %v907 = vpop.permute.xlu0 %906
    %v912 = vadd.f32 %v872, %v901
    %v913 = vadd.f32 %v873, %v903
    %v914 = vadd.f32 %v874, %v905
    %v915 = vadd.f32 %v875, %v907
    %v916 = vtanh.pop %v912
    %v917 = vtanh.pop %v913
    %v918 = vtanh.pop %v914
    %v919 = vtanh.pop %v915
    %924 = vrot.lane.b32.xlu0 %v916, 32
    %v925 = vpop.permute.xlu0 %924
    %926 = vrot.lane.b32.xlu0 %v917, 32
    %v927 = vpop.permute.xlu0 %926
    %928 = vrot.lane.b32.xlu0 %v918, 32
    %v929 = vpop.permute.xlu0 %928
    %930 = vrot.lane.b32.xlu0 %v919, 32
    %v931 = vpop.permute.xlu0 %930
    %v936 = vmul.f32 %v841, %v925
    %v937 = vmul.f32 %v843, %v927
    %v938 = vmul.f32 %v845, %v929
    %v939 = vmul.f32 %v847, %v931
    %944 = vrot.lane.b32.xlu0 %v912, 96
    %v945 = vpop.permute.xlu0 %944
    %946 = vrot.lane.b32.xlu0 %v913, 96
    %v947 = vpop.permute.xlu0 %946
    %948 = vrot.lane.b32.xlu0 %v914, 96
    %v949 = vpop.permute.xlu0 %948
    %950 = vrot.lane.b32.xlu0 %v915, 96
    %v951 = vpop.permute.xlu0 %950
    %956 = vst.msk [vmem:[#allocation4] sm:$0xff] %vm704, %v945
    %957 = vst.msk [vmem:[#allocation4 + $0x8] sm:$0xff] %vm704, %v947
    %958 = vst.msk [vmem:[#allocation4 + $0x10] sm:$0xff] %vm704, %v949
    %959 = vst.msk [vmem:[#allocation4 + $0x18] sm:$0xff] %vm704, %v951
    %962 = vrot.lane.b32.xlu0 %v936, 64
    %v963 = vpop.permute.xlu0 %962
    %964 = vrot.lane.b32.xlu0 %v937, 64
    %v965 = vpop.permute.xlu0 %964
    %968 = vst.msk [vmem:[#allocation3] sm:$0xff] %vm704, %v963
    %969 = vst.msk [vmem:[#allocation3 + $0x8] sm:$0xff] %vm704, %v965
    %972 = vrot.lane.b32.xlu0 %v938, 96
    %v973 = vpop.permute.xlu0 %972
    %974 = vrot.lane.b32.xlu0 %v939, 96
    %v975 = vpop.permute.xlu0 %974
    %vm978 = vcmask 523520
    %979 = vst.msk [vmem:[#allocation3 + $0x10] sm:$0xff] %vm978, %v973
    %980 = vst.msk [vmem:[#allocation3 + $0x18] sm:$0xff] %vm978, %v975
    %s981 = smul.u32 %s715, 16
    %s982 = scalar_lea.vmem [#allocation5], %s981
    %983 = vst.msk [vmem:[%s982] sm:$0xff] %vm704, %v963
    %984 = vst.msk [vmem:[%s982 + $0x8] sm:$0xff] %vm704, %v965
    %985 = vrot.lane.b32.xlu0 %v938, 64
    %v986 = vpop.permute.xlu0 %985
    %987 = vrot.lane.b32.xlu0 %v939, 64
    %v988 = vpop.permute.xlu0 %987
    %s991 = smul.u32 %s716, 16
    %s992 = scalar_lea.vmem [#allocation6], %s991
    %993 = vst.msk [vmem:[%s992] sm:$0xff] %vm704, %v986
    %994 = vst.msk [vmem:[%s992 + $0x8] sm:$0xff] %vm704, %v988
    %s995 = sadd.s32 %s715, 1
    %s996 = ssub.s32 6, %s715
    %v997 = vld [vmem:[#allocation3] sm:$0xff]
    %v998 = vld [vmem:[#allocation3 + $0x8] sm:$0xff]
    %v999 = vld [vmem:[#allocation3 + $0x10] sm:$0xff]
    %v1000 = vld [vmem:[#allocation3 + $0x18] sm:$0xff]
    %v1001 = vpack.c.bf16 %v998, %v997
    %v1002 = vpack.c.bf16 %v1000, %v999
    %v1003 = vld [vmem:[%s2] sm:$0xf]
    %v1004 = vld [vmem:[%s2 + $0x4] sm:$0xf]
    %v1005 = vld [vmem:[%s2 + $0x8] sm:$0xf]
    %v1006 = vld [vmem:[%s2 + $0xc] sm:$0xf]
    %v1007 = vld [vmem:[%s2 + $0x10] sm:$0xf]
    %v1008 = vld [vmem:[%s2 + $0x14] sm:$0xf]
    %v1009 = vld [vmem:[%s2 + $0x18] sm:$0xf]
    %v1010 = vld [vmem:[%s2 + $0x1c] sm:$0xf]
    %v1019 = vunpack.c.l.b16 %v1003
    %v1020 = vunpack.c.l.b16 %v1004
    %v1021 = vunpack.c.l.b16 %v1005
    %v1022 = vunpack.c.l.b16 %v1006
    %v1023 = vunpack.c.l.b16 %v1007
    %v1024 = vunpack.c.l.b16 %v1008
    %v1025 = vunpack.c.l.b16 %v1009
    %v1026 = vunpack.c.l.b16 %v1010
    %v1027 = vpack.c.b16 %v1020, %v1019
    %v1028 = vpack.c.b16 %v1022, %v1021
    %v1029 = vpack.c.b16 %v1024, %v1023
    %v1030 = vpack.c.b16 %v1026, %v1025
    %v1036 = vsel %vm699, %v1001, 0
    %v1039 = vsel %vm699, %v1002, 0
    %1041 = vmatprep.subr.bf16.mxu0 0
    %1042 = vmatpush1.bf16.msra.mxu0 %v1027
    %1043 = vmatprep.subr.bf16.mxu0 0
    %1044 = vmatpush1.bf16.msra.mxu0 %v1028
    %1045 = vmatprep.subr.bf16.mxu0 0
    %1046 = vmatpush1.bf16.msra.mxu0 %v1029
    %1047 = vmatprep.subr.bf16.mxu0 0
    %1048 = vmatpush1.bf16.msra.mxu0 %v1030
    %1049 = vmatprep.subr.bf16.mxu0 0
    %1050 = vmatpush1.bf16.msra.mxu0 0
    %1051 = vmatprep.subr.bf16.mxu0 0
    %1052 = vmatpush1.bf16.msra.mxu0 0
    %1053 = vmatprep.subr.bf16.mxu0 0
    %1054 = vmatpush1.bf16.msra.mxu0 0
    %1055 = vmatprep.subr.bf16.mxu0 0
    %1056 = vmatpush1.bf16.msra.mxu0 0
    %1057 = vmatprep.subr.bf16.mxu0 0
    %1058 = vmatpush1.bf16.msra.mxu0 0
    %1059 = vmatprep.subr.bf16.mxu0 0
    %1060 = vmatpush1.bf16.msra.mxu0 0
    %1061 = vmatprep.subr.bf16.mxu0 0
    %1062 = vmatpush1.bf16.msra.mxu0 0
    %1063 = vmatprep.subr.bf16.mxu0 0
    %1064 = vmatpush1.bf16.msra.mxu0 0
    %1065 = vmatprep.subr.bf16.mxu0 0
    %1066 = vmatpush1.bf16.msra.mxu0 0
    %1067 = vmatprep.subr.bf16.mxu0 0
    %1068 = vmatpush1.bf16.msra.mxu0 0
    %1069 = vmatprep.subr.bf16.mxu0 0
    %1070 = vmatpush1.bf16.msra.mxu0 0
    %1071 = vmatprep.subr.bf16.mxu0 0
    %1072 = vmatpush1.bf16.msra.mxu0 0
    %1073 = vmatprep.mubr.bf16.mxu0 0
    %1074 = vmatmul.mubr.bf16.gmra.mrb[0].mxu0 %v1036
    %v1075 = vpop.f32.mrb[0].mxu0
    %v1076 = vadd.f32 0.0, %v1075
    %v1077 = vpop.f32.mrb[0].mxu0
    %v1078 = vpop.f32.mrb[0].mxu0
    %v1079 = vadd.f32 0.0, %v1078
    %v1080 = vpop.f32.mrb[0].mxu0
    %1081 = vmatprep.mubr.bf16.mxu0 0
    %1082 = vmatmul.mubr.bf16.gmra.mrb[0].mxu0 %v1039
    %v1083 = vpop.f32.mrb[0].mxu0
    %v1084 = vadd.f32 0.0, %v1083
    %v1085 = vpop.f32.mrb[0].mxu0
    %v1086 = vpop.f32.mrb[0].mxu0
    %v1087 = vadd.f32 0.0, %v1086
    %v1088 = vpop.f32.mrb[0].mxu0
    %1089 = vdwg.mxu0
    %s1090 = smul.u32 %s995, 4
    %s1091 = smul.addr %s1090, 8
    %s1092 = scalar_lea.vmem [#allocation2], %s1091
    %v1093 = vld [vmem:[%s1092] sm:$0xff]
    %v1094 = vld [vmem:[%s1092 + $0x10] sm:$0xff]
    %s1095 = smul.u32 %s996, 4
    %s1096 = smul.addr %s1095, 8
    %s1097 = scalar_lea.vmem [#allocation2], %s1096
    %v1098 = vld [vmem:[%s1097 + $0x8] sm:$0xff]
    %v1099 = vld [vmem:[%s1097 + $0x18] sm:$0xff]
    %v1100 = vadd.f32 %v1093, %v1076
    %v1101 = vadd.f32 %v1094, %v1079
    %v1102 = vadd.f32 %v1098, %v1084
    %v1103 = vadd.f32 %v1099, %v1087
    %v1104 = vxor.u32 %v1100, 2147483648
    %v1105 = vxor.u32 %v1101, 2147483648
    %v1106 = vxor.u32 %v1102, 2147483648
    %v1107 = vxor.u32 %v1103, 2147483648
    %v1108 = vmul.f32 %v1104, 1.442695
    %v1109 = vpow.pop %v1108
    %v1110 = vmul.f32 %v1105, 1.442695
    %v1111 = vpow.pop %v1110
    %v1112 = vmul.f32 %v1106, 1.442695
    %v1113 = vpow.pop %v1112
    %v1114 = vmul.f32 %v1107, 1.442695
    %v1115 = vpow.pop %v1114
    %v1116 = vadd.f32 %v1109, 1.0
    %v1117 = vadd.f32 %v1111, 1.0
    %v1118 = vadd.f32 %v1113, 1.0
    %v1119 = vadd.f32 %v1115, 1.0
    %v1120 = vrcp.pop %v1116
    %v1121 = vmul.f32 1.0, %v1120
    %v1122 = vrcp.pop %v1117
    %v1123 = vmul.f32 1.0, %v1122
    %v1124 = vrcp.pop %v1118
    %v1125 = vmul.f32 1.0, %v1124
    %v1126 = vrcp.pop %v1119
    %v1127 = vmul.f32 1.0, %v1126
    %v1128 = vtanh.pop %v1100
    %v1129 = vtanh.pop %v1101
    %v1130 = vtanh.pop %v1102
    %v1131 = vtanh.pop %v1103
    %v1132 = vld [vmem:[#allocation4] sm:$0xff]
    %v1133 = vld [vmem:[#allocation4 + $0x8] sm:$0xff]
    %v1134 = vld [vmem:[#allocation4 + $0x10] sm:$0xff]
    %v1135 = vld [vmem:[#allocation4 + $0x18] sm:$0xff]
    %1140 = vrot.lane.b32.xlu0 %v1132, 32
    %v1141 = vpop.permute.xlu0 %1140
    %1142 = vrot.lane.b32.xlu0 %v1133, 32
    %v1143 = vpop.permute.xlu0 %1142
    %1144 = vrot.lane.b32.xlu0 %v1134, 32
    %v1145 = vpop.permute.xlu0 %1144
    %1146 = vrot.lane.b32.xlu0 %v1135, 32
    %v1147 = vpop.permute.xlu0 %1146
    %v1152 = vmul.f32 %v1121, %v1141
    %v1153 = vmul.f32 %v1123, %v1143
    %v1154 = vmul.f32 %v1125, %v1145
    %v1155 = vmul.f32 %v1127, %v1147
    %1160 = vrot.lane.b32.xlu0 %v1128, 32
    %v1161 = vpop.permute.xlu0 %1160
    %1162 = vrot.lane.b32.xlu0 %v1129, 32
    %v1163 = vpop.permute.xlu0 %1162
    %1164 = vrot.lane.b32.xlu0 %v1130, 32
    %v1165 = vpop.permute.xlu0 %1164
    %1166 = vrot.lane.b32.xlu0 %v1131, 32
    %v1167 = vpop.permute.xlu0 %1166
    %v1172 = vmul.f32 %v1121, %v1161
    %v1173 = vmul.f32 %v1123, %v1163
    %v1174 = vmul.f32 %v1125, %v1165
    %v1175 = vmul.f32 %v1127, %v1167
    %1180 = vrot.lane.b32.xlu0 %v1172, 32
    %v1181 = vpop.permute.xlu0 %1180
    %1182 = vrot.lane.b32.xlu0 %v1173, 32
    %v1183 = vpop.permute.xlu0 %1182
    %1184 = vrot.lane.b32.xlu0 %v1174, 32
    %v1185 = vpop.permute.xlu0 %1184
    %1186 = vrot.lane.b32.xlu0 %v1175, 32
    %v1187 = vpop.permute.xlu0 %1186
    %v1192 = vadd.f32 %v1152, %v1181
    %v1193 = vadd.f32 %v1153, %v1183
    %v1194 = vadd.f32 %v1154, %v1185
    %v1195 = vadd.f32 %v1155, %v1187
    %v1196 = vtanh.pop %v1192
    %v1197 = vtanh.pop %v1193
    %v1198 = vtanh.pop %v1194
    %v1199 = vtanh.pop %v1195
    %1204 = vrot.lane.b32.xlu0 %v1196, 32
    %v1205 = vpop.permute.xlu0 %1204
    %1206 = vrot.lane.b32.xlu0 %v1197, 32
    %v1207 = vpop.permute.xlu0 %1206
    %1208 = vrot.lane.b32.xlu0 %v1198, 32
    %v1209 = vpop.permute.xlu0 %1208
    %1210 = vrot.lane.b32.xlu0 %v1199, 32
    %v1211 = vpop.permute.xlu0 %1210
    %v1216 = vmul.f32 %v1121, %v1205
    %v1217 = vmul.f32 %v1123, %v1207
    %v1218 = vmul.f32 %v1125, %v1209
    %v1219 = vmul.f32 %v1127, %v1211
    %1224 = vrot.lane.b32.xlu0 %v1192, 96
    %v1225 = vpop.permute.xlu0 %1224
    %1226 = vrot.lane.b32.xlu0 %v1193, 96
    %v1227 = vpop.permute.xlu0 %1226
    %1228 = vrot.lane.b32.xlu0 %v1194, 96
    %v1229 = vpop.permute.xlu0 %1228
    %1230 = vrot.lane.b32.xlu0 %v1195, 96
    %v1231 = vpop.permute.xlu0 %1230
    %1236 = vst.msk [vmem:[#allocation4] sm:$0xff] %vm704, %v1225
    %1237 = vst.msk [vmem:[#allocation4 + $0x8] sm:$0xff] %vm704, %v1227
    %1238 = vst.msk [vmem:[#allocation4 + $0x10] sm:$0xff] %vm704, %v1229
    %1239 = vst.msk [vmem:[#allocation4 + $0x18] sm:$0xff] %vm704, %v1231
    %1242 = vrot.lane.b32.xlu0 %v1216, 64
    %v1243 = vpop.permute.xlu0 %1242
    %1244 = vrot.lane.b32.xlu0 %v1217, 64
    %v1245 = vpop.permute.xlu0 %1244
    %1248 = vst.msk [vmem:[#allocation3] sm:$0xff] %vm704, %v1243
    %1249 = vst.msk [vmem:[#allocation3 + $0x8] sm:$0xff] %vm704, %v1245
    %1252 = vrot.lane.b32.xlu0 %v1218, 96
    %v1253 = vpop.permute.xlu0 %1252
    %1254 = vrot.lane.b32.xlu0 %v1219, 96
    %v1255 = vpop.permute.xlu0 %1254
    %1258 = vst.msk [vmem:[#allocation3 + $0x10] sm:$0xff] %vm978, %v1253
    %1259 = vst.msk [vmem:[#allocation3 + $0x18] sm:$0xff] %vm978, %v1255
    %s1260 = smul.u32 %s995, 16
    %s1261 = scalar_lea.vmem [#allocation5], %s1260
    %1262 = vst.msk [vmem:[%s1261] sm:$0xff] %vm704, %v1243
    %1263 = vst.msk [vmem:[%s1261 + $0x8] sm:$0xff] %vm704, %v1245
    %1264 = vrot.lane.b32.xlu0 %v1218, 64
    %v1265 = vpop.permute.xlu0 %1264
    %1266 = vrot.lane.b32.xlu0 %v1219, 64
    %v1267 = vpop.permute.xlu0 %1266
    %s1270 = smul.u32 %s996, 16
    %s1271 = scalar_lea.vmem [#allocation6], %s1270
    %1272 = vst.msk [vmem:[%s1271] sm:$0xff] %vm704, %v1265
    %1273 = vst.msk [vmem:[%s1271 + $0x8] sm:$0xff] %vm704, %v1267
    %s1274 = sadd.s32 %s715, 2
    %s1275 = ssub.s32 5, %s715
    %v1276 = vld [vmem:[#allocation3] sm:$0xff]
    %v1277 = vld [vmem:[#allocation3 + $0x8] sm:$0xff]
    %v1278 = vld [vmem:[#allocation3 + $0x10] sm:$0xff]
    %v1279 = vld [vmem:[#allocation3 + $0x18] sm:$0xff]
    %v1280 = vpack.c.bf16 %v1277, %v1276
    %v1281 = vpack.c.bf16 %v1279, %v1278
    %v1282 = vld [vmem:[%s2] sm:$0xf]
    %v1283 = vld [vmem:[%s2 + $0x4] sm:$0xf]
    %v1284 = vld [vmem:[%s2 + $0x8] sm:$0xf]
    %v1285 = vld [vmem:[%s2 + $0xc] sm:$0xf]
    %v1286 = vld [vmem:[%s2 + $0x10] sm:$0xf]
    %v1287 = vld [vmem:[%s2 + $0x14] sm:$0xf]
    %v1288 = vld [vmem:[%s2 + $0x18] sm:$0xf]
    %v1289 = vld [vmem:[%s2 + $0x1c] sm:$0xf]
    %v1298 = vunpack.c.l.b16 %v1282
    %v1299 = vunpack.c.l.b16 %v1283
    %v1300 = vunpack.c.l.b16 %v1284
    %v1301 = vunpack.c.l.b16 %v1285
    %v1302 = vunpack.c.l.b16 %v1286
    %v1303 = vunpack.c.l.b16 %v1287
    %v1304 = vunpack.c.l.b16 %v1288
    %v1305 = vunpack.c.l.b16 %v1289
    %v1306 = vpack.c.b16 %v1299, %v1298
    %v1307 = vpack.c.b16 %v1301, %v1300
    %v1308 = vpack.c.b16 %v1303, %v1302
    %v1309 = vpack.c.b16 %v1305, %v1304
    %v1315 = vsel %vm699, %v1280, 0
    %v1318 = vsel %vm699, %v1281, 0
    %1320 = vmatprep.subr.bf16.mxu0 0
    %1321 = vmatpush1.bf16.msra.mxu0 %v1306
    %1322 = vmatprep.subr.bf16.mxu0 0
    %1323 = vmatpush1.bf16.msra.mxu0 %v1307
    %1324 = vmatprep.subr.bf16.mxu0 0
    %1325 = vmatpush1.bf16.msra.mxu0 %v1308
    %1326 = vmatprep.subr.bf16.mxu0 0
    %1327 = vmatpush1.bf16.msra.mxu0 %v1309
    %1328 = vmatprep.subr.bf16.mxu0 0
    %1329 = vmatpush1.bf16.msra.mxu0 0
    %1330 = vmatprep.subr.bf16.mxu0 0
    %1331 = vmatpush1.bf16.msra.mxu0 0
    %1332 = vmatprep.subr.bf16.mxu0 0
    %1333 = vmatpush1.bf16.msra.mxu0 0
    %1334 = vmatprep.subr.bf16.mxu0 0
    %1335 = vmatpush1.bf16.msra.mxu0 0
    %1336 = vmatprep.subr.bf16.mxu0 0
    %1337 = vmatpush1.bf16.msra.mxu0 0
    %1338 = vmatprep.subr.bf16.mxu0 0
    %1339 = vmatpush1.bf16.msra.mxu0 0
    %1340 = vmatprep.subr.bf16.mxu0 0
    %1341 = vmatpush1.bf16.msra.mxu0 0
    %1342 = vmatprep.subr.bf16.mxu0 0
    %1343 = vmatpush1.bf16.msra.mxu0 0
    %1344 = vmatprep.subr.bf16.mxu0 0
    %1345 = vmatpush1.bf16.msra.mxu0 0
    %1346 = vmatprep.subr.bf16.mxu0 0
    %1347 = vmatpush1.bf16.msra.mxu0 0
    %1348 = vmatprep.subr.bf16.mxu0 0
    %1349 = vmatpush1.bf16.msra.mxu0 0
    %1350 = vmatprep.subr.bf16.mxu0 0
    %1351 = vmatpush1.bf16.msra.mxu0 0
    %1352 = vmatprep.mubr.bf16.mxu0 0
    %1353 = vmatmul.mubr.bf16.gmra.mrb[0].mxu0 %v1315
    %v1354 = vpop.f32.mrb[0].mxu0
    %v1355 = vadd.f32 0.0, %v1354
    %v1356 = vpop.f32.mrb[0].mxu0
    %v1357 = vpop.f32.mrb[0].mxu0
    %v1358 = vadd.f32 0.0, %v1357
    %v1359 = vpop.f32.mrb[0].mxu0
    %1360 = vmatprep.mubr.bf16.mxu0 0
    %1361 = vmatmul.mubr.bf16.gmra.mrb[0].mxu0 %v1318
    %v1362 = vpop.f32.mrb[0].mxu0
    %v1363 = vadd.f32 0.0, %v1362
    %v1364 = vpop.f32.mrb[0].mxu0
    %v1365 = vpop.f32.mrb[0].mxu0
    %v1366 = vadd.f32 0.0, %v1365
    %v1367 = vpop.f32.mrb[0].mxu0
    %1368 = vdwg.mxu0
    %s1369 = smul.u32 %s1274, 4
    %s1370 = smul.addr %s1369, 8
    %s1371 = scalar_lea.vmem [#allocation2], %s1370
    %v1372 = vld [vmem:[%s1371] sm:$0xff]
    %v1373 = vld [vmem:[%s1371 + $0x10] sm:$0xff]
    %s1374 = smul.u32 %s1275, 4
    %s1375 = smul.addr %s1374, 8
    %s1376 = scalar_lea.vmem [#allocation2], %s1375
    %v1377 = vld [vmem:[%s1376 + $0x8] sm:$0xff]
    %v1378 = vld [vmem:[%s1376 + $0x18] sm:$0xff]
    %v1379 = vadd.f32 %v1372, %v1355
    %v1380 = vadd.f32 %v1373, %v1358
    %v1381 = vadd.f32 %v1377, %v1363
    %v1382 = vadd.f32 %v1378, %v1366
    %v1383 = vxor.u32 %v1379, 2147483648
    %v1384 = vxor.u32 %v1380, 2147483648
    %v1385 = vxor.u32 %v1381, 2147483648
    %v1386 = vxor.u32 %v1382, 2147483648
    %v1387 = vmul.f32 %v1383, 1.442695
    %v1388 = vpow.pop %v1387
    %v1389 = vmul.f32 %v1384, 1.442695
    %v1390 = vpow.pop %v1389
    %v1391 = vmul.f32 %v1385, 1.442695
    %v1392 = vpow.pop %v1391
    %v1393 = vmul.f32 %v1386, 1.442695
    %v1394 = vpow.pop %v1393
    %v1395 = vadd.f32 %v1388, 1.0
    %v1396 = vadd.f32 %v1390, 1.0
    %v1397 = vadd.f32 %v1392, 1.0
    %v1398 = vadd.f32 %v1394, 1.0
    %v1399 = vrcp.pop %v1395
    %v1400 = vmul.f32 1.0, %v1399
    %v1401 = vrcp.pop %v1396
    %v1402 = vmul.f32 1.0, %v1401
    %v1403 = vrcp.pop %v1397
    %v1404 = vmul.f32 1.0, %v1403
    %v1405 = vrcp.pop %v1398
    %v1406 = vmul.f32 1.0, %v1405
    %v1407 = vtanh.pop %v1379
    %v1408 = vtanh.pop %v1380
    %v1409 = vtanh.pop %v1381
    %v1410 = vtanh.pop %v1382
    %v1411 = vld [vmem:[#allocation4] sm:$0xff]
    %v1412 = vld [vmem:[#allocation4 + $0x8] sm:$0xff]
    %v1413 = vld [vmem:[#allocation4 + $0x10] sm:$0xff]
    %v1414 = vld [vmem:[#allocation4 + $0x18] sm:$0xff]
    %1419 = vrot.lane.b32.xlu0 %v1411, 32
    %v1420 = vpop.permute.xlu0 %1419
    %1421 = vrot.lane.b32.xlu0 %v1412, 32
    %v1422 = vpop.permute.xlu0 %1421
    %1423 = vrot.lane.b32.xlu0 %v1413, 32
    %v1424 = vpop.permute.xlu0 %1423
    %1425 = vrot.lane.b32.xlu0 %v1414, 32
    %v1426 = vpop.permute.xlu0 %1425
    %v1431 = vmul.f32 %v1400, %v1420
    %v1432 = vmul.f32 %v1402, %v1422
    %v1433 = vmul.f32 %v1404, %v1424
    %v1434 = vmul.f32 %v1406, %v1426
    %1439 = vrot.lane.b32.xlu0 %v1407, 32
    %v1440 = vpop.permute.xlu0 %1439
    %1441 = vrot.lane.b32.xlu0 %v1408, 32
    %v1442 = vpop.permute.xlu0 %1441
    %1443 = vrot.lane.b32.xlu0 %v1409, 32
    %v1444 = vpop.permute.xlu0 %1443
    %1445 = vrot.lane.b32.xlu0 %v1410, 32
    %v1446 = vpop.permute.xlu0 %1445
    %v1451 = vmul.f32 %v1400, %v1440
    %v1452 = vmul.f32 %v1402, %v1442
    %v1453 = vmul.f32 %v1404, %v1444
    %v1454 = vmul.f32 %v1406, %v1446
    %1459 = vrot.lane.b32.xlu0 %v1451, 32
    %v1460 = vpop.permute.xlu0 %1459
    %1461 = vrot.lane.b32.xlu0 %v1452, 32
    %v1462 = vpop.permute.xlu0 %1461
    %1463 = vrot.lane.b32.xlu0 %v1453, 32
    %v1464 = vpop.permute.xlu0 %1463
    %1465 = vrot.lane.b32.xlu0 %v1454, 32
    %v1466 = vpop.permute.xlu0 %1465
    %v1471 = vadd.f32 %v1431, %v1460
    %v1472 = vadd.f32 %v1432, %v1462
    %v1473 = vadd.f32 %v1433, %v1464
    %v1474 = vadd.f32 %v1434, %v1466
    %v1475 = vtanh.pop %v1471
    %v1476 = vtanh.pop %v1472
    %v1477 = vtanh.pop %v1473
    %v1478 = vtanh.pop %v1474
    %1483 = vrot.lane.b32.xlu0 %v1475, 32
    %v1484 = vpop.permute.xlu0 %1483
    %1485 = vrot.lane.b32.xlu0 %v1476, 32
    %v1486 = vpop.permute.xlu0 %1485
    %1487 = vrot.lane.b32.xlu0 %v1477, 32
    %v1488 = vpop.permute.xlu0 %1487
    %1489 = vrot.lane.b32.xlu0 %v1478, 32
    %v1490 = vpop.permute.xlu0 %1489
    %v1495 = vmul.f32 %v1400, %v1484
    %v1496 = vmul.f32 %v1402, %v1486
    %v1497 = vmul.f32 %v1404, %v1488
    %v1498 = vmul.f32 %v1406, %v1490
    %1503 = vrot.lane.b32.xlu0 %v1471, 96
    %v1504 = vpop.permute.xlu0 %1503
    %1505 = vrot.lane.b32.xlu0 %v1472, 96
    %v1506 = vpop.permute.xlu0 %1505
    %1507 = vrot.lane.b32.xlu0 %v1473, 96
    %v1508 = vpop.permute.xlu0 %1507
    %1509 = vrot.lane.b32.xlu0 %v1474, 96
    %v1510 = vpop.permute.xlu0 %1509
    %1515 = vst.msk [vmem:[#allocation4] sm:$0xff] %vm704, %v1504
    %1516 = vst.msk [vmem:[#allocation4 + $0x8] sm:$0xff] %vm704, %v1506
    %1517 = vst.msk [vmem:[#allocation4 + $0x10] sm:$0xff] %vm704, %v1508
    %1518 = vst.msk [vmem:[#allocation4 + $0x18] sm:$0xff] %vm704, %v1510
    %1521 = vrot.lane.b32.xlu0 %v1495, 64
    %v1522 = vpop.permute.xlu0 %1521
    %1523 = vrot.lane.b32.xlu0 %v1496, 64
    %v1524 = vpop.permute.xlu0 %1523
    %1527 = vst.msk [vmem:[#allocation3] sm:$0xff] %vm704, %v1522
    %1528 = vst.msk [vmem:[#allocation3 + $0x8] sm:$0xff] %vm704, %v1524
    %1531 = vrot.lane.b32.xlu0 %v1497, 96
    %v1532 = vpop.permute.xlu0 %1531
    %1533 = vrot.lane.b32.xlu0 %v1498, 96
    %v1534 = vpop.permute.xlu0 %1533
    %1537 = vst.msk [vmem:[#allocation3 + $0x10] sm:$0xff] %vm978, %v1532
    %1538 = vst.msk [vmem:[#allocation3 + $0x18] sm:$0xff] %vm978, %v1534
    %s1539 = smul.u32 %s1274, 16
    %s1540 = scalar_lea.vmem [#allocation5], %s1539
    %1541 = vst.msk [vmem:[%s1540] sm:$0xff] %vm704, %v1522
    %1542 = vst.msk [vmem:[%s1540 + $0x8] sm:$0xff] %vm704, %v1524
    %1543 = vrot.lane.b32.xlu0 %v1497, 64
    %v1544 = vpop.permute.xlu0 %1543
    %1545 = vrot.lane.b32.xlu0 %v1498, 64
    %v1546 = vpop.permute.xlu0 %1545
    %s1549 = smul.u32 %s1275, 16
    %s1550 = scalar_lea.vmem [#allocation6], %s1549
    %1551 = vst.msk [vmem:[%s1550] sm:$0xff] %vm704, %v1544
    %1552 = vst.msk [vmem:[%s1550 + $0x8] sm:$0xff] %vm704, %v1546
    %s1553 = sadd.s32 %s715, 3
    %s1554 = ssub.s32 4, %s715
    %v1555 = vld [vmem:[#allocation3] sm:$0xff]
    %v1556 = vld [vmem:[#allocation3 + $0x8] sm:$0xff]
    %v1557 = vld [vmem:[#allocation3 + $0x10] sm:$0xff]
    %v1558 = vld [vmem:[#allocation3 + $0x18] sm:$0xff]
    %v1559 = vpack.c.bf16 %v1556, %v1555
    %v1560 = vpack.c.bf16 %v1558, %v1557
    %v1561 = vld [vmem:[%s2] sm:$0xf]
    %v1562 = vld [vmem:[%s2 + $0x4] sm:$0xf]
    %v1563 = vld [vmem:[%s2 + $0x8] sm:$0xf]
    %v1564 = vld [vmem:[%s2 + $0xc] sm:$0xf]
    %v1565 = vld [vmem:[%s2 + $0x10] sm:$0xf]
    %v1566 = vld [vmem:[%s2 + $0x14] sm:$0xf]
    %v1567 = vld [vmem:[%s2 + $0x18] sm:$0xf]
    %v1568 = vld [vmem:[%s2 + $0x1c] sm:$0xf]
    %v1577 = vunpack.c.l.b16 %v1561
    %v1578 = vunpack.c.l.b16 %v1562
    %v1579 = vunpack.c.l.b16 %v1563
    %v1580 = vunpack.c.l.b16 %v1564
    %v1581 = vunpack.c.l.b16 %v1565
    %v1582 = vunpack.c.l.b16 %v1566
    %v1583 = vunpack.c.l.b16 %v1567
    %v1584 = vunpack.c.l.b16 %v1568
    %v1585 = vpack.c.b16 %v1578, %v1577
    %v1586 = vpack.c.b16 %v1580, %v1579
    %v1587 = vpack.c.b16 %v1582, %v1581
    %v1588 = vpack.c.b16 %v1584, %v1583
    %v1594 = vsel %vm699, %v1559, 0
    %v1597 = vsel %vm699, %v1560, 0
    %1599 = vmatprep.subr.bf16.mxu0 0
    %1600 = vmatpush1.bf16.msra.mxu0 %v1585
    %1601 = vmatprep.subr.bf16.mxu0 0
    %1602 = vmatpush1.bf16.msra.mxu0 %v1586
    %1603 = vmatprep.subr.bf16.mxu0 0
    %1604 = vmatpush1.bf16.msra.mxu0 %v1587
    %1605 = vmatprep.subr.bf16.mxu0 0
    %1606 = vmatpush1.bf16.msra.mxu0 %v1588
    %1607 = vmatprep.subr.bf16.mxu0 0
    %1608 = vmatpush1.bf16.msra.mxu0 0
    %1609 = vmatprep.subr.bf16.mxu0 0
    %1610 = vmatpush1.bf16.msra.mxu0 0
    %1611 = vmatprep.subr.bf16.mxu0 0
    %1612 = vmatpush1.bf16.msra.mxu0 0
    %1613 = vmatprep.subr.bf16.mxu0 0
    %1614 = vmatpush1.bf16.msra.mxu0 0
    %1615 = vmatprep.subr.bf16.mxu0 0
    %1616 = vmatpush1.bf16.msra.mxu0 0
    %1617 = vmatprep.subr.bf16.mxu0 0
    %1618 = vmatpush1.bf16.msra.mxu0 0
    %1619 = vmatprep.subr.bf16.mxu0 0
    %1620 = vmatpush1.bf16.msra.mxu0 0
    %1621 = vmatprep.subr.bf16.mxu0 0
    %1622 = vmatpush1.bf16.msra.mxu0 0
    %1623 = vmatprep.subr.bf16.mxu0 0
    %1624 = vmatpush1.bf16.msra.mxu0 0
    %1625 = vmatprep.subr.bf16.mxu0 0
    %1626 = vmatpush1.bf16.msra.mxu0 0
    %1627 = vmatprep.subr.bf16.mxu0 0
    %1628 = vmatpush1.bf16.msra.mxu0 0
    %1629 = vmatprep.subr.bf16.mxu0 0
    %1630 = vmatpush1.bf16.msra.mxu0 0
    %1631 = vmatprep.mubr.bf16.mxu0 0
    %1632 = vmatmul.mubr.bf16.gmra.mrb[0].mxu0 %v1594
    %v1633 = vpop.f32.mrb[0].mxu0
    %v1634 = vadd.f32 0.0, %v1633
    %v1635 = vpop.f32.mrb[0].mxu0
    %v1636 = vpop.f32.mrb[0].mxu0
    %v1637 = vadd.f32 0.0, %v1636
    %v1638 = vpop.f32.mrb[0].mxu0
    %1639 = vmatprep.mubr.bf16.mxu0 0
    %1640 = vmatmul.mubr.bf16.gmra.mrb[0].mxu0 %v1597
    %v1641 = vpop.f32.mrb[0].mxu0
    %v1642 = vadd.f32 0.0, %v1641
    %v1643 = vpop.f32.mrb[0].mxu0
    %v1644 = vpop.f32.mrb[0].mxu0
    %v1645 = vadd.f32 0.0, %v1644
    %v1646 = vpop.f32.mrb[0].mxu0
    %1647 = vdwg.mxu0
    %s1648 = smul.u32 %s1553, 4
    %s1649 = smul.addr %s1648, 8
    %s1650 = scalar_lea.vmem [#allocation2], %s1649
    %v1651 = vld [vmem:[%s1650] sm:$0xff]
    %v1652 = vld [vmem:[%s1650 + $0x10] sm:$0xff]
    %s1653 = smul.u32 %s1554, 4
    %s1654 = smul.addr %s1653, 8
    %s1655 = scalar_lea.vmem [#allocation2], %s1654
    %v1656 = vld [vmem:[%s1655 + $0x8] sm:$0xff]
    %v1657 = vld [vmem:[%s1655 + $0x18] sm:$0xff]
    %v1658 = vadd.f32 %v1651, %v1634
    %v1659 = vadd.f32 %v1652, %v1637
    %v1660 = vadd.f32 %v1656, %v1642
    %v1661 = vadd.f32 %v1657, %v1645
    %v1662 = vxor.u32 %v1658, 2147483648
    %v1663 = vxor.u32 %v1659, 2147483648
    %v1664 = vxor.u32 %v1660, 2147483648
    %v1665 = vxor.u32 %v1661, 2147483648
    %v1666 = vmul.f32 %v1662, 1.442695
    %v1667 = vpow.pop %v1666
    %v1668 = vmul.f32 %v1663, 1.442695
    %v1669 = vpow.pop %v1668
    %v1670 = vmul.f32 %v1664, 1.442695
    %v1671 = vpow.pop %v1670
    %v1672 = vmul.f32 %v1665, 1.442695
    %v1673 = vpow.pop %v1672
    %v1674 = vadd.f32 %v1667, 1.0
    %v1675 = vadd.f32 %v1669, 1.0
    %v1676 = vadd.f32 %v1671, 1.0
    %v1677 = vadd.f32 %v1673, 1.0
    %v1678 = vrcp.pop %v1674
    %v1679 = vmul.f32 1.0, %v1678
    %v1680 = vrcp.pop %v1675
    %v1681 = vmul.f32 1.0, %v1680
    %v1682 = vrcp.pop %v1676
    %v1683 = vmul.f32 1.0, %v1682
    %v1684 = vrcp.pop %v1677
    %v1685 = vmul.f32 1.0, %v1684
    %v1686 = vtanh.pop %v1658
    %v1687 = vtanh.pop %v1659
    %v1688 = vtanh.pop %v1660
    %v1689 = vtanh.pop %v1661
    %v1690 = vld [vmem:[#allocation4] sm:$0xff]
    %v1691 = vld [vmem:[#allocation4 + $0x8] sm:$0xff]
    %v1692 = vld [vmem:[#allocation4 + $0x10] sm:$0xff]
    %v1693 = vld [vmem:[#allocation4 + $0x18] sm:$0xff]
    %1698 = vrot.lane.b32.xlu0 %v1690, 32
    %v1699 = vpop.permute.xlu0 %1698
    %1700 = vrot.lane.b32.xlu0 %v1691, 32
    %v1701 = vpop.permute.xlu0 %1700
    %1702 = vrot.lane.b32.xlu0 %v1692, 32
    %v1703 = vpop.permute.xlu0 %1702
    %1704 = vrot.lane.b32.xlu0 %v1693, 32
    %v1705 = vpop.permute.xlu0 %1704
    %v1710 = vmul.f32 %v1679, %v1699
    %v1711 = vmul.f32 %v1681, %v1701
    %v1712 = vmul.f32 %v1683, %v1703
    %v1713 = vmul.f32 %v1685, %v1705
    %1718 = vrot.lane.b32.xlu0 %v1686, 32
    %v1719 = vpop.permute.xlu0 %1718
    %1720 = vrot.lane.b32.xlu0 %v1687, 32
    %v1721 = vpop.permute.xlu0 %1720
    %1722 = vrot.lane.b32.xlu0 %v1688, 32
    %v1723 = vpop.permute.xlu0 %1722
    %1724 = vrot.lane.b32.xlu0 %v1689, 32
    %v1725 = vpop.permute.xlu0 %1724
    %v1730 = vmul.f32 %v1679, %v1719
    %v1731 = vmul.f32 %v1681, %v1721
    %v1732 = vmul.f32 %v1683, %v1723
    %v1733 = vmul.f32 %v1685, %v1725
    %1738 = vrot.lane.b32.xlu0 %v1730, 32
    %v1739 = vpop.permute.xlu0 %1738
    %1740 = vrot.lane.b32.xlu0 %v1731, 32
    %v1741 = vpop.permute.xlu0 %1740
    %1742 = vrot.lane.b32.xlu0 %v1732, 32
    %v1743 = vpop.permute.xlu0 %1742
    %1744 = vrot.lane.b32.xlu0 %v1733, 32
    %v1745 = vpop.permute.xlu0 %1744
    %v1750 = vadd.f32 %v1710, %v1739
    %v1751 = vadd.f32 %v1711, %v1741
    %v1752 = vadd.f32 %v1712, %v1743
    %v1753 = vadd.f32 %v1713, %v1745
    %v1754 = vtanh.pop %v1750
    %v1755 = vtanh.pop %v1751
    %v1756 = vtanh.pop %v1752
    %v1757 = vtanh.pop %v1753
    %1762 = vrot.lane.b32.xlu0 %v1754, 32
    %v1763 = vpop.permute.xlu0 %1762
    %1764 = vrot.lane.b32.xlu0 %v1755, 32
    %v1765 = vpop.permute.xlu0 %1764
    %1766 = vrot.lane.b32.xlu0 %v1756, 32
    %v1767 = vpop.permute.xlu0 %1766
    %1768 = vrot.lane.b32.xlu0 %v1757, 32
    %v1769 = vpop.permute.xlu0 %1768
    %v1774 = vmul.f32 %v1679, %v1763
    %v1775 = vmul.f32 %v1681, %v1765
    %v1776 = vmul.f32 %v1683, %v1767
    %v1777 = vmul.f32 %v1685, %v1769
    %1782 = vrot.lane.b32.xlu0 %v1750, 96
    %v1783 = vpop.permute.xlu0 %1782
    %1784 = vrot.lane.b32.xlu0 %v1751, 96
    %v1785 = vpop.permute.xlu0 %1784
    %1786 = vrot.lane.b32.xlu0 %v1752, 96
    %v1787 = vpop.permute.xlu0 %1786
    %1788 = vrot.lane.b32.xlu0 %v1753, 96
    %v1789 = vpop.permute.xlu0 %1788
    %1794 = vst.msk [vmem:[#allocation4] sm:$0xff] %vm704, %v1783
    %1795 = vst.msk [vmem:[#allocation4 + $0x8] sm:$0xff] %vm704, %v1785
    %1796 = vst.msk [vmem:[#allocation4 + $0x10] sm:$0xff] %vm704, %v1787
    %1797 = vst.msk [vmem:[#allocation4 + $0x18] sm:$0xff] %vm704, %v1789
    %1800 = vrot.lane.b32.xlu0 %v1774, 64
    %v1801 = vpop.permute.xlu0 %1800
    %1802 = vrot.lane.b32.xlu0 %v1775, 64
    %v1803 = vpop.permute.xlu0 %1802
    %1806 = vst.msk [vmem:[#allocation3] sm:$0xff] %vm704, %v1801
    %1807 = vst.msk [vmem:[#allocation3 + $0x8] sm:$0xff] %vm704, %v1803
    %1810 = vrot.lane.b32.xlu0 %v1776, 96
    %v1811 = vpop.permute.xlu0 %1810
    %1812 = vrot.lane.b32.xlu0 %v1777, 96
    %v1813 = vpop.permute.xlu0 %1812
    %1816 = vst.msk [vmem:[#allocation3 + $0x10] sm:$0xff] %vm978, %v1811
    %1817 = vst.msk [vmem:[#allocation3 + $0x18] sm:$0xff] %vm978, %v1813
    %s1818 = smul.u32 %s1553, 16
    %s1819 = scalar_lea.vmem [#allocation5], %s1818
    %1820 = vst.msk [vmem:[%s1819] sm:$0xff] %vm704, %v1801
    %1821 = vst.msk [vmem:[%s1819 + $0x8] sm:$0xff] %vm704, %v1803
    %1822 = vrot.lane.b32.xlu0 %v1776, 64
    %v1823 = vpop.permute.xlu0 %1822
    %1824 = vrot.lane.b32.xlu0 %v1777, 64
    %v1825 = vpop.permute.xlu0 %1824
    %s1828 = smul.u32 %s1554, 16
    %s1829 = scalar_lea.vmem [#allocation6], %s1828
    %1830 = vst.msk [vmem:[%s1829] sm:$0xff] %vm704, %v1823
    %1831 = vst.msk [vmem:[%s1829 + $0x8] sm:$0xff] %vm704, %v1825
  $region54: #{brain_lstm_forward.1} parent=0 // loop_footer
    %s714 = sadd.s32 1, %s710
  $region55: #{brain_lstm_forward.1} parent=0 // loop_footer_branch
    %709 = sbr.rel target = $region51
  $region56: #{brain_lstm_forward.1} parent=0 // loop_exit
    _
  %v1832 = vld [vmem:[#allocation5] sm:$0xff]
  %v1833 = vld [vmem:[#allocation5 + $0x8] sm:$0xff]
  %v1834 = vld [vmem:[#allocation5 + $0x10] sm:$0xff]
  %v1835 = vld [vmem:[#allocation5 + $0x18] sm:$0xff]
  %v1836 = vld [vmem:[#allocation5 + $0x20] sm:$0xff]
  %v1837 = vld [vmem:[#allocation5 + $0x28] sm:$0xff]
  %v1838 = vld [vmem:[#allocation5 + $0x30] sm:$0xff]
  %v1839 = vld [vmem:[#allocation5 + $0x38] sm:$0xff]
  %v1840 = vld [vmem:[#allocation5 + $0x40] sm:$0xff]
  %v1841 = vld [vmem:[#allocation5 + $0x48] sm:$0xff]
  %v1842 = vld [vmem:[#allocation5 + $0x50] sm:$0xff]
  %v1843 = vld [vmem:[#allocation5 + $0x58] sm:$0xff]
  %v1844 = vld [vmem:[#allocation5 + $0x60] sm:$0xff]
  %v1845 = vld [vmem:[#allocation5 + $0x68] sm:$0xff]
  %v1846 = vld [vmem:[#allocation5 + $0x70] sm:$0xff]
  %v1847 = vld [vmem:[#allocation5 + $0x78] sm:$0xff]
  %v1848 = vpack.c.bf16 %v1833, %v1832
  %v1849 = vpack.c.bf16 %v1835, %v1834
  %v1850 = vpack.c.bf16 %v1837, %v1836
  %v1851 = vpack.c.bf16 %v1839, %v1838
  %v1852 = vpack.c.bf16 %v1841, %v1840
  %v1853 = vpack.c.bf16 %v1843, %v1842
  %v1854 = vpack.c.bf16 %v1845, %v1844
  %v1855 = vpack.c.bf16 %v1847, %v1846
  %v1856 = vld [vmem:[#allocation6] sm:$0xff]
  %v1857 = vld [vmem:[#allocation6 + $0x8] sm:$0xff]
  %v1858 = vld [vmem:[#allocation6 + $0x10] sm:$0xff]
  %v1859 = vld [vmem:[#allocation6 + $0x18] sm:$0xff]
  %v1860 = vld [vmem:[#allocation6 + $0x20] sm:$0xff]
  %v1861 = vld [vmem:[#allocation6 + $0x28] sm:$0xff]
  %v1862 = vld [vmem:[#allocation6 + $0x30] sm:$0xff]
  %v1863 = vld [vmem:[#allocation6 + $0x38] sm:$0xff]
  %v1864 = vld [vmem:[#allocation6 + $0x40] sm:$0xff]
  %v1865 = vld [vmem:[#allocation6 + $0x48] sm:$0xff]
  %v1866 = vld [vmem:[#allocation6 + $0x50] sm:$0xff]
  %v1867 = vld [vmem:[#allocation6 + $0x58] sm:$0xff]
  %v1868 = vld [vmem:[#allocation6 + $0x60] sm:$0xff]
  %v1869 = vld [vmem:[#allocation6 + $0x68] sm:$0xff]
  %v1870 = vld [vmem:[#allocation6 + $0x70] sm:$0xff]
  %v1871 = vld [vmem:[#allocation6 + $0x78] sm:$0xff]
  %v1872 = vpack.c.bf16 %v1857, %v1856
  %v1873 = vpack.c.bf16 %v1859, %v1858
  %v1874 = vpack.c.bf16 %v1861, %v1860
  %v1875 = vpack.c.bf16 %v1863, %v1862
  %v1876 = vpack.c.bf16 %v1865, %v1864
  %v1877 = vpack.c.bf16 %v1867, %v1866
  %v1878 = vpack.c.bf16 %v1869, %v1868
  %v1879 = vpack.c.bf16 %v1871, %v1870
  %v1880 = vld [vmem:[%s4] sm:$0xff]
  %v1881 = vld [vmem:[%s4 + $0x8] sm:$0xff]
  %v1882 = vld [vmem:[%s4 + $0x10] sm:$0xff]
  %v1883 = vld [vmem:[%s4 + $0x18] sm:$0xff]
  %v1884 = vld [vmem:[%s4 + $0x20] sm:$0xff]
  %v1885 = vld [vmem:[%s4 + $0x28] sm:$0xff]
  %v1886 = vld [vmem:[%s4 + $0x30] sm:$0xff]
  %v1887 = vld [vmem:[%s4 + $0x38] sm:$0xff]
  %v1892 = vunpack.c.l.b16 %v1884
  %v1893 = vunpack.c.h.b16 %v1884
  %v1894 = vunpack.c.l.b16 %v1885
  %v1895 = vunpack.c.h.b16 %v1885
  %v1896 = vunpack.c.l.b16 %v1886
  %v1897 = vunpack.c.h.b16 %v1886
  %v1898 = vunpack.c.l.b16 %v1887
  %v1899 = vunpack.c.h.b16 %v1887
  %v1900 = vpack.c.b16 %v1894, %v1892
  %v1901 = vpack.c.b16 %v1895, %v1893
  %v1902 = vpack.c.b16 %v1898, %v1896
  %v1903 = vpack.c.b16 %v1899, %v1897
  %v1909 = vsel %vm704, %v1872, 0
  %v1912 = vsel %vm704, %v1873, 0
  %v1915 = vsel %vm704, %v1874, 0
  %v1918 = vsel %vm704, %v1875, 0
  %v1921 = vsel %vm704, %v1876, 0
  %v1924 = vsel %vm704, %v1877, 0
  %v1927 = vsel %vm704, %v1878, 0
  %v1930 = vsel %vm704, %v1879, 0
  %1932 = vmatprep.subr.bf16.mxu0 %v1901
  %1933 = vmatpush1.bf16.msra.mxu0 %v1900
  %1934 = vmatprep.subr.bf16.mxu0 %v1903
  %1935 = vmatpush1.bf16.msra.mxu0 %v1902
  %1936 = vmatprep.subr.bf16.mxu0 0
  %1937 = vmatpush1.bf16.msra.mxu0 0
  %1938 = vmatprep.subr.bf16.mxu0 0
  %1939 = vmatpush1.bf16.msra.mxu0 0
  %1940 = vmatprep.subr.bf16.mxu0 0
  %1941 = vmatpush1.bf16.msra.mxu0 0
  %1942 = vmatprep.subr.bf16.mxu0 0
  %1943 = vmatpush1.bf16.msra.mxu0 0
  %1944 = vmatprep.subr.bf16.mxu0 0
  %1945 = vmatpush1.bf16.msra.mxu0 0
  %1946 = vmatprep.subr.bf16.mxu0 0
  %1947 = vmatpush1.bf16.msra.mxu0 0
  %1948 = vmatprep.subr.bf16.mxu0 0
  %1949 = vmatpush1.bf16.msra.mxu0 0
  %1950 = vmatprep.subr.bf16.mxu0 0
  %1951 = vmatpush1.bf16.msra.mxu0 0
  %1952 = vmatprep.subr.bf16.mxu0 0
  %1953 = vmatpush1.bf16.msra.mxu0 0
  %1954 = vmatprep.subr.bf16.mxu0 0
  %1955 = vmatpush1.bf16.msra.mxu0 0
  %1956 = vmatprep.subr.bf16.mxu0 0
  %1957 = vmatpush1.bf16.msra.mxu0 0
  %1958 = vmatprep.subr.bf16.mxu0 0
  %1959 = vmatpush1.bf16.msra.mxu0 0
  %1960 = vmatprep.subr.bf16.mxu0 0
  %1961 = vmatpush1.bf16.msra.mxu0 0
  %1962 = vmatprep.subr.bf16.mxu0 0
  %1963 = vmatpush1.bf16.msra.mxu0 0
  %1964 = vmatprep.mubr.bf16.mxu0 0
  %1965 = vmatmul.mubr.bf16.gmra.mrb[0].mxu0 %v1909
  %v1966 = vpop.f32.mrb[0].mxu0
  %v1967 = vadd.f32 0.0, %v1966
  %v1968 = vpop.f32.mrb[0].mxu0
  %v1969 = vadd.f32 0.0, %v1968
  %v1970 = vpop.f32.mrb[0].mxu0
  %v1971 = vadd.f32 0.0, %v1970
  %v1972 = vpop.f32.mrb[0].mxu0
  %v1973 = vadd.f32 0.0, %v1972
  %1974 = vmatprep.mubr.bf16.mxu0 0
  %1975 = vmatmul.mubr.bf16.gmra.mrb[0].mxu0 %v1912
  %v1976 = vpop.f32.mrb[0].mxu0
  %v1977 = vadd.f32 0.0, %v1976
  %v1978 = vpop.f32.mrb[0].mxu0
  %v1979 = vadd.f32 0.0, %v1978
  %v1980 = vpop.f32.mrb[0].mxu0
  %v1981 = vadd.f32 0.0, %v1980
  %v1982 = vpop.f32.mrb[0].mxu0
  %v1983 = vadd.f32 0.0, %v1982
  %1984 = vmatprep.mubr.bf16.mxu0 0
  %1985 = vmatmul.mubr.bf16.gmra.mrb[0].mxu0 %v1915
  %v1986 = vpop.f32.mrb[0].mxu0
  %v1987 = vadd.f32 0.0, %v1986
  %v1988 = vpop.f32.mrb[0].mxu0
  %v1989 = vadd.f32 0.0, %v1988
  %v1990 = vpop.f32.mrb[0].mxu0
  %v1991 = vadd.f32 0.0, %v1990
  %v1992 = vpop.f32.mrb[0].mxu0
  %v1993 = vadd.f32 0.0, %v1992
  %1994 = vmatprep.mubr.bf16.mxu0 0
  %1995 = vmatmul.mubr.bf16.gmra.mrb[0].mxu0 %v1918
  %v1996 = vpop.f32.mrb[0].mxu0
  %v1997 = vadd.f32 0.0, %v1996
  %v1998 = vpop.f32.mrb[0].mxu0
  %v1999 = vadd.f32 0.0, %v1998
  %v2000 = vpop.f32.mrb[0].mxu0
  %v2001 = vadd.f32 0.0, %v2000
  %v2002 = vpop.f32.mrb[0].mxu0
  %v2003 = vadd.f32 0.0, %v2002
  %2004 = vmatprep.mubr.bf16.mxu0 0
  %2005 = vmatmul.mubr.bf16.gmra.mrb[0].mxu0 %v1921
  %v2006 = vpop.f32.mrb[0].mxu0
  %v2007 = vadd.f32 0.0, %v2006
  %v2008 = vpop.f32.mrb[0].mxu0
  %v2009 = vadd.f32 0.0, %v2008
  %v2010 = vpop.f32.mrb[0].mxu0
  %v2011 = vadd.f32 0.0, %v2010
  %v2012 = vpop.f32.mrb[0].mxu0
  %v2013 = vadd.f32 0.0, %v2012
  %2014 = vmatprep.mubr.bf16.mxu0 0
  %2015 = vmatmul.mubr.bf16.gmra.mrb[0].mxu0 %v1924
  %v2016 = vpop.f32.mrb[0].mxu0
  %v2017 = vadd.f32 0.0, %v2016
  %v2018 = vpop.f32.mrb[0].mxu0
  %v2019 = vadd.f32 0.0, %v2018
  %v2020 = vpop.f32.mrb[0].mxu0
  %v2021 = vadd.f32 0.0, %v2020
  %v2022 = vpop.f32.mrb[0].mxu0
  %v2023 = vadd.f32 0.0, %v2022
  %2024 = vmatprep.mubr.bf16.mxu0 0
  %2025 = vmatmul.mubr.bf16.gmra.mrb[0].mxu0 %v1927
  %v2026 = vpop.f32.mrb[0].mxu0
  %v2027 = vadd.f32 0.0, %v2026
  %v2028 = vpop.f32.mrb[0].mxu0
  %v2029 = vadd.f32 0.0, %v2028
  %v2030 = vpop.f32.mrb[0].mxu0
  %v2031 = vadd.f32 0.0, %v2030
  %v2032 = vpop.f32.mrb[0].mxu0
  %v2033 = vadd.f32 0.0, %v2032
  %2034 = vmatprep.mubr.bf16.mxu0 0
  %2035 = vmatmul.mubr.bf16.gmra.mrb[0].mxu0 %v1930
  %v2036 = vpop.f32.mrb[0].mxu0
  %v2037 = vadd.f32 0.0, %v2036
  %v2038 = vpop.f32.mrb[0].mxu0
  %v2039 = vadd.f32 0.0, %v2038
  %v2040 = vpop.f32.mrb[0].mxu0
  %v2041 = vadd.f32 0.0, %v2040
  %v2042 = vpop.f32.mrb[0].mxu0
  %v2043 = vadd.f32 0.0, %v2042
  %2044 = vdwg.mxu0
  %v2049 = vunpack.c.l.b16 %v1880
  %v2050 = vunpack.c.h.b16 %v1880
  %v2051 = vunpack.c.l.b16 %v1881
  %v2052 = vunpack.c.h.b16 %v1881
  %v2053 = vunpack.c.l.b16 %v1882
  %v2054 = vunpack.c.h.b16 %v1882
  %v2055 = vunpack.c.l.b16 %v1883
  %v2056 = vunpack.c.h.b16 %v1883
  %v2057 = vpack.c.b16 %v2051, %v2049
  %v2058 = vpack.c.b16 %v2052, %v2050
  %v2059 = vpack.c.b16 %v2055, %v2053
  %v2060 = vpack.c.b16 %v2056, %v2054
  %v2066 = vsel %vm704, %v1848, 0
  %v2069 = vsel %vm704, %v1849, 0
  %v2072 = vsel %vm704, %v1850, 0
  %v2075 = vsel %vm704, %v1851, 0
  %v2078 = vsel %vm704, %v1852, 0
  %v2081 = vsel %vm704, %v1853, 0
  %v2084 = vsel %vm704, %v1854, 0
  %v2087 = vsel %vm704, %v1855, 0
  %2089 = vmatprep.subr.bf16.mxu0 %v2058
  %2090 = vmatpush1.bf16.msra.mxu0 %v2057
  %2091 = vmatprep.subr.bf16.mxu0 %v2060
  %2092 = vmatpush1.bf16.msra.mxu0 %v2059
  %2093 = vmatprep.subr.bf16.mxu0 0
  %2094 = vmatpush1.bf16.msra.mxu0 0
  %2095 = vmatprep.subr.bf16.mxu0 0
  %2096 = vmatpush1.bf16.msra.mxu0 0
  %2097 = vmatprep.subr.bf16.mxu0 0
  %2098 = vmatpush1.bf16.msra.mxu0 0
  %2099 = vmatprep.subr.bf16.mxu0 0
  %2100 = vmatpush1.bf16.msra.mxu0 0
  %2101 = vmatprep.subr.bf16.mxu0 0
  %2102 = vmatpush1.bf16.msra.mxu0 0
  %2103 = vmatprep.subr.bf16.mxu0 0
  %2104 = vmatpush1.bf16.msra.mxu0 0
  %2105 = vmatprep.subr.bf16.mxu0 0
  %2106 = vmatpush1.bf16.msra.mxu0 0
  %2107 = vmatprep.subr.bf16.mxu0 0
  %2108 = vmatpush1.bf16.msra.mxu0 0
  %2109 = vmatprep.subr.bf16.mxu0 0
  %2110 = vmatpush1.bf16.msra.mxu0 0
  %2111 = vmatprep.subr.bf16.mxu0 0
  %2112 = vmatpush1.bf16.msra.mxu0 0
  %2113 = vmatprep.subr.bf16.mxu0 0
  %2114 = vmatpush1.bf16.msra.mxu0 0
  %2115 = vmatprep.subr.bf16.mxu0 0
  %2116 = vmatpush1.bf16.msra.mxu0 0
  %2117 = vmatprep.subr.bf16.mxu0 0
  %2118 = vmatpush1.bf16.msra.mxu0 0
  %2119 = vmatprep.subr.bf16.mxu0 0
  %2120 = vmatpush1.bf16.msra.mxu0 0
  %2121 = vmatprep.mubr.bf16.mxu0 0
  %2122 = vmatmul.mubr.bf16.gmra.mrb[0].mxu0 %v2066
  %v2123 = vpop.f32.mrb[0].mxu0
  %v2124 = vadd.f32 %v1967, %v2123
  %v2125 = vpop.f32.mrb[0].mxu0
  %v2126 = vadd.f32 %v1969, %v2125
  %v2127 = vpop.f32.mrb[0].mxu0
  %v2128 = vadd.f32 %v1971, %v2127
  %v2129 = vpop.f32.mrb[0].mxu0
  %v2130 = vadd.f32 %v1973, %v2129
  %2131 = vmatprep.mubr.bf16.mxu0 0
  %2132 = vmatmul.mubr.bf16.gmra.mrb[0].mxu0 %v2069
  %v2133 = vpop.f32.mrb[0].mxu0
  %v2134 = vadd.f32 %v1977, %v2133
  %v2135 = vpop.f32.mrb[0].mxu0
  %v2136 = vadd.f32 %v1979, %v2135
  %v2137 = vpop.f32.mrb[0].mxu0
  %v2138 = vadd.f32 %v1981, %v2137
  %v2139 = vpop.f32.mrb[0].mxu0
  %v2140 = vadd.f32 %v1983, %v2139
  %2141 = vmatprep.mubr.bf16.mxu0 0
  %2142 = vmatmul.mubr.bf16.gmra.mrb[0].mxu0 %v2072
  %v2143 = vpop.f32.mrb[0].mxu0
  %v2144 = vadd.f32 %v1987, %v2143
  %v2145 = vpop.f32.mrb[0].mxu0
  %v2146 = vadd.f32 %v1989, %v2145
  %v2147 = vpop.f32.mrb[0].mxu0
  %v2148 = vadd.f32 %v1991, %v2147
  %v2149 = vpop.f32.mrb[0].mxu0
  %v2150 = vadd.f32 %v1993, %v2149
  %2151 = vmatprep.mubr.bf16.mxu0 0
  %2152 = vmatmul.mubr.bf16.gmra.mrb[0].mxu0 %v2075
  %v2153 = vpop.f32.mrb[0].mxu0
  %v2154 = vadd.f32 %v1997, %v2153
  %v2155 = vpop.f32.mrb[0].mxu0
  %v2156 = vadd.f32 %v1999, %v2155
  %v2157 = vpop.f32.mrb[0].mxu0
  %v2158 = vadd.f32 %v2001, %v2157
  %v2159 = vpop.f32.mrb[0].mxu0
  %v2160 = vadd.f32 %v2003, %v2159
  %2161 = vmatprep.mubr.bf16.mxu0 0
  %2162 = vmatmul.mubr.bf16.gmra.mrb[0].mxu0 %v2078
  %v2163 = vpop.f32.mrb[0].mxu0
  %v2164 = vadd.f32 %v2007, %v2163
  %v2165 = vpop.f32.mrb[0].mxu0
  %v2166 = vadd.f32 %v2009, %v2165
  %v2167 = vpop.f32.mrb[0].mxu0
  %v2168 = vadd.f32 %v2011, %v2167
  %v2169 = vpop.f32.mrb[0].mxu0
  %v2170 = vadd.f32 %v2013, %v2169
  %2171 = vmatprep.mubr.bf16.mxu0 0
  %2172 = vmatmul.mubr.bf16.gmra.mrb[0].mxu0 %v2081
  %v2173 = vpop.f32.mrb[0].mxu0
  %v2174 = vadd.f32 %v2017, %v2173
  %v2175 = vpop.f32.mrb[0].mxu0
  %v2176 = vadd.f32 %v2019, %v2175
  %v2177 = vpop.f32.mrb[0].mxu0
  %v2178 = vadd.f32 %v2021, %v2177
  %v2179 = vpop.f32.mrb[0].mxu0
  %v2180 = vadd.f32 %v2023, %v2179
  %2181 = vmatprep.mubr.bf16.mxu0 0
  %2182 = vmatmul.mubr.bf16.gmra.mrb[0].mxu0 %v2084
  %v2183 = vpop.f32.mrb[0].mxu0
  %v2184 = vadd.f32 %v2027, %v2183
  %v2185 = vpop.f32.mrb[0].mxu0
  %v2186 = vadd.f32 %v2029, %v2185
  %v2187 = vpop.f32.mrb[0].mxu0
  %v2188 = vadd.f32 %v2031, %v2187
  %v2189 = vpop.f32.mrb[0].mxu0
  %v2190 = vadd.f32 %v2033, %v2189
  %2191 = vmatprep.mubr.bf16.mxu0 0
  %2192 = vmatmul.mubr.bf16.gmra.mrb[0].mxu0 %v2087
  %v2193 = vpop.f32.mrb[0].mxu0
  %v2194 = vadd.f32 %v2037, %v2193
  %v2195 = vpop.f32.mrb[0].mxu0
  %v2196 = vadd.f32 %v2039, %v2195
  %v2197 = vpop.f32.mrb[0].mxu0
  %v2198 = vadd.f32 %v2041, %v2197
  %v2199 = vpop.f32.mrb[0].mxu0
  %v2200 = vadd.f32 %v2043, %v2199
  %2201 = vdwg.mxu0
  %v2202 = vld [vmem:[%s6] sm:$0x3]
  %v2204 = vlaneseq
  %v2205 = vshrl.u32 %v2204, 7
  %v2206 = vsub.s32 0, %v2205
  %v2207 = vrot.slane %v2202, %v2206
  %v2208 = vlaneseq
  %v2209 = vshrl.u32 %v2208, 7
  %v2210 = vsub.s32 1, %v2209
  %v2211 = vrot.slane %v2202, %v2210
  %v2214 = vadd.f32 %v2124, %v2207
  %v2215 = vadd.f32 %v2126, %v2211
  %v2216 = vadd.f32 %v2128, %v2207
  %v2217 = vadd.f32 %v2130, %v2211
  %v2218 = vadd.f32 %v2134, %v2207
  %v2219 = vadd.f32 %v2136, %v2211
  %v2220 = vadd.f32 %v2138, %v2207
  %v2221 = vadd.f32 %v2140, %v2211
  %v2222 = vadd.f32 %v2144, %v2207
  %v2223 = vadd.f32 %v2146, %v2211
  %v2224 = vadd.f32 %v2148, %v2207
  %v2225 = vadd.f32 %v2150, %v2211
  %v2226 = vadd.f32 %v2154, %v2207
  %v2227 = vadd.f32 %v2156, %v2211
  %v2228 = vadd.f32 %v2158, %v2207
  %v2229 = vadd.f32 %v2160, %v2211
  %v2230 = vadd.f32 %v2164, %v2207
  %v2231 = vadd.f32 %v2166, %v2211
  %v2232 = vadd.f32 %v2168, %v2207
  %v2233 = vadd.f32 %v2170, %v2211
  %v2234 = vadd.f32 %v2174, %v2207
  %v2235 = vadd.f32 %v2176, %v2211
  %v2236 = vadd.f32 %v2178, %v2207
  %v2237 = vadd.f32 %v2180, %v2211
  %v2238 = vadd.f32 %v2184, %v2207
  %v2239 = vadd.f32 %v2186, %v2211
  %v2240 = vadd.f32 %v2188, %v2207
  %v2241 = vadd.f32 %v2190, %v2211
  %v2242 = vadd.f32 %v2194, %v2207
  %v2243 = vadd.f32 %v2196, %v2211
  %v2244 = vadd.f32 %v2198, %v2207
  %v2245 = vadd.f32 %v2200, %v2211
  %2246 = vst [vmem:[#allocation2] sm:$0xff] %v2214
  %2247 = vst [vmem:[#allocation2 + $0x8] sm:$0xff] %v2215
  %2248 = vst [vmem:[#allocation2 + $0x10] sm:$0xff] %v2216
  %2249 = vst [vmem:[#allocation2 + $0x18] sm:$0xff] %v2217
  %2250 = vst [vmem:[#allocation2 + $0x20] sm:$0xff] %v2218
  %2251 = vst [vmem:[#allocation2 + $0x28] sm:$0xff] %v2219
  %2252 = vst [vmem:[#allocation2 + $0x30] sm:$0xff] %v2220
  %2253 = vst [vmem:[#allocation2 + $0x38] sm:$0xff] %v2221
  %2254 = vst [vmem:[#allocation2 + $0x40] sm:$0xff] %v2222
  %2255 = vst [vmem:[#allocation2 + $0x48] sm:$0xff] %v2223
  %2256 = vst [vmem:[#allocation2 + $0x50] sm:$0xff] %v2224
  %2257 = vst [vmem:[#allocation2 + $0x58] sm:$0xff] %v2225
  %2258 = vst [vmem:[#allocation2 + $0x60] sm:$0xff] %v2226
  %2259 = vst [vmem:[#allocation2 + $0x68] sm:$0xff] %v2227
  %2260 = vst [vmem:[#allocation2 + $0x70] sm:$0xff] %v2228
  %2261 = vst [vmem:[#allocation2 + $0x78] sm:$0xff] %v2229
  %2262 = vst [vmem:[#allocation2 + $0x80] sm:$0xff] %v2230
  %2263 = vst [vmem:[#allocation2 + $0x88] sm:$0xff] %v2231
  %2264 = vst [vmem:[#allocation2 + $0x90] sm:$0xff] %v2232
  %2265 = vst [vmem:[#allocation2 + $0x98] sm:$0xff] %v2233
  %2266 = vst [vmem:[#allocation2 + $0xa0] sm:$0xff] %v2234
  %2267 = vst [vmem:[#allocation2 + $0xa8] sm:$0xff] %v2235
  %2268 = vst [vmem:[#allocation2 + $0xb0] sm:$0xff] %v2236
  %2269 = vst [vmem:[#allocation2 + $0xb8] sm:$0xff] %v2237
  %2270 = vst [vmem:[#allocation2 + $0xc0] sm:$0xff] %v2238
  %2271 = vst [vmem:[#allocation2 + $0xc8] sm:$0xff] %v2239
  %2272 = vst [vmem:[#allocation2 + $0xd0] sm:$0xff] %v2240
  %2273 = vst [vmem:[#allocation2 + $0xd8] sm:$0xff] %v2241
  %2274 = vst [vmem:[#allocation2 + $0xe0] sm:$0xff] %v2242
  %2275 = vst [vmem:[#allocation2 + $0xe8] sm:$0xff] %v2243
  %2276 = vst [vmem:[#allocation2 + $0xf0] sm:$0xff] %v2244
  %2277 = vst [vmem:[#allocation2 + $0xf8] sm:$0xff] %v2245
  %2278 = vst.msk [vmem:[#allocation3] sm:$0xff] %vm699, 0.0
  %2279 = vst.msk [vmem:[#allocation3 + $0x8] sm:$0xff] %vm699, 0.0
  %2280 = vst.msk [vmem:[#allocation3 + $0x10] sm:$0xff] %vm699, 0.0
  %2281 = vst.msk [vmem:[#allocation3 + $0x18] sm:$0xff] %vm699, 0.0
  %2282 = vst.msk [vmem:[#allocation4] sm:$0xff] %vm704, 0.0
  %2283 = vst.msk [vmem:[#allocation4 + $0x8] sm:$0xff] %vm704, 0.0
  %2284 = vst.msk [vmem:[#allocation4 + $0x10] sm:$0xff] %vm704, 0.0
  %2285 = vst.msk [vmem:[#allocation4 + $0x18] sm:$0xff] %vm704, 0.0
  loop: start=0, step=1, limit=2
  $region57: #{brain_lstm_forward.1} parent=0 // loop_pre_header
    _
  $region58: #{brain_lstm_forward.1} parent=0 // loop_header
    %s2287 = sphi 0, %s2291
    %p2288 = scmp.ge.s32.totalorder %s2287, 2
  $region59: #{brain_lstm_forward.1} parent=0 // loop_header_branch
    %2290 = sbr.rel (%p2288) target = $region63
  $region60: #{brain_lstm_forward.1} parent=0 // loop_body
    %s2292 = smul.u32 %s2287, 4
    %s2293 = ssub.s32 7, %s2292
    %v2294 = vld [vmem:[#allocation3] sm:$0xff]
    %v2295 = vld [vmem:[#allocation3 + $0x8] sm:$0xff]
    %v2296 = vld [vmem:[#allocation3 + $0x10] sm:$0xff]
    %v2297 = vld [vmem:[#allocation3 + $0x18] sm:$0xff]
    %v2298 = vpack.c.bf16 %v2295, %v2294
    %v2299 = vpack.c.bf16 %v2297, %v2296
    %v2300 = vld [vmem:[%s5] sm:$0xf]
    %v2301 = vld [vmem:[%s5 + $0x4] sm:$0xf]
    %v2302 = vld [vmem:[%s5 + $0x8] sm:$0xf]
    %v2303 = vld [vmem:[%s5 + $0xc] sm:$0xf]
    %v2304 = vld [vmem:[%s5 + $0x10] sm:$0xf]
    %v2305 = vld [vmem:[%s5 + $0x14] sm:$0xf]
    %v2306 = vld [vmem:[%s5 + $0x18] sm:$0xf]
    %v2307 = vld [vmem:[%s5 + $0x1c] sm:$0xf]
    %v2316 = vunpack.c.l.b16 %v2300
    %v2317 = vunpack.c.l.b16 %v2301
    %v2318 = vunpack.c.l.b16 %v2302
    %v2319 = vunpack.c.l.b16 %v2303
    %v2320 = vunpack.c.l.b16 %v2304
    %v2321 = vunpack.c.l.b16 %v2305
    %v2322 = vunpack.c.l.b16 %v2306
    %v2323 = vunpack.c.l.b16 %v2307
    %v2324 = vpack.c.b16 %v2317, %v2316
    %v2325 = vpack.c.b16 %v2319, %v2318
    %v2326 = vpack.c.b16 %v2321, %v2320
    %v2327 = vpack.c.b16 %v2323, %v2322
    %v2333 = vsel %vm699, %v2298, 0
    %v2336 = vsel %vm699, %v2299, 0
    %2338 = vmatprep.subr.bf16.mxu0 0
    %2339 = vmatpush1.bf16.msra.mxu0 %v2324
    %2340 = vmatprep.subr.bf16.mxu0 0
    %2341 = vmatpush1.bf16.msra.mxu0 %v2325
    %2342 = vmatprep.subr.bf16.mxu0 0
    %2343 = vmatpush1.bf16.msra.mxu0 %v2326
    %2344 = vmatprep.subr.bf16.mxu0 0
    %2345 = vmatpush1.bf16.msra.mxu0 %v2327
    %2346 = vmatprep.subr.bf16.mxu0 0
    %2347 = vmatpush1.bf16.msra.mxu0 0
    %2348 = vmatprep.subr.bf16.mxu0 0
    %2349 = vmatpush1.bf16.msra.mxu0 0
    %2350 = vmatprep.subr.bf16.mxu0 0
    %2351 = vmatpush1.bf16.msra.mxu0 0
    %2352 = vmatprep.subr.bf16.mxu0 0
    %2353 = vmatpush1.bf16.msra.mxu0 0
    %2354 = vmatprep.subr.bf16.mxu0 0
    %2355 = vmatpush1.bf16.msra.mxu0 0
    %2356 = vmatprep.subr.bf16.mxu0 0
    %2357 = vmatpush1.bf16.msra.mxu0 0
    %2358 = vmatprep.subr.bf16.mxu0 0
    %2359 = vmatpush1.bf16.msra.mxu0 0
    %2360 = vmatprep.subr.bf16.mxu0 0
    %2361 = vmatpush1.bf16.msra.mxu0 0
    %2362 = vmatprep.subr.bf16.mxu0 0
    %2363 = vmatpush1.bf16.msra.mxu0 0
    %2364 = vmatprep.subr.bf16.mxu0 0
    %2365 = vmatpush1.bf16.msra.mxu0 0
    %2366 = vmatprep.subr.bf16.mxu0 0
    %2367 = vmatpush1.bf16.msra.mxu0 0
    %2368 = vmatprep.subr.bf16.mxu0 0
    %2369 = vmatpush1.bf16.msra.mxu0 0
    %2370 = vmatprep.mubr.bf16.mxu0 0
    %2371 = vmatmul.mubr.bf16.gmra.mrb[0].mxu0 %v2333
    %v2372 = vpop.f32.mrb[0].mxu0
    %v2373 = vadd.f32 0.0, %v2372
    %v2374 = vpop.f32.mrb[0].mxu0
    %v2375 = vpop.f32.mrb[0].mxu0
    %v2376 = vadd.f32 0.0, %v2375
    %v2377 = vpop.f32.mrb[0].mxu0
    %2378 = vmatprep.mubr.bf16.mxu0 0
    %2379 = vmatmul.mubr.bf16.gmra.mrb[0].mxu0 %v2336
    %v2380 = vpop.f32.mrb[0].mxu0
    %v2381 = vadd.f32 0.0, %v2380
    %v2382 = vpop.f32.mrb[0].mxu0
    %v2383 = vpop.f32.mrb[0].mxu0
    %v2384 = vadd.f32 0.0, %v2383
    %v2385 = vpop.f32.mrb[0].mxu0
    %2386 = vdwg.mxu0
    %s2387 = smul.u32 %s2292, 4
    %s2388 = smul.addr %s2387, 8
    %s2389 = scalar_lea.vmem [#allocation2], %s2388
    %v2390 = vld [vmem:[%s2389] sm:$0xff]
    %v2391 = vld [vmem:[%s2389 + $0x10] sm:$0xff]
    %s2392 = smul.u32 %s2293, 4
    %s2393 = smul.addr %s2392, 8
    %s2394 = scalar_lea.vmem [#allocation2], %s2393
    %v2395 = vld [vmem:[%s2394 + $0x8] sm:$0xff]
    %v2396 = vld [vmem:[%s2394 + $0x18] sm:$0xff]
    %v2397 = vadd.f32 %v2390, %v2373
    %v2398 = vadd.f32 %v2391, %v2376
    %v2399 = vadd.f32 %v2395, %v2381
    %v2400 = vadd.f32 %v2396, %v2384
    %v2401 = vxor.u32 %v2397, 2147483648
    %v2402 = vxor.u32 %v2398, 2147483648
    %v2403 = vxor.u32 %v2399, 2147483648
    %v2404 = vxor.u32 %v2400, 2147483648
    %v2405 = vmul.f32 %v2401, 1.442695
    %v2406 = vpow.pop %v2405
    %v2407 = vmul.f32 %v2402, 1.442695
    %v2408 = vpow.pop %v2407
    %v2409 = vmul.f32 %v2403, 1.442695
    %v2410 = vpow.pop %v2409
    %v2411 = vmul.f32 %v2404, 1.442695
    %v2412 = vpow.pop %v2411
    %v2413 = vadd.f32 %v2406, 1.0
    %v2414 = vadd.f32 %v2408, 1.0
    %v2415 = vadd.f32 %v2410, 1.0
    %v2416 = vadd.f32 %v2412, 1.0
    %v2417 = vrcp.pop %v2413
    %v2418 = vmul.f32 1.0, %v2417
    %v2419 = vrcp.pop %v2414
    %v2420 = vmul.f32 1.0, %v2419
    %v2421 = vrcp.pop %v2415
    %v2422 = vmul.f32 1.0, %v2421
    %v2423 = vrcp.pop %v2416
    %v2424 = vmul.f32 1.0, %v2423
    %v2425 = vtanh.pop %v2397
    %v2426 = vtanh.pop %v2398
    %v2427 = vtanh.pop %v2399
    %v2428 = vtanh.pop %v2400
    %v2429 = vld [vmem:[#allocation4] sm:$0xff]
    %v2430 = vld [vmem:[#allocation4 + $0x8] sm:$0xff]
    %v2431 = vld [vmem:[#allocation4 + $0x10] sm:$0xff]
    %v2432 = vld [vmem:[#allocation4 + $0x18] sm:$0xff]
    %2437 = vrot.lane.b32.xlu0 %v2429, 32
    %v2438 = vpop.permute.xlu0 %2437
    %2439 = vrot.lane.b32.xlu0 %v2430, 32
    %v2440 = vpop.permute.xlu0 %2439
    %2441 = vrot.lane.b32.xlu0 %v2431, 32
    %v2442 = vpop.permute.xlu0 %2441
    %2443 = vrot.lane.b32.xlu0 %v2432, 32
    %v2444 = vpop.permute.xlu0 %2443
    %v2449 = vmul.f32 %v2418, %v2438
    %v2450 = vmul.f32 %v2420, %v2440
    %v2451 = vmul.f32 %v2422, %v2442
    %v2452 = vmul.f32 %v2424, %v2444
    %2457 = vrot.lane.b32.xlu0 %v2425, 32
    %v2458 = vpop.permute.xlu0 %2457
    %2459 = vrot.lane.b32.xlu0 %v2426, 32
    %v2460 = vpop.permute.xlu0 %2459
    %2461 = vrot.lane.b32.xlu0 %v2427, 32
    %v2462 = vpop.permute.xlu0 %2461
    %2463 = vrot.lane.b32.xlu0 %v2428, 32
    %v2464 = vpop.permute.xlu0 %2463
    %v2469 = vmul.f32 %v2418, %v2458
    %v2470 = vmul.f32 %v2420, %v2460
    %v2471 = vmul.f32 %v2422, %v2462
    %v2472 = vmul.f32 %v2424, %v2464
    %2477 = vrot.lane.b32.xlu0 %v2469, 32
    %v2478 = vpop.permute.xlu0 %2477
    %2479 = vrot.lane.b32.xlu0 %v2470, 32
    %v2480 = vpop.permute.xlu0 %2479
    %2481 = vrot.lane.b32.xlu0 %v2471, 32
    %v2482 = vpop.permute.xlu0 %2481
    %2483 = vrot.lane.b32.xlu0 %v2472, 32
    %v2484 = vpop.permute.xlu0 %2483
    %v2489 = vadd.f32 %v2449, %v2478
    %v2490 = vadd.f32 %v2450, %v2480
    %v2491 = vadd.f32 %v2451, %v2482
    %v2492 = vadd.f32 %v2452, %v2484
    %v2493 = vtanh.pop %v2489
    %v2494 = vtanh.pop %v2490
    %v2495 = vtanh.pop %v2491
    %v2496 = vtanh.pop %v2492
    %2501 = vrot.lane.b32.xlu0 %v2493, 32
    %v2502 = vpop.permute.xlu0 %2501
    %2503 = vrot.lane.b32.xlu0 %v2494, 32
    %v2504 = vpop.permute.xlu0 %2503
    %2505 = vrot.lane.b32.xlu0 %v2495, 32
    %v2506 = vpop.permute.xlu0 %2505
    %2507 = vrot.lane.b32.xlu0 %v2496, 32
    %v2508 = vpop.permute.xlu0 %2507
    %v2513 = vmul.f32 %v2418, %v2502
    %v2514 = vmul.f32 %v2420, %v2504
    %v2515 = vmul.f32 %v2422, %v2506
    %v2516 = vmul.f32 %v2424, %v2508
    %2521 = vrot.lane.b32.xlu0 %v2489, 96
    %v2522 = vpop.permute.xlu0 %2521
    %2523 = vrot.lane.b32.xlu0 %v2490, 96
    %v2524 = vpop.permute.xlu0 %2523
    %2525 = vrot.lane.b32.xlu0 %v2491, 96
    %v2526 = vpop.permute.xlu0 %2525
    %2527 = vrot.lane.b32.xlu0 %v2492, 96
    %v2528 = vpop.permute.xlu0 %2527
    %2533 = vst.msk [vmem:[#allocation4] sm:$0xff] %vm704, %v2522
    %2534 = vst.msk [vmem:[#allocation4 + $0x8] sm:$0xff] %vm704, %v2524
    %2535 = vst.msk [vmem:[#allocation4 + $0x10] sm:$0xff] %vm704, %v2526
    %2536 = vst.msk [vmem:[#allocation4 + $0x18] sm:$0xff] %vm704, %v2528
    %2539 = vrot.lane.b32.xlu0 %v2513, 64
    %v2540 = vpop.permute.xlu0 %2539
    %2541 = vrot.lane.b32.xlu0 %v2514, 64
    %v2542 = vpop.permute.xlu0 %2541
    %2545 = vst.msk [vmem:[#allocation3] sm:$0xff] %vm704, %v2540
    %2546 = vst.msk [vmem:[#allocation3 + $0x8] sm:$0xff] %vm704, %v2542
    %2549 = vrot.lane.b32.xlu0 %v2515, 96
    %v2550 = vpop.permute.xlu0 %2549
    %2551 = vrot.lane.b32.xlu0 %v2516, 96
    %v2552 = vpop.permute.xlu0 %2551
    %vm2555 = vcmask 523520
    %2556 = vst.msk [vmem:[#allocation3 + $0x10] sm:$0xff] %vm2555, %v2550
    %2557 = vst.msk [vmem:[#allocation3 + $0x18] sm:$0xff] %vm2555, %v2552
    %s2558 = smul.u32 %s2292, 16
    %s2559 = scalar_lea.vmem [#allocation5], %s2558
    %2560 = vst.msk [vmem:[%s2559] sm:$0xff] %vm704, %v2540
    %2561 = vst.msk [vmem:[%s2559 + $0x8] sm:$0xff] %vm704, %v2542
    %2562 = vrot.lane.b32.xlu0 %v2515, 64
    %v2563 = vpop.permute.xlu0 %2562
    %2564 = vrot.lane.b32.xlu0 %v2516, 64
    %v2565 = vpop.permute.xlu0 %2564
    %s2568 = smul.u32 %s2293, 16
    %s2569 = scalar_lea.vmem [#allocation6], %s2568
    %2570 = vst.msk [vmem:[%s2569] sm:$0xff] %vm704, %v2563
    %2571 = vst.msk [vmem:[%s2569 + $0x8] sm:$0xff] %vm704, %v2565
    %s2572 = sadd.s32 %s2292, 1
    %s2573 = ssub.s32 6, %s2292
    %v2574 = vld [vmem:[#allocation3] sm:$0xff]
    %v2575 = vld [vmem:[#allocation3 + $0x8] sm:$0xff]
    %v2576 = vld [vmem:[#allocation3 + $0x10] sm:$0xff]
    %v2577 = vld [vmem:[#allocation3 + $0x18] sm:$0xff]
    %v2578 = vpack.c.bf16 %v2575, %v2574
    %v2579 = vpack.c.bf16 %v2577, %v2576
    %v2580 = vld [vmem:[%s5] sm:$0xf]
    %v2581 = vld [vmem:[%s5 + $0x4] sm:$0xf]
    %v2582 = vld [vmem:[%s5 + $0x8] sm:$0xf]
    %v2583 = vld [vmem:[%s5 + $0xc] sm:$0xf]
    %v2584 = vld [vmem:[%s5 + $0x10] sm:$0xf]
    %v2585 = vld [vmem:[%s5 + $0x14] sm:$0xf]
    %v2586 = vld [vmem:[%s5 + $0x18] sm:$0xf]
    %v2587 = vld [vmem:[%s5 + $0x1c] sm:$0xf]
    %v2596 = vunpack.c.l.b16 %v2580
    %v2597 = vunpack.c.l.b16 %v2581
    %v2598 = vunpack.c.l.b16 %v2582
    %v2599 = vunpack.c.l.b16 %v2583
    %v2600 = vunpack.c.l.b16 %v2584
    %v2601 = vunpack.c.l.b16 %v2585
    %v2602 = vunpack.c.l.b16 %v2586
    %v2603 = vunpack.c.l.b16 %v2587
    %v2604 = vpack.c.b16 %v2597, %v2596
    %v2605 = vpack.c.b16 %v2599, %v2598
    %v2606 = vpack.c.b16 %v2601, %v2600
    %v2607 = vpack.c.b16 %v2603, %v2602
    %v2613 = vsel %vm699, %v2578, 0
    %v2616 = vsel %vm699, %v2579, 0
    %2618 = vmatprep.subr.bf16.mxu0 0
    %2619 = vmatpush1.bf16.msra.mxu0 %v2604
    %2620 = vmatprep.subr.bf16.mxu0 0
    %2621 = vmatpush1.bf16.msra.mxu0 %v2605
    %2622 = vmatprep.subr.bf16.mxu0 0
    %2623 = vmatpush1.bf16.msra.mxu0 %v2606
    %2624 = vmatprep.subr.bf16.mxu0 0
    %2625 = vmatpush1.bf16.msra.mxu0 %v2607
    %2626 = vmatprep.subr.bf16.mxu0 0
    %2627 = vmatpush1.bf16.msra.mxu0 0
    %2628 = vmatprep.subr.bf16.mxu0 0
    %2629 = vmatpush1.bf16.msra.mxu0 0
    %2630 = vmatprep.subr.bf16.mxu0 0
    %2631 = vmatpush1.bf16.msra.mxu0 0
    %2632 = vmatprep.subr.bf16.mxu0 0
    %2633 = vmatpush1.bf16.msra.mxu0 0
    %2634 = vmatprep.subr.bf16.mxu0 0
    %2635 = vmatpush1.bf16.msra.mxu0 0
    %2636 = vmatprep.subr.bf16.mxu0 0
    %2637 = vmatpush1.bf16.msra.mxu0 0
    %2638 = vmatprep.subr.bf16.mxu0 0
    %2639 = vmatpush1.bf16.msra.mxu0 0
    %2640 = vmatprep.subr.bf16.mxu0 0
    %2641 = vmatpush1.bf16.msra.mxu0 0
    %2642 = vmatprep.subr.bf16.mxu0 0
    %2643 = vmatpush1.bf16.msra.mxu0 0
    %2644 = vmatprep.subr.bf16.mxu0 0
    %2645 = vmatpush1.bf16.msra.mxu0 0
    %2646 = vmatprep.subr.bf16.mxu0 0
    %2647 = vmatpush1.bf16.msra.mxu0 0
    %2648 = vmatprep.subr.bf16.mxu0 0
    %2649 = vmatpush1.bf16.msra.mxu0 0
    %2650 = vmatprep.mubr.bf16.mxu0 0
    %2651 = vmatmul.mubr.bf16.gmra.mrb[0].mxu0 %v2613
    %v2652 = vpop.f32.mrb[0].mxu0
    %v2653 = vadd.f32 0.0, %v2652
    %v2654 = vpop.f32.mrb[0].mxu0
    %v2655 = vpop.f32.mrb[0].mxu0
    %v2656 = vadd.f32 0.0, %v2655
    %v2657 = vpop.f32.mrb[0].mxu0
    %2658 = vmatprep.mubr.bf16.mxu0 0
    %2659 = vmatmul.mubr.bf16.gmra.mrb[0].mxu0 %v2616
    %v2660 = vpop.f32.mrb[0].mxu0
    %v2661 = vadd.f32 0.0, %v2660
    %v2662 = vpop.f32.mrb[0].mxu0
    %v2663 = vpop.f32.mrb[0].mxu0
    %v2664 = vadd.f32 0.0, %v2663
    %v2665 = vpop.f32.mrb[0].mxu0
    %2666 = vdwg.mxu0
    %s2667 = smul.u32 %s2572, 4
    %s2668 = smul.addr %s2667, 8
    %s2669 = scalar_lea.vmem [#allocation2], %s2668
    %v2670 = vld [vmem:[%s2669] sm:$0xff]
    %v2671 = vld [vmem:[%s2669 + $0x10] sm:$0xff]
    %s2672 = smul.u32 %s2573, 4
    %s2673 = smul.addr %s2672, 8
    %s2674 = scalar_lea.vmem [#allocation2], %s2673
    %v2675 = vld [vmem:[%s2674 + $0x8] sm:$0xff]
    %v2676 = vld [vmem:[%s2674 + $0x18] sm:$0xff]
    %v2677 = vadd.f32 %v2670, %v2653
    %v2678 = vadd.f32 %v2671, %v2656
    %v2679 = vadd.f32 %v2675, %v2661
    %v2680 = vadd.f32 %v2676, %v2664
    %v2681 = vxor.u32 %v2677, 2147483648
    %v2682 = vxor.u32 %v2678, 2147483648
    %v2683 = vxor.u32 %v2679, 2147483648
    %v2684 = vxor.u32 %v2680, 2147483648
    %v2685 = vmul.f32 %v2681, 1.442695
    %v2686 = vpow.pop %v2685
    %v2687 = vmul.f32 %v2682, 1.442695
    %v2688 = vpow.pop %v2687
    %v2689 = vmul.f32 %v2683, 1.442695
    %v2690 = vpow.pop %v2689
    %v2691 = vmul.f32 %v2684, 1.442695
    %v2692 = vpow.pop %v2691
    %v2693 = vadd.f32 %v2686, 1.0
    %v2694 = vadd.f32 %v2688, 1.0
    %v2695 = vadd.f32 %v2690, 1.0
    %v2696 = vadd.f32 %v2692, 1.0
    %v2697 = vrcp.pop %v2693
    %v2698 = vmul.f32 1.0, %v2697
    %v2699 = vrcp.pop %v2694
    %v2700 = vmul.f32 1.0, %v2699
    %v2701 = vrcp.pop %v2695
    %v2702 = vmul.f32 1.0, %v2701
    %v2703 = vrcp.pop %v2696
    %v2704 = vmul.f32 1.0, %v2703
    %v2705 = vtanh.pop %v2677
    %v2706 = vtanh.pop %v2678
    %v2707 = vtanh.pop %v2679
    %v2708 = vtanh.pop %v2680
    %v2709 = vld [vmem:[#allocation4] sm:$0xff]
    %v2710 = vld [vmem:[#allocation4 + $0x8] sm:$0xff]
    %v2711 = vld [vmem:[#allocation4 + $0x10] sm:$0xff]
    %v2712 = vld [vmem:[#allocation4 + $0x18] sm:$0xff]
    %2717 = vrot.lane.b32.xlu0 %v2709, 32
    %v2718 = vpop.permute.xlu0 %2717
    %2719 = vrot.lane.b32.xlu0 %v2710, 32
    %v2720 = vpop.permute.xlu0 %2719
    %2721 = vrot.lane.b32.xlu0 %v2711, 32
    %v2722 = vpop.permute.xlu0 %2721
    %2723 = vrot.lane.b32.xlu0 %v2712, 32
    %v2724 = vpop.permute.xlu0 %2723
    %v2729 = vmul.f32 %v2698, %v2718
    %v2730 = vmul.f32 %v2700, %v2720
    %v2731 = vmul.f32 %v2702, %v2722
    %v2732 = vmul.f32 %v2704, %v2724
    %2737 = vrot.lane.b32.xlu0 %v2705, 32
    %v2738 = vpop.permute.xlu0 %2737
    %2739 = vrot.lane.b32.xlu0 %v2706, 32
    %v2740 = vpop.permute.xlu0 %2739
    %2741 = vrot.lane.b32.xlu0 %v2707, 32
    %v2742 = vpop.permute.xlu0 %2741
    %2743 = vrot.lane.b32.xlu0 %v2708, 32
    %v2744 = vpop.permute.xlu0 %2743
    %v2749 = vmul.f32 %v2698, %v2738
    %v2750 = vmul.f32 %v2700, %v2740
    %v2751 = vmul.f32 %v2702, %v2742
    %v2752 = vmul.f32 %v2704, %v2744
    %2757 = vrot.lane.b32.xlu0 %v2749, 32
    %v2758 = vpop.permute.xlu0 %2757
    %2759 = vrot.lane.b32.xlu0 %v2750, 32
    %v2760 = vpop.permute.xlu0 %2759
    %2761 = vrot.lane.b32.xlu0 %v2751, 32
    %v2762 = vpop.permute.xlu0 %2761
    %2763 = vrot.lane.b32.xlu0 %v2752, 32
    %v2764 = vpop.permute.xlu0 %2763
    %v2769 = vadd.f32 %v2729, %v2758
    %v2770 = vadd.f32 %v2730, %v2760
    %v2771 = vadd.f32 %v2731, %v2762
    %v2772 = vadd.f32 %v2732, %v2764
    %v2773 = vtanh.pop %v2769
    %v2774 = vtanh.pop %v2770
    %v2775 = vtanh.pop %v2771
    %v2776 = vtanh.pop %v2772
    %2781 = vrot.lane.b32.xlu0 %v2773, 32
    %v2782 = vpop.permute.xlu0 %2781
    %2783 = vrot.lane.b32.xlu0 %v2774, 32
    %v2784 = vpop.permute.xlu0 %2783
    %2785 = vrot.lane.b32.xlu0 %v2775, 32
    %v2786 = vpop.permute.xlu0 %2785
    %2787 = vrot.lane.b32.xlu0 %v2776, 32
    %v2788 = vpop.permute.xlu0 %2787
    %v2793 = vmul.f32 %v2698, %v2782
    %v2794 = vmul.f32 %v2700, %v2784
    %v2795 = vmul.f32 %v2702, %v2786
    %v2796 = vmul.f32 %v2704, %v2788
    %2801 = vrot.lane.b32.xlu0 %v2769, 96
    %v2802 = vpop.permute.xlu0 %2801
    %2803 = vrot.lane.b32.xlu0 %v2770, 96
    %v2804 = vpop.permute.xlu0 %2803
    %2805 = vrot.lane.b32.xlu0 %v2771, 96
    %v2806 = vpop.permute.xlu0 %2805
    %2807 = vrot.lane.b32.xlu0 %v2772, 96
    %v2808 = vpop.permute.xlu0 %2807
    %2813 = vst.msk [vmem:[#allocation4] sm:$0xff] %vm704, %v2802
    %2814 = vst.msk [vmem:[#allocation4 + $0x8] sm:$0xff] %vm704, %v2804
    %2815 = vst.msk [vmem:[#allocation4 + $0x10] sm:$0xff] %vm704, %v2806
    %2816 = vst.msk [vmem:[#allocation4 + $0x18] sm:$0xff] %vm704, %v2808
    %2819 = vrot.lane.b32.xlu0 %v2793, 64
    %v2820 = vpop.permute.xlu0 %2819
    %2821 = vrot.lane.b32.xlu0 %v2794, 64
    %v2822 = vpop.permute.xlu0 %2821
    %2825 = vst.msk [vmem:[#allocation3] sm:$0xff] %vm704, %v2820
    %2826 = vst.msk [vmem:[#allocation3 + $0x8] sm:$0xff] %vm704, %v2822
    %2829 = vrot.lane.b32.xlu0 %v2795, 96
    %v2830 = vpop.permute.xlu0 %2829
    %2831 = vrot.lane.b32.xlu0 %v2796, 96
    %v2832 = vpop.permute.xlu0 %2831
    %2835 = vst.msk [vmem:[#allocation3 + $0x10] sm:$0xff] %vm2555, %v2830
    %2836 = vst.msk [vmem:[#allocation3 + $0x18] sm:$0xff] %vm2555, %v2832
    %s2837 = smul.u32 %s2572, 16
    %s2838 = scalar_lea.vmem [#allocation5], %s2837
    %2839 = vst.msk [vmem:[%s2838] sm:$0xff] %vm704, %v2820
    %2840 = vst.msk [vmem:[%s2838 + $0x8] sm:$0xff] %vm704, %v2822
    %2841 = vrot.lane.b32.xlu0 %v2795, 64
    %v2842 = vpop.permute.xlu0 %2841
    %2843 = vrot.lane.b32.xlu0 %v2796, 64
    %v2844 = vpop.permute.xlu0 %2843
    %s2847 = smul.u32 %s2573, 16
    %s2848 = scalar_lea.vmem [#allocation6], %s2847
    %2849 = vst.msk [vmem:[%s2848] sm:$0xff] %vm704, %v2842
    %2850 = vst.msk [vmem:[%s2848 + $0x8] sm:$0xff] %vm704, %v2844
    %s2851 = sadd.s32 %s2292, 2
    %s2852 = ssub.s32 5, %s2292
    %v2853 = vld [vmem:[#allocation3] sm:$0xff]
    %v2854 = vld [vmem:[#allocation3 + $0x8] sm:$0xff]
    %v2855 = vld [vmem:[#allocation3 + $0x10] sm:$0xff]
    %v2856 = vld [vmem:[#allocation3 + $0x18] sm:$0xff]
    %v2857 = vpack.c.bf16 %v2854, %v2853
    %v2858 = vpack.c.bf16 %v2856, %v2855
    %v2859 = vld [vmem:[%s5] sm:$0xf]
    %v2860 = vld [vmem:[%s5 + $0x4] sm:$0xf]
    %v2861 = vld [vmem:[%s5 + $0x8] sm:$0xf]
    %v2862 = vld [vmem:[%s5 + $0xc] sm:$0xf]
    %v2863 = vld [vmem:[%s5 + $0x10] sm:$0xf]
    %v2864 = vld [vmem:[%s5 + $0x14] sm:$0xf]
    %v2865 = vld [vmem:[%s5 + $0x18] sm:$0xf]
    %v2866 = vld [vmem:[%s5 + $0x1c] sm:$0xf]
    %v2875 = vunpack.c.l.b16 %v2859
    %v2876 = vunpack.c.l.b16 %v2860
    %v2877 = vunpack.c.l.b16 %v2861
    %v2878 = vunpack.c.l.b16 %v2862
    %v2879 = vunpack.c.l.b16 %v2863
    %v2880 = vunpack.c.l.b16 %v2864
    %v2881 = vunpack.c.l.b16 %v2865
    %v2882 = vunpack.c.l.b16 %v2866
    %v2883 = vpack.c.b16 %v2876, %v2875
    %v2884 = vpack.c.b16 %v2878, %v2877
    %v2885 = vpack.c.b16 %v2880, %v2879
    %v2886 = vpack.c.b16 %v2882, %v2881
    %v2892 = vsel %vm699, %v2857, 0
    %v2895 = vsel %vm699, %v2858, 0
    %2897 = vmatprep.subr.bf16.mxu0 0
    %2898 = vmatpush1.bf16.msra.mxu0 %v2883
    %2899 = vmatprep.subr.bf16.mxu0 0
    %2900 = vmatpush1.bf16.msra.mxu0 %v2884
    %2901 = vmatprep.subr.bf16.mxu0 0
    %2902 = vmatpush1.bf16.msra.mxu0 %v2885
    %2903 = vmatprep.subr.bf16.mxu0 0
    %2904 = vmatpush1.bf16.msra.mxu0 %v2886
    %2905 = vmatprep.subr.bf16.mxu0 0
    %2906 = vmatpush1.bf16.msra.mxu0 0
    %2907 = vmatprep.subr.bf16.mxu0 0
    %2908 = vmatpush1.bf16.msra.mxu0 0
    %2909 = vmatprep.subr.bf16.mxu0 0
    %2910 = vmatpush1.bf16.msra.mxu0 0
    %2911 = vmatprep.subr.bf16.mxu0 0
    %2912 = vmatpush1.bf16.msra.mxu0 0
    %2913 = vmatprep.subr.bf16.mxu0 0
    %2914 = vmatpush1.bf16.msra.mxu0 0
    %2915 = vmatprep.subr.bf16.mxu0 0
    %2916 = vmatpush1.bf16.msra.mxu0 0
    %2917 = vmatprep.subr.bf16.mxu0 0
    %2918 = vmatpush1.bf16.msra.mxu0 0
    %2919 = vmatprep.subr.bf16.mxu0 0
    %2920 = vmatpush1.bf16.msra.mxu0 0
    %2921 = vmatprep.subr.bf16.mxu0 0
    %2922 = vmatpush1.bf16.msra.mxu0 0
    %2923 = vmatprep.subr.bf16.mxu0 0
    %2924 = vmatpush1.bf16.msra.mxu0 0
    %2925 = vmatprep.subr.bf16.mxu0 0
    %2926 = vmatpush1.bf16.msra.mxu0 0
    %2927 = vmatprep.subr.bf16.mxu0 0
    %2928 = vmatpush1.bf16.msra.mxu0 0
    %2929 = vmatprep.mubr.bf16.mxu0 0
    %2930 = vmatmul.mubr.bf16.gmra.mrb[0].mxu0 %v2892
    %v2931 = vpop.f32.mrb[0].mxu0
    %v2932 = vadd.f32 0.0, %v2931
    %v2933 = vpop.f32.mrb[0].mxu0
    %v2934 = vpop.f32.mrb[0].mxu0
    %v2935 = vadd.f32 0.0, %v2934
    %v2936 = vpop.f32.mrb[0].mxu0
    %2937 = vmatprep.mubr.bf16.mxu0 0
    %2938 = vmatmul.mubr.bf16.gmra.mrb[0].mxu0 %v2895
    %v2939 = vpop.f32.mrb[0].mxu0
    %v2940 = vadd.f32 0.0, %v2939
    %v2941 = vpop.f32.mrb[0].mxu0
    %v2942 = vpop.f32.mrb[0].mxu0
    %v2943 = vadd.f32 0.0, %v2942
    %v2944 = vpop.f32.mrb[0].mxu0
    %2945 = vdwg.mxu0
    %s2946 = smul.u32 %s2851, 4
    %s2947 = smul.addr %s2946, 8
    %s2948 = scalar_lea.vmem [#allocation2], %s2947
    %v2949 = vld [vmem:[%s2948] sm:$0xff]
    %v2950 = vld [vmem:[%s2948 + $0x10] sm:$0xff]
    %s2951 = smul.u32 %s2852, 4
    %s2952 = smul.addr %s2951, 8
    %s2953 = scalar_lea.vmem [#allocation2], %s2952
    %v2954 = vld [vmem:[%s2953 + $0x8] sm:$0xff]
    %v2955 = vld [vmem:[%s2953 + $0x18] sm:$0xff]
    %v2956 = vadd.f32 %v2949, %v2932
    %v2957 = vadd.f32 %v2950, %v2935
    %v2958 = vadd.f32 %v2954, %v2940
    %v2959 = vadd.f32 %v2955, %v2943
    %v2960 = vxor.u32 %v2956, 2147483648
    %v2961 = vxor.u32 %v2957, 2147483648
    %v2962 = vxor.u32 %v2958, 2147483648
    %v2963 = vxor.u32 %v2959, 2147483648
    %v2964 = vmul.f32 %v2960, 1.442695
    %v2965 = vpow.pop %v2964
    %v2966 = vmul.f32 %v2961, 1.442695
    %v2967 = vpow.pop %v2966
    %v2968 = vmul.f32 %v2962, 1.442695
    %v2969 = vpow.pop %v2968
    %v2970 = vmul.f32 %v2963, 1.442695
    %v2971 = vpow.pop %v2970
    %v2972 = vadd.f32 %v2965, 1.0
    %v2973 = vadd.f32 %v2967, 1.0
    %v2974 = vadd.f32 %v2969, 1.0
    %v2975 = vadd.f32 %v2971, 1.0
    %v2976 = vrcp.pop %v2972
    %v2977 = vmul.f32 1.0, %v2976
    %v2978 = vrcp.pop %v2973
    %v2979 = vmul.f32 1.0, %v2978
    %v2980 = vrcp.pop %v2974
    %v2981 = vmul.f32 1.0, %v2980
    %v2982 = vrcp.pop %v2975
    %v2983 = vmul.f32 1.0, %v2982
    %v2984 = vtanh.pop %v2956
    %v2985 = vtanh.pop %v2957
    %v2986 = vtanh.pop %v2958
    %v2987 = vtanh.pop %v2959
    %v2988 = vld [vmem:[#allocation4] sm:$0xff]
    %v2989 = vld [vmem:[#allocation4 + $0x8] sm:$0xff]
    %v2990 = vld [vmem:[#allocation4 + $0x10] sm:$0xff]
    %v2991 = vld [vmem:[#allocation4 + $0x18] sm:$0xff]
    %2996 = vrot.lane.b32.xlu0 %v2988, 32
    %v2997 = vpop.permute.xlu0 %2996
    %2998 = vrot.lane.b32.xlu0 %v2989, 32
    %v2999 = vpop.permute.xlu0 %2998
    %3000 = vrot.lane.b32.xlu0 %v2990, 32
    %v3001 = vpop.permute.xlu0 %3000
    %3002 = vrot.lane.b32.xlu0 %v2991, 32
    %v3003 = vpop.permute.xlu0 %3002
    %v3008 = vmul.f32 %v2977, %v2997
    %v3009 = vmul.f32 %v2979, %v2999
    %v3010 = vmul.f32 %v2981, %v3001
    %v3011 = vmul.f32 %v2983, %v3003
    %3016 = vrot.lane.b32.xlu0 %v2984, 32
    %v3017 = vpop.permute.xlu0 %3016
    %3018 = vrot.lane.b32.xlu0 %v2985, 32
    %v3019 = vpop.permute.xlu0 %3018
    %3020 = vrot.lane.b32.xlu0 %v2986, 32
    %v3021 = vpop.permute.xlu0 %3020
    %3022 = vrot.lane.b32.xlu0 %v2987, 32
    %v3023 = vpop.permute.xlu0 %3022
    %v3028 = vmul.f32 %v2977, %v3017
    %v3029 = vmul.f32 %v2979, %v3019
    %v3030 = vmul.f32 %v2981, %v3021
    %v3031 = vmul.f32 %v2983, %v3023
    %3036 = vrot.lane.b32.xlu0 %v3028, 32
    %v3037 = vpop.permute.xlu0 %3036
    %3038 = vrot.lane.b32.xlu0 %v3029, 32
    %v3039 = vpop.permute.xlu0 %3038
    %3040 = vrot.lane.b32.xlu0 %v3030, 32
    %v3041 = vpop.permute.xlu0 %3040
    %3042 = vrot.lane.b32.xlu0 %v3031, 32
    %v3043 = vpop.permute.xlu0 %3042
    %v3048 = vadd.f32 %v3008, %v3037
    %v3049 = vadd.f32 %v3009, %v3039
    %v3050 = vadd.f32 %v3010, %v3041
    %v3051 = vadd.f32 %v3011, %v3043
    %v3052 = vtanh.pop %v3048
    %v3053 = vtanh.pop %v3049
    %v3054 = vtanh.pop %v3050
    %v3055 = vtanh.pop %v3051
    %3060 = vrot.lane.b32.xlu0 %v3052, 32
    %v3061 = vpop.permute.xlu0 %3060
    %3062 = vrot.lane.b32.xlu0 %v3053, 32
    %v3063 = vpop.permute.xlu0 %3062
    %3064 = vrot.lane.b32.xlu0 %v3054, 32
    %v3065 = vpop.permute.xlu0 %3064
    %3066 = vrot.lane.b32.xlu0 %v3055, 32
    %v3067 = vpop.permute.xlu0 %3066
    %v3072 = vmul.f32 %v2977, %v3061
    %v3073 = vmul.f32 %v2979, %v3063
    %v3074 = vmul.f32 %v2981, %v3065
    %v3075 = vmul.f32 %v2983, %v3067
    %3080 = vrot.lane.b32.xlu0 %v3048, 96
    %v3081 = vpop.permute.xlu0 %3080
    %3082 = vrot.lane.b32.xlu0 %v3049, 96
    %v3083 = vpop.permute.xlu0 %3082
    %3084 = vrot.lane.b32.xlu0 %v3050, 96
    %v3085 = vpop.permute.xlu0 %3084
    %3086 = vrot.lane.b32.xlu0 %v3051, 96
    %v3087 = vpop.permute.xlu0 %3086
    %3092 = vst.msk [vmem:[#allocation4] sm:$0xff] %vm704, %v3081
    %3093 = vst.msk [vmem:[#allocation4 + $0x8] sm:$0xff] %vm704, %v3083
    %3094 = vst.msk [vmem:[#allocation4 + $0x10] sm:$0xff] %vm704, %v3085
    %3095 = vst.msk [vmem:[#allocation4 + $0x18] sm:$0xff] %vm704, %v3087
    %3098 = vrot.lane.b32.xlu0 %v3072, 64
    %v3099 = vpop.permute.xlu0 %3098
    %3100 = vrot.lane.b32.xlu0 %v3073, 64
    %v3101 = vpop.permute.xlu0 %3100
    %3104 = vst.msk [vmem:[#allocation3] sm:$0xff] %vm704, %v3099
    %3105 = vst.msk [vmem:[#allocation3 + $0x8] sm:$0xff] %vm704, %v3101
    %3108 = vrot.lane.b32.xlu0 %v3074, 96
    %v3109 = vpop.permute.xlu0 %3108
    %3110 = vrot.lane.b32.xlu0 %v3075, 96
    %v3111 = vpop.permute.xlu0 %3110
    %3114 = vst.msk [vmem:[#allocation3 + $0x10] sm:$0xff] %vm2555, %v3109
    %3115 = vst.msk [vmem:[#allocation3 + $0x18] sm:$0xff] %vm2555, %v3111
    %s3116 = smul.u32 %s2851, 16
    %s3117 = scalar_lea.vmem [#allocation5], %s3116
    %3118 = vst.msk [vmem:[%s3117] sm:$0xff] %vm704, %v3099
    %3119 = vst.msk [vmem:[%s3117 + $0x8] sm:$0xff] %vm704, %v3101
    %3120 = vrot.lane.b32.xlu0 %v3074, 64
    %v3121 = vpop.permute.xlu0 %3120
    %3122 = vrot.lane.b32.xlu0 %v3075, 64
    %v3123 = vpop.permute.xlu0 %3122
    %s3126 = smul.u32 %s2852, 16
    %s3127 = scalar_lea.vmem [#allocation6], %s3126
    %3128 = vst.msk [vmem:[%s3127] sm:$0xff] %vm704, %v3121
    %3129 = vst.msk [vmem:[%s3127 + $0x8] sm:$0xff] %vm704, %v3123
    %s3130 = sadd.s32 %s2292, 3
    %s3131 = ssub.s32 4, %s2292
    %v3132 = vld [vmem:[#allocation3] sm:$0xff]
    %v3133 = vld [vmem:[#allocation3 + $0x8] sm:$0xff]
    %v3134 = vld [vmem:[#allocation3 + $0x10] sm:$0xff]
    %v3135 = vld [vmem:[#allocation3 + $0x18] sm:$0xff]
    %v3136 = vpack.c.bf16 %v3133, %v3132
    %v3137 = vpack.c.bf16 %v3135, %v3134
    %v3138 = vld [vmem:[%s5] sm:$0xf]
    %v3139 = vld [vmem:[%s5 + $0x4] sm:$0xf]
    %v3140 = vld [vmem:[%s5 + $0x8] sm:$0xf]
    %v3141 = vld [vmem:[%s5 + $0xc] sm:$0xf]
    %v3142 = vld [vmem:[%s5 + $0x10] sm:$0xf]
    %v3143 = vld [vmem:[%s5 + $0x14] sm:$0xf]
    %v3144 = vld [vmem:[%s5 + $0x18] sm:$0xf]
    %v3145 = vld [vmem:[%s5 + $0x1c] sm:$0xf]
    %v3154 = vunpack.c.l.b16 %v3138
    %v3155 = vunpack.c.l.b16 %v3139
    %v3156 = vunpack.c.l.b16 %v3140
    %v3157 = vunpack.c.l.b16 %v3141
    %v3158 = vunpack.c.l.b16 %v3142
    %v3159 = vunpack.c.l.b16 %v3143
    %v3160 = vunpack.c.l.b16 %v3144
    %v3161 = vunpack.c.l.b16 %v3145
    %v3162 = vpack.c.b16 %v3155, %v3154
    %v3163 = vpack.c.b16 %v3157, %v3156
    %v3164 = vpack.c.b16 %v3159, %v3158
    %v3165 = vpack.c.b16 %v3161, %v3160
    %v3171 = vsel %vm699, %v3136, 0
    %v3174 = vsel %vm699, %v3137, 0
    %3176 = vmatprep.subr.bf16.mxu0 0
    %3177 = vmatpush1.bf16.msra.mxu0 %v3162
    %3178 = vmatprep.subr.bf16.mxu0 0
    %3179 = vmatpush1.bf16.msra.mxu0 %v3163
    %3180 = vmatprep.subr.bf16.mxu0 0
    %3181 = vmatpush1.bf16.msra.mxu0 %v3164
    %3182 = vmatprep.subr.bf16.mxu0 0
    %3183 = vmatpush1.bf16.msra.mxu0 %v3165
    %3184 = vmatprep.subr.bf16.mxu0 0
    %3185 = vmatpush1.bf16.msra.mxu0 0
    %3186 = vmatprep.subr.bf16.mxu0 0
    %3187 = vmatpush1.bf16.msra.mxu0 0
    %3188 = vmatprep.subr.bf16.mxu0 0
    %3189 = vmatpush1.bf16.msra.mxu0 0
    %3190 = vmatprep.subr.bf16.mxu0 0
    %3191 = vmatpush1.bf16.msra.mxu0 0
    %3192 = vmatprep.subr.bf16.mxu0 0
    %3193 = vmatpush1.bf16.msra.mxu0 0
    %3194 = vmatprep.subr.bf16.mxu0 0
    %3195 = vmatpush1.bf16.msra.mxu0 0
    %3196 = vmatprep.subr.bf16.mxu0 0
    %3197 = vmatpush1.bf16.msra.mxu0 0
    %3198 = vmatprep.subr.bf16.mxu0 0
    %3199 = vmatpush1.bf16.msra.mxu0 0
    %3200 = vmatprep.subr.bf16.mxu0 0
    %3201 = vmatpush1.bf16.msra.mxu0 0
    %3202 = vmatprep.subr.bf16.mxu0 0
    %3203 = vmatpush1.bf16.msra.mxu0 0
    %3204 = vmatprep.subr.bf16.mxu0 0
    %3205 = vmatpush1.bf16.msra.mxu0 0
    %3206 = vmatprep.subr.bf16.mxu0 0
    %3207 = vmatpush1.bf16.msra.mxu0 0
    %3208 = vmatprep.mubr.bf16.mxu0 0
    %3209 = vmatmul.mubr.bf16.gmra.mrb[0].mxu0 %v3171
    %v3210 = vpop.f32.mrb[0].mxu0
    %v3211 = vadd.f32 0.0, %v3210
    %v3212 = vpop.f32.mrb[0].mxu0
    %v3213 = vpop.f32.mrb[0].mxu0
    %v3214 = vadd.f32 0.0, %v3213
    %v3215 = vpop.f32.mrb[0].mxu0
    %3216 = vmatprep.mubr.bf16.mxu0 0
    %3217 = vmatmul.mubr.bf16.gmra.mrb[0].mxu0 %v3174
    %v3218 = vpop.f32.mrb[0].mxu0
    %v3219 = vadd.f32 0.0, %v3218
    %v3220 = vpop.f32.mrb[0].mxu0
    %v3221 = vpop.f32.mrb[0].mxu0
    %v3222 = vadd.f32 0.0, %v3221
    %v3223 = vpop.f32.mrb[0].mxu0
    %3224 = vdwg.mxu0
    %s3225 = smul.u32 %s3130, 4
    %s3226 = smul.addr %s3225, 8
    %s3227 = scalar_lea.vmem [#allocation2], %s3226
    %v3228 = vld [vmem:[%s3227] sm:$0xff]
    %v3229 = vld [vmem:[%s3227 + $0x10] sm:$0xff]
    %s3230 = smul.u32 %s3131, 4
    %s3231 = smul.addr %s3230, 8
    %s3232 = scalar_lea.vmem [#allocation2], %s3231
    %v3233 = vld [vmem:[%s3232 + $0x8] sm:$0xff]
    %v3234 = vld [vmem:[%s3232 + $0x18] sm:$0xff]
    %v3235 = vadd.f32 %v3228, %v3211
    %v3236 = vadd.f32 %v3229, %v3214
    %v3237 = vadd.f32 %v3233, %v3219
    %v3238 = vadd.f32 %v3234, %v3222
    %v3239 = vxor.u32 %v3235, 2147483648
    %v3240 = vxor.u32 %v3236, 2147483648
    %v3241 = vxor.u32 %v3237, 2147483648
    %v3242 = vxor.u32 %v3238, 2147483648
    %v3243 = vmul.f32 %v3239, 1.442695
    %v3244 = vpow.pop %v3243
    %v3245 = vmul.f32 %v3240, 1.442695
    %v3246 = vpow.pop %v3245
    %v3247 = vmul.f32 %v3241, 1.442695
    %v3248 = vpow.pop %v3247
    %v3249 = vmul.f32 %v3242, 1.442695
    %v3250 = vpow.pop %v3249
    %v3251 = vadd.f32 %v3244, 1.0
    %v3252 = vadd.f32 %v3246, 1.0
    %v3253 = vadd.f32 %v3248, 1.0
    %v3254 = vadd.f32 %v3250, 1.0
    %v3255 = vrcp.pop %v3251
    %v3256 = vmul.f32 1.0, %v3255
    %v3257 = vrcp.pop %v3252
    %v3258 = vmul.f32 1.0, %v3257
    %v3259 = vrcp.pop %v3253
    %v3260 = vmul.f32 1.0, %v3259
    %v3261 = vrcp.pop %v3254
    %v3262 = vmul.f32 1.0, %v3261
    %v3263 = vtanh.pop %v3235
    %v3264 = vtanh.pop %v3236
    %v3265 = vtanh.pop %v3237
    %v3266 = vtanh.pop %v3238
    %v3267 = vld [vmem:[#allocation4] sm:$0xff]
    %v3268 = vld [vmem:[#allocation4 + $0x8] sm:$0xff]
    %v3269 = vld [vmem:[#allocation4 + $0x10] sm:$0xff]
    %v3270 = vld [vmem:[#allocation4 + $0x18] sm:$0xff]
    %3275 = vrot.lane.b32.xlu0 %v3267, 32
    %v3276 = vpop.permute.xlu0 %3275
    %3277 = vrot.lane.b32.xlu0 %v3268, 32
    %v3278 = vpop.permute.xlu0 %3277
    %3279 = vrot.lane.b32.xlu0 %v3269, 32
    %v3280 = vpop.permute.xlu0 %3279
    %3281 = vrot.lane.b32.xlu0 %v3270, 32
    %v3282 = vpop.permute.xlu0 %3281
    %v3287 = vmul.f32 %v3256, %v3276
    %v3288 = vmul.f32 %v3258, %v3278
    %v3289 = vmul.f32 %v3260, %v3280
    %v3290 = vmul.f32 %v3262, %v3282
    %3295 = vrot.lane.b32.xlu0 %v3263, 32
    %v3296 = vpop.permute.xlu0 %3295
    %3297 = vrot.lane.b32.xlu0 %v3264, 32
    %v3298 = vpop.permute.xlu0 %3297
    %3299 = vrot.lane.b32.xlu0 %v3265, 32
    %v3300 = vpop.permute.xlu0 %3299
    %3301 = vrot.lane.b32.xlu0 %v3266, 32
    %v3302 = vpop.permute.xlu0 %3301
    %v3307 = vmul.f32 %v3256, %v3296
    %v3308 = vmul.f32 %v3258, %v3298
    %v3309 = vmul.f32 %v3260, %v3300
    %v3310 = vmul.f32 %v3262, %v3302
    %3315 = vrot.lane.b32.xlu0 %v3307, 32
    %v3316 = vpop.permute.xlu0 %3315
    %3317 = vrot.lane.b32.xlu0 %v3308, 32
    %v3318 = vpop.permute.xlu0 %3317
    %3319 = vrot.lane.b32.xlu0 %v3309, 32
    %v3320 = vpop.permute.xlu0 %3319
    %3321 = vrot.lane.b32.xlu0 %v3310, 32
    %v3322 = vpop.permute.xlu0 %3321
    %v3327 = vadd.f32 %v3287, %v3316
    %v3328 = vadd.f32 %v3288, %v3318
    %v3329 = vadd.f32 %v3289, %v3320
    %v3330 = vadd.f32 %v3290, %v3322
    %v3331 = vtanh.pop %v3327
    %v3332 = vtanh.pop %v3328
    %v3333 = vtanh.pop %v3329
    %v3334 = vtanh.pop %v3330
    %3339 = vrot.lane.b32.xlu0 %v3331, 32
    %v3340 = vpop.permute.xlu0 %3339
    %3341 = vrot.lane.b32.xlu0 %v3332, 32
    %v3342 = vpop.permute.xlu0 %3341
    %3343 = vrot.lane.b32.xlu0 %v3333, 32
    %v3344 = vpop.permute.xlu0 %3343
    %3345 = vrot.lane.b32.xlu0 %v3334, 32
    %v3346 = vpop.permute.xlu0 %3345
    %v3351 = vmul.f32 %v3256, %v3340
    %v3352 = vmul.f32 %v3258, %v3342
    %v3353 = vmul.f32 %v3260, %v3344
    %v3354 = vmul.f32 %v3262, %v3346
    %3359 = vrot.lane.b32.xlu0 %v3327, 96
    %v3360 = vpop.permute.xlu0 %3359
    %3361 = vrot.lane.b32.xlu0 %v3328, 96
    %v3362 = vpop.permute.xlu0 %3361
    %3363 = vrot.lane.b32.xlu0 %v3329, 96
    %v3364 = vpop.permute.xlu0 %3363
    %3365 = vrot.lane.b32.xlu0 %v3330, 96
    %v3366 = vpop.permute.xlu0 %3365
    %3371 = vst.msk [vmem:[#allocation4] sm:$0xff] %vm704, %v3360
    %3372 = vst.msk [vmem:[#allocation4 + $0x8] sm:$0xff] %vm704, %v3362
    %3373 = vst.msk [vmem:[#allocation4 + $0x10] sm:$0xff] %vm704, %v3364
    %3374 = vst.msk [vmem:[#allocation4 + $0x18] sm:$0xff] %vm704, %v3366
    %3377 = vrot.lane.b32.xlu0 %v3351, 64
    %v3378 = vpop.permute.xlu0 %3377
    %3379 = vrot.lane.b32.xlu0 %v3352, 64
    %v3380 = vpop.permute.xlu0 %3379
    %3383 = vst.msk [vmem:[#allocation3] sm:$0xff] %vm704, %v3378
    %3384 = vst.msk [vmem:[#allocation3 + $0x8] sm:$0xff] %vm704, %v3380
    %3387 = vrot.lane.b32.xlu0 %v3353, 96
    %v3388 = vpop.permute.xlu0 %3387
    %3389 = vrot.lane.b32.xlu0 %v3354, 96
    %v3390 = vpop.permute.xlu0 %3389
    %3393 = vst.msk [vmem:[#allocation3 + $0x10] sm:$0xff] %vm2555, %v3388
    %3394 = vst.msk [vmem:[#allocation3 + $0x18] sm:$0xff] %vm2555, %v3390
    %s3395 = smul.u32 %s3130, 16
    %s3396 = scalar_lea.vmem [#allocation5], %s3395
    %3397 = vst.msk [vmem:[%s3396] sm:$0xff] %vm704, %v3378
    %3398 = vst.msk [vmem:[%s3396 + $0x8] sm:$0xff] %vm704, %v3380
    %3399 = vrot.lane.b32.xlu0 %v3353, 64
    %v3400 = vpop.permute.xlu0 %3399
    %3401 = vrot.lane.b32.xlu0 %v3354, 64
    %v3402 = vpop.permute.xlu0 %3401
    %s3405 = smul.u32 %s3131, 16
    %s3406 = scalar_lea.vmem [#allocation6], %s3405
    %3407 = vst.msk [vmem:[%s3406] sm:$0xff] %vm704, %v3400
    %3408 = vst.msk [vmem:[%s3406 + $0x8] sm:$0xff] %vm704, %v3402
  $region61: #{brain_lstm_forward.1} parent=0 // loop_footer
    %s2291 = sadd.s32 1, %s2287
  $region62: #{brain_lstm_forward.1} parent=0 // loop_footer_branch
    %2286 = sbr.rel target = $region58
  $region63: #{brain_lstm_forward.1} parent=0 // loop_exit
    _
  %v3409 = vld [vmem:[#allocation5] sm:$0xff]
  %v3410 = vld [vmem:[#allocation5 + $0x8] sm:$0xff]
  %v3411 = vld [vmem:[#allocation5 + $0x10] sm:$0xff]
  %v3412 = vld [vmem:[#allocation5 + $0x18] sm:$0xff]
  %v3413 = vld [vmem:[#allocation5 + $0x20] sm:$0xff]
  %v3414 = vld [vmem:[#allocation5 + $0x28] sm:$0xff]
  %v3415 = vld [vmem:[#allocation5 + $0x30] sm:$0xff]
  %v3416 = vld [vmem:[#allocation5 + $0x38] sm:$0xff]
  %v3417 = vld [vmem:[#allocation5 + $0x40] sm:$0xff]
  %v3418 = vld [vmem:[#allocation5 + $0x48] sm:$0xff]
  %v3419 = vld [vmem:[#allocation5 + $0x50] sm:$0xff]
  %v3420 = vld [vmem:[#allocation5 + $0x58] sm:$0xff]
  %v3421 = vld [vmem:[#allocation5 + $0x60] sm:$0xff]
  %v3422 = vld [vmem:[#allocation5 + $0x68] sm:$0xff]
  %v3423 = vld [vmem:[#allocation5 + $0x70] sm:$0xff]
  %v3424 = vld [vmem:[#allocation5 + $0x78] sm:$0xff]
  %v3425 = vpack.c.bf16 %v3410, %v3409
  %v3426 = vpack.c.bf16 %v3412, %v3411
  %v3427 = vpack.c.bf16 %v3414, %v3413
  %v3428 = vpack.c.bf16 %v3416, %v3415
  %v3429 = vpack.c.bf16 %v3418, %v3417
  %v3430 = vpack.c.bf16 %v3420, %v3419
  %v3431 = vpack.c.bf16 %v3422, %v3421
  %v3432 = vpack.c.bf16 %v3424, %v3423
  %v3433 = vld [vmem:[#allocation6] sm:$0xff]
  %v3434 = vld [vmem:[#allocation6 + $0x8] sm:$0xff]
  %v3435 = vld [vmem:[#allocation6 + $0x10] sm:$0xff]
  %v3436 = vld [vmem:[#allocation6 + $0x18] sm:$0xff]
  %v3437 = vld [vmem:[#allocation6 + $0x20] sm:$0xff]
  %v3438 = vld [vmem:[#allocation6 + $0x28] sm:$0xff]
  %v3439 = vld [vmem:[#allocation6 + $0x30] sm:$0xff]
  %v3440 = vld [vmem:[#allocation6 + $0x38] sm:$0xff]
  %v3441 = vld [vmem:[#allocation6 + $0x40] sm:$0xff]
  %v3442 = vld [vmem:[#allocation6 + $0x48] sm:$0xff]
  %v3443 = vld [vmem:[#allocation6 + $0x50] sm:$0xff]
  %v3444 = vld [vmem:[#allocation6 + $0x58] sm:$0xff]
  %v3445 = vld [vmem:[#allocation6 + $0x60] sm:$0xff]
  %v3446 = vld [vmem:[#allocation6 + $0x68] sm:$0xff]
  %v3447 = vld [vmem:[#allocation6 + $0x70] sm:$0xff]
  %v3448 = vld [vmem:[#allocation6 + $0x78] sm:$0xff]
  %v3449 = vpack.c.bf16 %v3434, %v3433
  %v3450 = vpack.c.bf16 %v3436, %v3435
  %v3451 = vpack.c.bf16 %v3438, %v3437
  %v3452 = vpack.c.bf16 %v3440, %v3439
  %v3453 = vpack.c.bf16 %v3442, %v3441
  %v3454 = vpack.c.bf16 %v3444, %v3443
  %v3455 = vpack.c.bf16 %v3446, %v3445
  %v3456 = vpack.c.bf16 %v3448, %v3447
  %v3457 = vld [vmem:[%s7] sm:$0xf]
  %v3458 = vld [vmem:[%s7 + $0x4] sm:$0xf]
  %v3459 = vld [vmem:[%s7 + $0x8] sm:$0xf]
  %v3460 = vld [vmem:[%s7 + $0xc] sm:$0xf]
  %v3461 = vld [vmem:[%s7 + $0x10] sm:$0xf]
  %v3462 = vld [vmem:[%s7 + $0x14] sm:$0xf]
  %v3463 = vld [vmem:[%s7 + $0x18] sm:$0xf]
  %v3464 = vld [vmem:[%s7 + $0x1c] sm:$0xf]
  %v3469 = vunpack.c.l.b16 %v3461
  %v3470 = vunpack.c.l.b16 %v3462
  %v3471 = vunpack.c.l.b16 %v3463
  %v3472 = vunpack.c.l.b16 %v3464
  %v3473 = vpack.c.b16 %v3470, %v3469
  %v3474 = vpack.c.b16 %v3472, %v3471
  %v3478 = vsel %vm704, %v3449, 0
  %v3481 = vsel %vm704, %v3450, 0
  %v3484 = vsel %vm704, %v3451, 0
  %v3487 = vsel %vm704, %v3452, 0
  %v3490 = vsel %vm704, %v3453, 0
  %v3493 = vsel %vm704, %v3454, 0
  %v3496 = vsel %vm704, %v3455, 0
  %v3499 = vsel %vm704, %v3456, 0
  %3501 = vmatprep.subr.bf16.mxu0 0
  %3502 = vmatpush1.bf16.msra.mxu0 %v3473
  %3503 = vmatprep.subr.bf16.mxu0 0
  %3504 = vmatpush1.bf16.msra.mxu0 %v3474
  %3505 = vmatprep.subr.bf16.mxu0 0
  %3506 = vmatpush1.bf16.msra.mxu0 0
  %3507 = vmatprep.subr.bf16.mxu0 0
  %3508 = vmatpush1.bf16.msra.mxu0 0
  %3509 = vmatprep.subr.bf16.mxu0 0
  %3510 = vmatpush1.bf16.msra.mxu0 0
  %3511 = vmatprep.subr.bf16.mxu0 0
  %3512 = vmatpush1.bf16.msra.mxu0 0
  %3513 = vmatprep.subr.bf16.mxu0 0
  %3514 = vmatpush1.bf16.msra.mxu0 0
  %3515 = vmatprep.subr.bf16.mxu0 0
  %3516 = vmatpush1.bf16.msra.mxu0 0
  %3517 = vmatprep.subr.bf16.mxu0 0
  %3518 = vmatpush1.bf16.msra.mxu0 0
  %3519 = vmatprep.subr.bf16.mxu0 0
  %3520 = vmatpush1.bf16.msra.mxu0 0
  %3521 = vmatprep.subr.bf16.mxu0 0
  %3522 = vmatpush1.bf16.msra.mxu0 0
  %3523 = vmatprep.subr.bf16.mxu0 0
  %3524 = vmatpush1.bf16.msra.mxu0 0
  %3525 = vmatprep.subr.bf16.mxu0 0
  %3526 = vmatpush1.bf16.msra.mxu0 0
  %3527 = vmatprep.subr.bf16.mxu0 0
  %3528 = vmatpush1.bf16.msra.mxu0 0
  %3529 = vmatprep.subr.bf16.mxu0 0
  %3530 = vmatpush1.bf16.msra.mxu0 0
  %3531 = vmatprep.subr.bf16.mxu0 0
  %3532 = vmatpush1.bf16.msra.mxu0 0
  %3533 = vmatprep.mubr.bf16.mxu0 0
  %3534 = vmatmul.mubr.bf16.gmra.mrb[0].mxu0 %v3478
  %v3535 = vpop.f32.mrb[0].mxu0
  %v3536 = vadd.f32 0.0, %v3535
  %v3537 = vpop.f32.mrb[0].mxu0
  %v3538 = vpop.f32.mrb[0].mxu0
  %v3539 = vadd.f32 0.0, %v3538
  %v3540 = vpop.f32.mrb[0].mxu0
  %3541 = vmatprep.mubr.bf16.mxu0 0
  %3542 = vmatmul.mubr.bf16.gmra.mrb[0].mxu0 %v3481
  %v3543 = vpop.f32.mrb[0].mxu0
  %v3544 = vadd.f32 0.0, %v3543
  %v3545 = vpop.f32.mrb[0].mxu0
  %v3546 = vpop.f32.mrb[0].mxu0
  %v3547 = vadd.f32 0.0, %v3546
  %v3548 = vpop.f32.mrb[0].mxu0
  %3549 = vmatprep.mubr.bf16.mxu0 0
  %3550 = vmatmul.mubr.bf16.gmra.mrb[0].mxu0 %v3484
  %v3551 = vpop.f32.mrb[0].mxu0
  %v3552 = vadd.f32 0.0, %v3551
  %v3553 = vpop.f32.mrb[0].mxu0
  %v3554 = vpop.f32.mrb[0].mxu0
  %v3555 = vadd.f32 0.0, %v3554
  %v3556 = vpop.f32.mrb[0].mxu0
  %3557 = vmatprep.mubr.bf16.mxu0 0
  %3558 = vmatmul.mubr.bf16.gmra.mrb[0].mxu0 %v3487
  %v3559 = vpop.f32.mrb[0].mxu0
  %v3560 = vadd.f32 0.0, %v3559
  %v3561 = vpop.f32.mrb[0].mxu0
  %v3562 = vpop.f32.mrb[0].mxu0
  %v3563 = vadd.f32 0.0, %v3562
  %v3564 = vpop.f32.mrb[0].mxu0
  %3565 = vmatprep.mubr.bf16.mxu0 0
  %3566 = vmatmul.mubr.bf16.gmra.mrb[0].mxu0 %v3490
  %v3567 = vpop.f32.mrb[0].mxu0
  %v3568 = vadd.f32 0.0, %v3567
  %v3569 = vpop.f32.mrb[0].mxu0
  %v3570 = vpop.f32.mrb[0].mxu0
  %v3571 = vadd.f32 0.0, %v3570
  %v3572 = vpop.f32.mrb[0].mxu0
  %3573 = vmatprep.mubr.bf16.mxu0 0
  %3574 = vmatmul.mubr.bf16.gmra.mrb[0].mxu0 %v3493
  %v3575 = vpop.f32.mrb[0].mxu0
  %v3576 = vadd.f32 0.0, %v3575
  %v3577 = vpop.f32.mrb[0].mxu0
  %v3578 = vpop.f32.mrb[0].mxu0
  %v3579 = vadd.f32 0.0, %v3578
  %v3580 = vpop.f32.mrb[0].mxu0
  %3581 = vmatprep.mubr.bf16.mxu0 0
  %3582 = vmatmul.mubr.bf16.gmra.mrb[0].mxu0 %v3496
  %v3583 = vpop.f32.mrb[0].mxu0
  %v3584 = vadd.f32 0.0, %v3583
  %v3585 = vpop.f32.mrb[0].mxu0
  %v3586 = vpop.f32.mrb[0].mxu0
  %v3587 = vadd.f32 0.0, %v3586
  %v3588 = vpop.f32.mrb[0].mxu0
  %3589 = vmatprep.mubr.bf16.mxu0 0
  %3590 = vmatmul.mubr.bf16.gmra.mrb[0].mxu0 %v3499
  %v3591 = vpop.f32.mrb[0].mxu0
  %v3592 = vadd.f32 0.0, %v3591
  %v3593 = vpop.f32.mrb[0].mxu0
  %v3594 = vpop.f32.mrb[0].mxu0
  %v3595 = vadd.f32 0.0, %v3594
  %v3596 = vpop.f32.mrb[0].mxu0
  %3597 = vdwg.mxu0
  %v3602 = vunpack.c.l.b16 %v3457
  %v3603 = vunpack.c.l.b16 %v3458
  %v3604 = vunpack.c.l.b16 %v3459
  %v3605 = vunpack.c.l.b16 %v3460
  %v3606 = vpack.c.b16 %v3603, %v3602
  %v3607 = vpack.c.b16 %v3605, %v3604
  %v3611 = vsel %vm704, %v3425, 0
  %v3614 = vsel %vm704, %v3426, 0
  %v3617 = vsel %vm704, %v3427, 0
  %v3620 = vsel %vm704, %v3428, 0
  %v3623 = vsel %vm704, %v3429, 0
  %v3626 = vsel %vm704, %v3430, 0
  %v3629 = vsel %vm704, %v3431, 0
  %v3632 = vsel %vm704, %v3432, 0
  %3634 = vmatprep.subr.bf16.mxu0 0
  %3635 = vmatpush1.bf16.msra.mxu0 %v3606
  %3636 = vmatprep.subr.bf16.mxu0 0
  %3637 = vmatpush1.bf16.msra.mxu0 %v3607
  %3638 = vmatprep.subr.bf16.mxu0 0
  %3639 = vmatpush1.bf16.msra.mxu0 0
  %3640 = vmatprep.subr.bf16.mxu0 0
  %3641 = vmatpush1.bf16.msra.mxu0 0
  %3642 = vmatprep.subr.bf16.mxu0 0
  %3643 = vmatpush1.bf16.msra.mxu0 0
  %3644 = vmatprep.subr.bf16.mxu0 0
  %3645 = vmatpush1.bf16.msra.mxu0 0
  %3646 = vmatprep.subr.bf16.mxu0 0
  %3647 = vmatpush1.bf16.msra.mxu0 0
  %3648 = vmatprep.subr.bf16.mxu0 0
  %3649 = vmatpush1.bf16.msra.mxu0 0
  %3650 = vmatprep.subr.bf16.mxu0 0
  %3651 = vmatpush1.bf16.msra.mxu0 0
  %3652 = vmatprep.subr.bf16.mxu0 0
  %3653 = vmatpush1.bf16.msra.mxu0 0
  %3654 = vmatprep.subr.bf16.mxu0 0
  %3655 = vmatpush1.bf16.msra.mxu0 0
  %3656 = vmatprep.subr.bf16.mxu0 0
  %3657 = vmatpush1.bf16.msra.mxu0 0
  %3658 = vmatprep.subr.bf16.mxu0 0
  %3659 = vmatpush1.bf16.msra.mxu0 0
  %3660 = vmatprep.subr.bf16.mxu0 0
  %3661 = vmatpush1.bf16.msra.mxu0 0
  %3662 = vmatprep.subr.bf16.mxu0 0
  %3663 = vmatpush1.bf16.msra.mxu0 0
  %3664 = vmatprep.subr.bf16.mxu0 0
  %3665 = vmatpush1.bf16.msra.mxu0 0
  %3666 = vmatprep.mubr.bf16.mxu0 0
  %3667 = vmatmul.mubr.bf16.gmra.mrb[0].mxu0 %v3611
  %v3668 = vpop.f32.mrb[0].mxu0
  %v3669 = vadd.f32 %v3536, %v3668
  %v3670 = vpop.f32.mrb[0].mxu0
  %v3671 = vpop.f32.mrb[0].mxu0
  %v3672 = vadd.f32 %v3539, %v3671
  %v3673 = vpop.f32.mrb[0].mxu0
  %3674 = vmatprep.mubr.bf16.mxu0 0
  %3675 = vmatmul.mubr.bf16.gmra.mrb[0].mxu0 %v3614
  %v3676 = vpop.f32.mrb[0].mxu0
  %v3677 = vadd.f32 %v3544, %v3676
  %v3678 = vpop.f32.mrb[0].mxu0
  %v3679 = vpop.f32.mrb[0].mxu0
  %v3680 = vadd.f32 %v3547, %v3679
  %v3681 = vpop.f32.mrb[0].mxu0
  %3682 = vmatprep.mubr.bf16.mxu0 0
  %3683 = vmatmul.mubr.bf16.gmra.mrb[0].mxu0 %v3617
  %v3684 = vpop.f32.mrb[0].mxu0
  %v3685 = vadd.f32 %v3552, %v3684
  %v3686 = vpop.f32.mrb[0].mxu0
  %v3687 = vpop.f32.mrb[0].mxu0
  %v3688 = vadd.f32 %v3555, %v3687
  %v3689 = vpop.f32.mrb[0].mxu0
  %3690 = vmatprep.mubr.bf16.mxu0 0
  %3691 = vmatmul.mubr.bf16.gmra.mrb[0].mxu0 %v3620
  %v3692 = vpop.f32.mrb[0].mxu0
  %v3693 = vadd.f32 %v3560, %v3692
  %v3694 = vpop.f32.mrb[0].mxu0
  %v3695 = vpop.f32.mrb[0].mxu0
  %v3696 = vadd.f32 %v3563, %v3695
  %v3697 = vpop.f32.mrb[0].mxu0
  %3698 = vmatprep.mubr.bf16.mxu0 0
  %3699 = vmatmul.mubr.bf16.gmra.mrb[0].mxu0 %v3623
  %v3700 = vpop.f32.mrb[0].mxu0
  %v3701 = vadd.f32 %v3568, %v3700
  %v3702 = vpop.f32.mrb[0].mxu0
  %v3703 = vpop.f32.mrb[0].mxu0
  %v3704 = vadd.f32 %v3571, %v3703
  %v3705 = vpop.f32.mrb[0].mxu0
  %3706 = vmatprep.mubr.bf16.mxu0 0
  %3707 = vmatmul.mubr.bf16.gmra.mrb[0].mxu0 %v3626
  %v3708 = vpop.f32.mrb[0].mxu0
  %v3709 = vadd.f32 %v3576, %v3708
  %v3710 = vpop.f32.mrb[0].mxu0
  %v3711 = vpop.f32.mrb[0].mxu0
  %v3712 = vadd.f32 %v3579, %v3711
  %v3713 = vpop.f32.mrb[0].mxu0
  %3714 = vmatprep.mubr.bf16.mxu0 0
  %3715 = vmatmul.mubr.bf16.gmra.mrb[0].mxu0 %v3629
  %v3716 = vpop.f32.mrb[0].mxu0
  %v3717 = vadd.f32 %v3584, %v3716
  %v3718 = vpop.f32.mrb[0].mxu0
  %v3719 = vpop.f32.mrb[0].mxu0
  %v3720 = vadd.f32 %v3587, %v3719
  %v3721 = vpop.f32.mrb[0].mxu0
  %3722 = vmatprep.mubr.bf16.mxu0 0
  %3723 = vmatmul.mubr.bf16.gmra.mrb[0].mxu0 %v3632
  %v3724 = vpop.f32.mrb[0].mxu0
  %v3725 = vadd.f32 %v3592, %v3724
  %v3726 = vpop.f32.mrb[0].mxu0
  %v3727 = vpop.f32.mrb[0].mxu0
  %v3728 = vadd.f32 %v3595, %v3727
  %v3729 = vpop.f32.mrb[0].mxu0
  %3730 = vdwg.mxu0
  %v3731 = vld [vmem:[%s0] sm:$0xf]
  %v3732 = vld [vmem:[%s0 + $0x4] sm:$0xf]
  %v3733 = vld [vmem:[%s0 + $0x8] sm:$0xf]
  %v3734 = vld [vmem:[%s0 + $0xc] sm:$0xf]
  %v3735 = vld [vmem:[%s0 + $0x10] sm:$0xf]
  %v3736 = vld [vmem:[%s0 + $0x14] sm:$0xf]
  %v3737 = vld [vmem:[%s0 + $0x18] sm:$0xf]
  %v3738 = vld [vmem:[%s0 + $0x1c] sm:$0xf]
  %v3739 = vld [vmem:[%s0 + $0x20] sm:$0xf]
  %v3740 = vld [vmem:[%s0 + $0x24] sm:$0xf]
  %v3741 = vld [vmem:[%s0 + $0x28] sm:$0xf]
  %v3742 = vld [vmem:[%s0 + $0x2c] sm:$0xf]
  %v3743 = vld [vmem:[%s0 + $0x30] sm:$0xf]
  %v3744 = vld [vmem:[%s0 + $0x34] sm:$0xf]
  %v3745 = vld [vmem:[%s0 + $0x38] sm:$0xf]
  %v3746 = vld [vmem:[%s0 + $0x3c] sm:$0xf]
  %v3747 = vld [vmem:[%s8] sm:$0xf]
  %v3764 = vunpack.c.l.b16 %v3731
  %v3765 = vunpack.c.l.b16 %v3732
  %v3766 = vunpack.c.l.b16 %v3733
  %v3767 = vunpack.c.l.b16 %v3734
  %v3768 = vunpack.c.l.b16 %v3735
  %v3769 = vunpack.c.l.b16 %v3736
  %v3770 = vunpack.c.l.b16 %v3737
  %v3771 = vunpack.c.l.b16 %v3738
  %v3772 = vunpack.c.l.b16 %v3739
  %v3773 = vunpack.c.l.b16 %v3740
  %v3774 = vunpack.c.l.b16 %v3741
  %v3775 = vunpack.c.l.b16 %v3742
  %v3776 = vunpack.c.l.b16 %v3743
  %v3777 = vunpack.c.l.b16 %v3744
  %v3778 = vunpack.c.l.b16 %v3745
  %v3779 = vunpack.c.l.b16 %v3746
  %v3780 = vpack.c.b16 %v3765, %v3764
  %v3781 = vpack.c.b16 %v3767, %v3766
  %v3782 = vpack.c.b16 %v3769, %v3768
  %v3783 = vpack.c.b16 %v3771, %v3770
  %v3784 = vpack.c.b16 %v3773, %v3772
  %v3785 = vpack.c.b16 %v3775, %v3774
  %v3786 = vpack.c.b16 %v3777, %v3776
  %v3787 = vpack.c.b16 %v3779, %v3778
  %v3789 = vsel %vm108, %v3780, 0
  %v3792 = vsel %vm108, %v3781, 0
  %v3795 = vsel %vm108, %v3782, 0
  %v3798 = vsel %vm108, %v3783, 0
  %v3801 = vsel %vm108, %v3784, 0
  %v3804 = vsel %vm108, %v3785, 0
  %v3807 = vsel %vm108, %v3786, 0
  %v3810 = vsel %vm108, %v3787, 0
  %v3813 = vsel %vm133, %v3747, 0
  %3815 = vmatprep.subr.bf16.mxu0 0
  %3816 = vmatpush1.bf16.msra.mxu0 %v3813
  %3817 = vmatprep.subr.bf16.mxu0 0
  %3818 = vmatpush1.bf16.msra.mxu0 0
  %3819 = vmatprep.subr.bf16.mxu0 0
  %3820 = vmatpush1.bf16.msra.mxu0 0
  %3821 = vmatprep.subr.bf16.mxu0 0
  %3822 = vmatpush1.bf16.msra.mxu0 0
  %3823 = vmatprep.subr.bf16.mxu0 0
  %3824 = vmatpush1.bf16.msra.mxu0 0
  %3825 = vmatprep.subr.bf16.mxu0 0
  %3826 = vmatpush1.bf16.msra.mxu0 0
  %3827 = vmatprep.subr.bf16.mxu0 0
  %3828 = vmatpush1.bf16.msra.mxu0 0
  %3829 = vmatprep.subr.bf16.mxu0 0
  %3830 = vmatpush1.bf16.msra.mxu0 0
  %3831 = vmatprep.subr.bf16.mxu0 0
  %3832 = vmatpush1.bf16.msra.mxu0 0
  %3833 = vmatprep.subr.bf16.mxu0 0
  %3834 = vmatpush1.bf16.msra.mxu0 0
  %3835 = vmatprep.subr.bf16.mxu0 0
  %3836 = vmatpush1.bf16.msra.mxu0 0
  %3837 = vmatprep.subr.bf16.mxu0 0
  %3838 = vmatpush1.bf16.msra.mxu0 0
  %3839 = vmatprep.subr.bf16.mxu0 0
  %3840 = vmatpush1.bf16.msra.mxu0 0
  %3841 = vmatprep.subr.bf16.mxu0 0
  %3842 = vmatpush1.bf16.msra.mxu0 0
  %3843 = vmatprep.subr.bf16.mxu0 0
  %3844 = vmatpush1.bf16.msra.mxu0 0
  %3845 = vmatprep.subr.bf16.mxu0 0
  %3846 = vmatpush1.bf16.msra.mxu0 0
  %3847 = vmatprep.mubr.bf16.mxu0 0
  %3848 = vmatmul.mubr.bf16.gmra.mrb[0].mxu0 %v3789
  %v3849 = vpop.f32.mrb[0].mxu0
  %v3850 = vadd.f32 0.0, %v3849
  %v3851 = vpop.f32.mrb[0].mxu0
  %v3852 = vpop.f32.mrb[0].mxu0
  %v3853 = vadd.f32 0.0, %v3852
  %v3854 = vpop.f32.mrb[0].mxu0
  %3855 = vmatprep.mubr.bf16.mxu0 0
  %3856 = vmatmul.mubr.bf16.gmra.mrb[0].mxu0 %v3792
  %v3857 = vpop.f32.mrb[0].mxu0
  %v3858 = vadd.f32 0.0, %v3857
  %v3859 = vpop.f32.mrb[0].mxu0
  %v3860 = vpop.f32.mrb[0].mxu0
  %v3861 = vadd.f32 0.0, %v3860
  %v3862 = vpop.f32.mrb[0].mxu0
  %3863 = vmatprep.mubr.bf16.mxu0 0
  %3864 = vmatmul.mubr.bf16.gmra.mrb[0].mxu0 %v3795
  %v3865 = vpop.f32.mrb[0].mxu0
  %v3866 = vadd.f32 0.0, %v3865
  %v3867 = vpop.f32.mrb[0].mxu0
  %v3868 = vpop.f32.mrb[0].mxu0
  %v3869 = vadd.f32 0.0, %v3868
  %v3870 = vpop.f32.mrb[0].mxu0
  %3871 = vmatprep.mubr.bf16.mxu0 0
  %3872 = vmatmul.mubr.bf16.gmra.mrb[0].mxu0 %v3798
  %v3873 = vpop.f32.mrb[0].mxu0
  %v3874 = vadd.f32 0.0, %v3873
  %v3875 = vpop.f32.mrb[0].mxu0
  %v3876 = vpop.f32.mrb[0].mxu0
  %v3877 = vadd.f32 0.0, %v3876
  %v3878 = vpop.f32.mrb[0].mxu0
  %3879 = vmatprep.mubr.bf16.mxu0 0
  %3880 = vmatmul.mubr.bf16.gmra.mrb[0].mxu0 %v3801
  %v3881 = vpop.f32.mrb[0].mxu0
  %v3882 = vadd.f32 0.0, %v3881
  %v3883 = vpop.f32.mrb[0].mxu0
  %v3884 = vpop.f32.mrb[0].mxu0
  %v3885 = vadd.f32 0.0, %v3884
  %v3886 = vpop.f32.mrb[0].mxu0
  %3887 = vmatprep.mubr.bf16.mxu0 0
  %3888 = vmatmul.mubr.bf16.gmra.mrb[0].mxu0 %v3804
  %v3889 = vpop.f32.mrb[0].mxu0
  %v3890 = vadd.f32 0.0, %v3889
  %v3891 = vpop.f32.mrb[0].mxu0
  %v3892 = vpop.f32.mrb[0].mxu0
  %v3893 = vadd.f32 0.0, %v3892
  %v3894 = vpop.f32.mrb[0].mxu0
  %3895 = vmatprep.mubr.bf16.mxu0 0
  %3896 = vmatmul.mubr.bf16.gmra.mrb[0].mxu0 %v3807
  %v3897 = vpop.f32.mrb[0].mxu0
  %v3898 = vadd.f32 0.0, %v3897
  %v3899 = vpop.f32.mrb[0].mxu0
  %v3900 = vpop.f32.mrb[0].mxu0
  %v3901 = vadd.f32 0.0, %v3900
  %v3902 = vpop.f32.mrb[0].mxu0
  %3903 = vmatprep.mubr.bf16.mxu0 0
  %3904 = vmatmul.mubr.bf16.gmra.mrb[0].mxu0 %v3810
  %v3905 = vpop.f32.mrb[0].mxu0
  %v3906 = vadd.f32 0.0, %v3905
  %v3907 = vpop.f32.mrb[0].mxu0
  %v3908 = vpop.f32.mrb[0].mxu0
  %v3909 = vadd.f32 0.0, %v3908
  %v3910 = vpop.f32.mrb[0].mxu0
  %3911 = vdwg.mxu0
  %v3912 = vadd.f32 %v3669, %v3850
  %v3913 = vadd.f32 %v3672, %v3853
  %v3914 = vadd.f32 %v3677, %v3858
  %v3915 = vadd.f32 %v3680, %v3861
  %v3916 = vadd.f32 %v3685, %v3866
  %v3917 = vadd.f32 %v3688, %v3869
  %v3918 = vadd.f32 %v3693, %v3874
  %v3919 = vadd.f32 %v3696, %v3877
  %v3920 = vadd.f32 %v3701, %v3882
  %v3921 = vadd.f32 %v3704, %v3885
  %v3922 = vadd.f32 %v3709, %v3890
  %v3923 = vadd.f32 %v3712, %v3893
  %v3924 = vadd.f32 %v3717, %v3898
  %v3925 = vadd.f32 %v3720, %v3901
  %v3926 = vadd.f32 %v3725, %v3906
  %v3927 = vadd.f32 %v3728, %v3909
  %v3928 = vld [vmem:[%s0 + $0x8] sm:$0xf]
  %v3929 = vld [vmem:[%s0 + $0xc] sm:$0xf]
  %v3930 = vld [vmem:[%s0 + $0x10] sm:$0xf]
  %v3931 = vld [vmem:[%s0 + $0x14] sm:$0xf]
  %v3932 = vld [vmem:[%s0 + $0x18] sm:$0xf]
  %v3933 = vld [vmem:[%s0 + $0x1c] sm:$0xf]
  %v3934 = vld [vmem:[%s0 + $0x20] sm:$0xf]
  %v3935 = vld [vmem:[%s0 + $0x24] sm:$0xf]
  %v3936 = vld [vmem:[%s0 + $0x28] sm:$0xf]
  %v3937 = vld [vmem:[%s0 + $0x2c] sm:$0xf]
  %v3938 = vld [vmem:[%s0 + $0x30] sm:$0xf]
  %v3939 = vld [vmem:[%s0 + $0x34] sm:$0xf]
  %v3940 = vld [vmem:[%s0 + $0x38] sm:$0xf]
  %v3941 = vld [vmem:[%s0 + $0x3c] sm:$0xf]
  %v3942 = vld [vmem:[%s0 + $0x40] sm:$0xf]
  %v3943 = vld [vmem:[%s0 + $0x44] sm:$0xf]
  %s3944 = scalar_lea.vmem %s8, 4
  %v3945 = vld [vmem:[%s3944] sm:$0xf]
  %v3962 = vunpack.c.l.b16 %v3928
  %v3963 = vunpack.c.l.b16 %v3929
  %v3964 = vunpack.c.l.b16 %v3930
  %v3965 = vunpack.c.l.b16 %v3931
  %v3966 = vunpack.c.l.b16 %v3932
  %v3967 = vunpack.c.l.b16 %v3933
  %v3968 = vunpack.c.l.b16 %v3934
  %v3969 = vunpack.c.l.b16 %v3935
  %v3970 = vunpack.c.l.b16 %v3936
  %v3971 = vunpack.c.l.b16 %v3937
  %v3972 = vunpack.c.l.b16 %v3938
  %v3973 = vunpack.c.l.b16 %v3939
  %v3974 = vunpack.c.l.b16 %v3940
  %v3975 = vunpack.c.l.b16 %v3941
  %v3976 = vunpack.c.l.b16 %v3942
  %v3977 = vunpack.c.l.b16 %v3943
  %v3978 = vpack.c.b16 %v3963, %v3962
  %v3979 = vpack.c.b16 %v3965, %v3964
  %v3980 = vpack.c.b16 %v3967, %v3966
  %v3981 = vpack.c.b16 %v3969, %v3968
  %v3982 = vpack.c.b16 %v3971, %v3970
  %v3983 = vpack.c.b16 %v3973, %v3972
  %v3984 = vpack.c.b16 %v3975, %v3974
  %v3985 = vpack.c.b16 %v3977, %v3976
  %v3987 = vsel %vm108, %v3978, 0
  %v3990 = vsel %vm108, %v3979, 0
  %v3993 = vsel %vm108, %v3980, 0
  %v3996 = vsel %vm108, %v3981, 0
  %v3999 = vsel %vm108, %v3982, 0
  %v4002 = vsel %vm108, %v3983, 0
  %v4005 = vsel %vm108, %v3984, 0
  %v4008 = vsel %vm108, %v3985, 0
  %v4011 = vsel %vm133, %v3945, 0
  %4013 = vmatprep.subr.bf16.mxu0 0
  %4014 = vmatpush1.bf16.msra.mxu0 %v4011
  %4015 = vmatprep.subr.bf16.mxu0 0
  %4016 = vmatpush1.bf16.msra.mxu0 0
  %4017 = vmatprep.subr.bf16.mxu0 0
  %4018 = vmatpush1.bf16.msra.mxu0 0
  %4019 = vmatprep.subr.bf16.mxu0 0
  %4020 = vmatpush1.bf16.msra.mxu0 0
  %4021 = vmatprep.subr.bf16.mxu0 0
  %4022 = vmatpush1.bf16.msra.mxu0 0
  %4023 = vmatprep.subr.bf16.mxu0 0
  %4024 = vmatpush1.bf16.msra.mxu0 0
  %4025 = vmatprep.subr.bf16.mxu0 0
  %4026 = vmatpush1.bf16.msra.mxu0 0
  %4027 = vmatprep.subr.bf16.mxu0 0
  %4028 = vmatpush1.bf16.msra.mxu0 0
  %4029 = vmatprep.subr.bf16.mxu0 0
  %4030 = vmatpush1.bf16.msra.mxu0 0
  %4031 = vmatprep.subr.bf16.mxu0 0
  %4032 = vmatpush1.bf16.msra.mxu0 0
  %4033 = vmatprep.subr.bf16.mxu0 0
  %4034 = vmatpush1.bf16.msra.mxu0 0
  %4035 = vmatprep.subr.bf16.mxu0 0
  %4036 = vmatpush1.bf16.msra.mxu0 0
  %4037 = vmatprep.subr.bf16.mxu0 0
  %4038 = vmatpush1.bf16.msra.mxu0 0
  %4039 = vmatprep.subr.bf16.mxu0 0
  %4040 = vmatpush1.bf16.msra.mxu0 0
  %4041 = vmatprep.subr.bf16.mxu0 0
  %4042 = vmatpush1.bf16.msra.mxu0 0
  %4043 = vmatprep.subr.bf16.mxu0 0
  %4044 = vmatpush1.bf16.msra.mxu0 0
  %4045 = vmatprep.mubr.bf16.mxu0 0
  %4046 = vmatmul.mubr.bf16.gmra.mrb[0].mxu0 %v3987
  %v4047 = vpop.f32.mrb[0].mxu0
  %v4048 = vadd.f32 0.0, %v4047
  %v4049 = vpop.f32.mrb[0].mxu0
  %v4050 = vpop.f32.mrb[0].mxu0
  %v4051 = vadd.f32 0.0, %v4050
  %v4052 = vpop.f32.mrb[0].mxu0
  %4053 = vmatprep.mubr.bf16.mxu0 0
  %4054 = vmatmul.mubr.bf16.gmra.mrb[0].mxu0 %v3990
  %v4055 = vpop.f32.mrb[0].mxu0
  %v4056 = vadd.f32 0.0, %v4055
  %v4057 = vpop.f32.mrb[0].mxu0
  %v4058 = vpop.f32.mrb[0].mxu0
  %v4059 = vadd.f32 0.0, %v4058
  %v4060 = vpop.f32.mrb[0].mxu0
  %4061 = vmatprep.mubr.bf16.mxu0 0
  %4062 = vmatmul.mubr.bf16.gmra.mrb[0].mxu0 %v3993
  %v4063 = vpop.f32.mrb[0].mxu0
  %v4064 = vadd.f32 0.0, %v4063
  %v4065 = vpop.f32.mrb[0].mxu0
  %v4066 = vpop.f32.mrb[0].mxu0
  %v4067 = vadd.f32 0.0, %v4066
  %v4068 = vpop.f32.mrb[0].mxu0
  %4069 = vmatprep.mubr.bf16.mxu0 0
  %4070 = vmatmul.mubr.bf16.gmra.mrb[0].mxu0 %v3996
  %v4071 = vpop.f32.mrb[0].mxu0
  %v4072 = vadd.f32 0.0, %v4071
  %v4073 = vpop.f32.mrb[0].mxu0
  %v4074 = vpop.f32.mrb[0].mxu0
  %v4075 = vadd.f32 0.0, %v4074
  %v4076 = vpop.f32.mrb[0].mxu0
  %4077 = vmatprep.mubr.bf16.mxu0 0
  %4078 = vmatmul.mubr.bf16.gmra.mrb[0].mxu0 %v3999
  %v4079 = vpop.f32.mrb[0].mxu0
  %v4080 = vadd.f32 0.0, %v4079
  %v4081 = vpop.f32.mrb[0].mxu0
  %v4082 = vpop.f32.mrb[0].mxu0
  %v4083 = vadd.f32 0.0, %v4082
  %v4084 = vpop.f32.mrb[0].mxu0
  %4085 = vmatprep.mubr.bf16.mxu0 0
  %4086 = vmatmul.mubr.bf16.gmra.mrb[0].mxu0 %v4002
  %v4087 = vpop.f32.mrb[0].mxu0
  %v4088 = vadd.f32 0.0, %v4087
  %v4089 = vpop.f32.mrb[0].mxu0
  %v4090 = vpop.f32.mrb[0].mxu0
  %v4091 = vadd.f32 0.0, %v4090
  %v4092 = vpop.f32.mrb[0].mxu0
  %4093 = vmatprep.mubr.bf16.mxu0 0
  %4094 = vmatmul.mubr.bf16.gmra.mrb[0].mxu0 %v4005
  %v4095 = vpop.f32.mrb[0].mxu0
  %v4096 = vadd.f32 0.0, %v4095
  %v4097 = vpop.f32.mrb[0].mxu0
  %v4098 = vpop.f32.mrb[0].mxu0
  %v4099 = vadd.f32 0.0, %v4098
  %v4100 = vpop.f32.mrb[0].mxu0
  %4101 = vmatprep.mubr.bf16.mxu0 0
  %4102 = vmatmul.mubr.bf16.gmra.mrb[0].mxu0 %v4008
  %v4103 = vpop.f32.mrb[0].mxu0
  %v4104 = vadd.f32 0.0, %v4103
  %v4105 = vpop.f32.mrb[0].mxu0
  %v4106 = vpop.f32.mrb[0].mxu0
  %v4107 = vadd.f32 0.0, %v4106
  %v4108 = vpop.f32.mrb[0].mxu0
  %4109 = vdwg.mxu0
  %v4110 = vadd.f32 %v3912, %v4048
  %v4111 = vadd.f32 %v3913, %v4051
  %v4112 = vadd.f32 %v3914, %v4056
  %v4113 = vadd.f32 %v3915, %v4059
  %v4114 = vadd.f32 %v3916, %v4064
  %v4115 = vadd.f32 %v3917, %v4067
  %v4116 = vadd.f32 %v3918, %v4072
  %v4117 = vadd.f32 %v3919, %v4075
  %v4118 = vadd.f32 %v3920, %v4080
  %v4119 = vadd.f32 %v3921, %v4083
  %v4120 = vadd.f32 %v3922, %v4088
  %v4121 = vadd.f32 %v3923, %v4091
  %v4122 = vadd.f32 %v3924, %v4096
  %v4123 = vadd.f32 %v3925, %v4099
  %v4124 = vadd.f32 %v3926, %v4104
  %v4125 = vadd.f32 %v3927, %v4107
  %v4126 = vld [vmem:[%s0 + $0x10] sm:$0xf]
  %v4127 = vld [vmem:[%s0 + $0x14] sm:$0xf]
  %v4128 = vld [vmem:[%s0 + $0x18] sm:$0xf]
  %v4129 = vld [vmem:[%s0 + $0x1c] sm:$0xf]
  %v4130 = vld [vmem:[%s0 + $0x20] sm:$0xf]
  %v4131 = vld [vmem:[%s0 + $0x24] sm:$0xf]
  %v4132 = vld [vmem:[%s0 + $0x28] sm:$0xf]
  %v4133 = vld [vmem:[%s0 + $0x2c] sm:$0xf]
  %v4134 = vld [vmem:[%s0 + $0x30] sm:$0xf]
  %v4135 = vld [vmem:[%s0 + $0x34] sm:$0xf]
  %v4136 = vld [vmem:[%s0 + $0x38] sm:$0xf]
  %v4137 = vld [vmem:[%s0 + $0x3c] sm:$0xf]
  %v4138 = vld [vmem:[%s0 + $0x40] sm:$0xf]
  %v4139 = vld [vmem:[%s0 + $0x44] sm:$0xf]
  %v4140 = vld [vmem:[%s0 + $0x48] sm:$0xf]
  %v4141 = vld [vmem:[%s0 + $0x4c] sm:$0xf]
  %s4142 = scalar_lea.vmem %s8, 8
  %v4143 = vld [vmem:[%s4142] sm:$0xf]
  %v4160 = vunpack.c.l.b16 %v4126
  %v4161 = vunpack.c.l.b16 %v4127
  %v4162 = vunpack.c.l.b16 %v4128
  %v4163 = vunpack.c.l.b16 %v4129
  %v4164 = vunpack.c.l.b16 %v4130
  %v4165 = vunpack.c.l.b16 %v4131
  %v4166 = vunpack.c.l.b16 %v4132
  %v4167 = vunpack.c.l.b16 %v4133
  %v4168 = vunpack.c.l.b16 %v4134
  %v4169 = vunpack.c.l.b16 %v4135
  %v4170 = vunpack.c.l.b16 %v4136
  %v4171 = vunpack.c.l.b16 %v4137
  %v4172 = vunpack.c.l.b16 %v4138
  %v4173 = vunpack.c.l.b16 %v4139
  %v4174 = vunpack.c.l.b16 %v4140
  %v4175 = vunpack.c.l.b16 %v4141
  %v4176 = vpack.c.b16 %v4161, %v4160
  %v4177 = vpack.c.b16 %v4163, %v4162
  %v4178 = vpack.c.b16 %v4165, %v4164
  %v4179 = vpack.c.b16 %v4167, %v4166
  %v4180 = vpack.c.b16 %v4169, %v4168
  %v4181 = vpack.c.b16 %v4171, %v4170
  %v4182 = vpack.c.b16 %v4173, %v4172
  %v4183 = vpack.c.b16 %v4175, %v4174
  %v4185 = vsel %vm108, %v4176, 0
  %v4188 = vsel %vm108, %v4177, 0
  %v4191 = vsel %vm108, %v4178, 0
  %v4194 = vsel %vm108, %v4179, 0
  %v4197 = vsel %vm108, %v4180, 0
  %v4200 = vsel %vm108, %v4181, 0
  %v4203 = vsel %vm108, %v4182, 0
  %v4206 = vsel %vm108, %v4183, 0
  %v4209 = vsel %vm133, %v4143, 0
  %4211 = vmatprep.subr.bf16.mxu0 0
  %4212 = vmatpush1.bf16.msra.mxu0 %v4209
  %4213 = vmatprep.subr.bf16.mxu0 0
  %4214 = vmatpush1.bf16.msra.mxu0 0
  %4215 = vmatprep.subr.bf16.mxu0 0
  %4216 = vmatpush1.bf16.msra.mxu0 0
  %4217 = vmatprep.subr.bf16.mxu0 0
  %4218 = vmatpush1.bf16.msra.mxu0 0
  %4219 = vmatprep.subr.bf16.mxu0 0
  %4220 = vmatpush1.bf16.msra.mxu0 0
  %4221 = vmatprep.subr.bf16.mxu0 0
  %4222 = vmatpush1.bf16.msra.mxu0 0
  %4223 = vmatprep.subr.bf16.mxu0 0
  %4224 = vmatpush1.bf16.msra.mxu0 0
  %4225 = vmatprep.subr.bf16.mxu0 0
  %4226 = vmatpush1.bf16.msra.mxu0 0
  %4227 = vmatprep.subr.bf16.mxu0 0
  %4228 = vmatpush1.bf16.msra.mxu0 0
  %4229 = vmatprep.subr.bf16.mxu0 0
  %4230 = vmatpush1.bf16.msra.mxu0 0
  %4231 = vmatprep.subr.bf16.mxu0 0
  %4232 = vmatpush1.bf16.msra.mxu0 0
  %4233 = vmatprep.subr.bf16.mxu0 0
  %4234 = vmatpush1.bf16.msra.mxu0 0
  %4235 = vmatprep.subr.bf16.mxu0 0
  %4236 = vmatpush1.bf16.msra.mxu0 0
  %4237 = vmatprep.subr.bf16.mxu0 0
  %4238 = vmatpush1.bf16.msra.mxu0 0
  %4239 = vmatprep.subr.bf16.mxu0 0
  %4240 = vmatpush1.bf16.msra.mxu0 0
  %4241 = vmatprep.subr.bf16.mxu0 0
  %4242 = vmatpush1.bf16.msra.mxu0 0
  %4243 = vmatprep.mubr.bf16.mxu0 0
  %4244 = vmatmul.mubr.bf16.gmra.mrb[0].mxu0 %v4185
  %v4245 = vpop.f32.mrb[0].mxu0
  %v4246 = vadd.f32 0.0, %v4245
  %v4247 = vpop.f32.mrb[0].mxu0
  %v4248 = vpop.f32.mrb[0].mxu0
  %v4249 = vadd.f32 0.0, %v4248
  %v4250 = vpop.f32.mrb[0].mxu0
  %4251 = vmatprep.mubr.bf16.mxu0 0
  %4252 = vmatmul.mubr.bf16.gmra.mrb[0].mxu0 %v4188
  %v4253 = vpop.f32.mrb[0].mxu0
  %v4254 = vadd.f32 0.0, %v4253
  %v4255 = vpop.f32.mrb[0].mxu0
  %v4256 = vpop.f32.mrb[0].mxu0
  %v4257 = vadd.f32 0.0, %v4256
  %v4258 = vpop.f32.mrb[0].mxu0
  %4259 = vmatprep.mubr.bf16.mxu0 0
  %4260 = vmatmul.mubr.bf16.gmra.mrb[0].mxu0 %v4191
  %v4261 = vpop.f32.mrb[0].mxu0
  %v4262 = vadd.f32 0.0, %v4261
  %v4263 = vpop.f32.mrb[0].mxu0
  %v4264 = vpop.f32.mrb[0].mxu0
  %v4265 = vadd.f32 0.0, %v4264
  %v4266 = vpop.f32.mrb[0].mxu0
  %4267 = vmatprep.mubr.bf16.mxu0 0
  %4268 = vmatmul.mubr.bf16.gmra.mrb[0].mxu0 %v4194
  %v4269 = vpop.f32.mrb[0].mxu0
  %v4270 = vadd.f32 0.0, %v4269
  %v4271 = vpop.f32.mrb[0].mxu0
  %v4272 = vpop.f32.mrb[0].mxu0
  %v4273 = vadd.f32 0.0, %v4272
  %v4274 = vpop.f32.mrb[0].mxu0
  %4275 = vmatprep.mubr.bf16.mxu0 0
  %4276 = vmatmul.mubr.bf16.gmra.mrb[0].mxu0 %v4197
  %v4277 = vpop.f32.mrb[0].mxu0
  %v4278 = vadd.f32 0.0, %v4277
  %v4279 = vpop.f32.mrb[0].mxu0
  %v4280 = vpop.f32.mrb[0].mxu0
  %v4281 = vadd.f32 0.0, %v4280
  %v4282 = vpop.f32.mrb[0].mxu0
  %4283 = vmatprep.mubr.bf16.mxu0 0
  %4284 = vmatmul.mubr.bf16.gmra.mrb[0].mxu0 %v4200
  %v4285 = vpop.f32.mrb[0].mxu0
  %v4286 = vadd.f32 0.0, %v4285
  %v4287 = vpop.f32.mrb[0].mxu0
  %v4288 = vpop.f32.mrb[0].mxu0
  %v4289 = vadd.f32 0.0, %v4288
  %v4290 = vpop.f32.mrb[0].mxu0
  %4291 = vmatprep.mubr.bf16.mxu0 0
  %4292 = vmatmul.mubr.bf16.gmra.mrb[0].mxu0 %v4203
  %v4293 = vpop.f32.mrb[0].mxu0
  %v4294 = vadd.f32 0.0, %v4293
  %v4295 = vpop.f32.mrb[0].mxu0
  %v4296 = vpop.f32.mrb[0].mxu0
  %v4297 = vadd.f32 0.0, %v4296
  %v4298 = vpop.f32.mrb[0].mxu0
  %4299 = vmatprep.mubr.bf16.mxu0 0
  %4300 = vmatmul.mubr.bf16.gmra.mrb[0].mxu0 %v4206
  %v4301 = vpop.f32.mrb[0].mxu0
  %v4302 = vadd.f32 0.0, %v4301
  %v4303 = vpop.f32.mrb[0].mxu0
  %v4304 = vpop.f32.mrb[0].mxu0
  %v4305 = vadd.f32 0.0, %v4304
  %v4306 = vpop.f32.mrb[0].mxu0
  %4307 = vdwg.mxu0
  %v4308 = vadd.f32 %v4110, %v4246
  %v4309 = vadd.f32 %v4111, %v4249
  %v4310 = vadd.f32 %v4112, %v4254
  %v4311 = vadd.f32 %v4113, %v4257
  %v4312 = vadd.f32 %v4114, %v4262
  %v4313 = vadd.f32 %v4115, %v4265
  %v4314 = vadd.f32 %v4116, %v4270
  %v4315 = vadd.f32 %v4117, %v4273
  %v4316 = vadd.f32 %v4118, %v4278
  %v4317 = vadd.f32 %v4119, %v4281
  %v4318 = vadd.f32 %v4120, %v4286
  %v4319 = vadd.f32 %v4121, %v4289
  %v4320 = vadd.f32 %v4122, %v4294
  %v4321 = vadd.f32 %v4123, %v4297
  %v4322 = vadd.f32 %v4124, %v4302
  %v4323 = vadd.f32 %v4125, %v4305
  %v4324 = vld [vmem:[%s9] sm:$0x1]
  %v4326 = vlaneseq
  %v4327 = vshrl.u32 %v4326, 7
  %v4328 = vsub.s32 0, %v4327
  %v4329 = vrot.slane %v4324, %v4328
  %v4331 = vadd.f32 %v4308, %v4329
  %v4332 = vadd.f32 %v4309, %v4329
  %v4333 = vadd.f32 %v4310, %v4329
  %v4334 = vadd.f32 %v4311, %v4329
  %v4335 = vadd.f32 %v4312, %v4329
  %v4336 = vadd.f32 %v4313, %v4329
  %v4337 = vadd.f32 %v4314, %v4329
  %v4338 = vadd.f32 %v4315, %v4329
  %v4339 = vadd.f32 %v4316, %v4329
  %v4340 = vadd.f32 %v4317, %v4329
  %v4341 = vadd.f32 %v4318, %v4329
  %v4342 = vadd.f32 %v4319, %v4329
  %v4343 = vadd.f32 %v4320, %v4329
  %v4344 = vadd.f32 %v4321, %v4329
  %v4345 = vadd.f32 %v4322, %v4329
  %v4346 = vadd.f32 %v4323, %v4329
  %v4347 = vsel %vm704, %v4331, -inf
  %v4348 = vsel %vm704, %v4333, -inf
  %v4349 = vsel %vm704, %v4335, -inf
  %v4350 = vmax.f32 %v4347, %v4349
  %v4351 = vsel %vm704, %v4337, -inf
  %v4352 = vmax.f32 %v4348, %v4351
  %v4353 = vsel %vm704, %v4339, -inf
  %v4354 = vmax.f32 %v4350, %v4353
  %v4355 = vsel %vm704, %v4341, -inf
  %v4356 = vmax.f32 %v4352, %v4355
  %v4357 = vsel %vm704, %v4343, -inf
  %v4358 = vmax.f32 %v4354, %v4357
  %v4359 = vsel %vm704, %v4345, -inf
  %v4360 = vmax.f32 %v4356, %v4359
  %v4361 = vmax.f32 %v4358, %v4360
  %v4362 = vsel %vm704, %v4332, -inf
  %v4363 = vsel %vm704, %v4334, -inf
  %v4364 = vsel %vm704, %v4336, -inf
  %v4365 = vmax.f32 %v4362, %v4364
  %v4366 = vsel %vm704, %v4338, -inf
  %v4367 = vmax.f32 %v4363, %v4366
  %v4368 = vsel %vm704, %v4340, -inf
  %v4369 = vmax.f32 %v4365, %v4368
  %v4370 = vsel %vm704, %v4342, -inf
  %v4371 = vmax.f32 %v4367, %v4370
  %v4372 = vsel %vm704, %v4344, -inf
  %v4373 = vmax.f32 %v4369, %v4372
  %v4374 = vsel %vm704, %v4346, -inf
  %v4375 = vmax.f32 %v4371, %v4374
  %v4376 = vmax.f32 %v4373, %v4375
  %v4377 = vpack.c.bf16 %v4376, %v4361
  %v4378 = vld [vmem:[%s10] sm:$0xf]
  %v4379 = vld [vmem:[%s10 + $0x4] sm:$0xf]
  %v4380 = vld [vmem:[%s10 + $0x8] sm:$0xf]
  %v4381 = vld [vmem:[%s10 + $0xc] sm:$0xf]
  %v4382 = vld [vmem:[%s11] sm:$0x1]
  %v4384 = vlaneseq
  %v4385 = vshrl.u32 %v4384, 7
  %v4386 = vsub.s32 0, %v4385
  %v4387 = vrot.slane %v4382, %v4386
  %v4393 = vunpack.c.l.b16 %v4378
  %v4394 = vunpack.c.l.b16 %v4379
  %v4395 = vunpack.c.l.b16 %v4380
  %v4396 = vunpack.c.l.b16 %v4381
  %v4397 = vpack.c.b16 %v4394, %v4393
  %v4398 = vpack.c.b16 %v4396, %v4395
  %v4402 = vsel %vm704, %v4377, 0
  %4404 = vmatprep.subr.bf16.mxu0 0
  %4405 = vmatpush1.bf16.msra.mxu0 %v4397
  %4406 = vmatprep.subr.bf16.mxu0 0
  %4407 = vmatpush1.bf16.msra.mxu0 %v4398
  %4408 = vmatprep.subr.bf16.mxu0 0
  %4409 = vmatpush1.bf16.msra.mxu0 0
  %4410 = vmatprep.subr.bf16.mxu0 0
  %4411 = vmatpush1.bf16.msra.mxu0 0
  %4412 = vmatprep.subr.bf16.mxu0 0
  %4413 = vmatpush1.bf16.msra.mxu0 0
  %4414 = vmatprep.subr.bf16.mxu0 0
  %4415 = vmatpush1.bf16.msra.mxu0 0
  %4416 = vmatprep.subr.bf16.mxu0 0
  %4417 = vmatpush1.bf16.msra.mxu0 0
  %4418 = vmatprep.subr.bf16.mxu0 0
  %4419 = vmatpush1.bf16.msra.mxu0 0
  %4420 = vmatprep.subr.bf16.mxu0 0
  %4421 = vmatpush1.bf16.msra.mxu0 0
  %4422 = vmatprep.subr.bf16.mxu0 0
  %4423 = vmatpush1.bf16.msra.mxu0 0
  %4424 = vmatprep.subr.bf16.mxu0 0
  %4425 = vmatpush1.bf16.msra.mxu0 0
  %4426 = vmatprep.subr.bf16.mxu0 0
  %4427 = vmatpush1.bf16.msra.mxu0 0
  %4428 = vmatprep.subr.bf16.mxu0 0
  %4429 = vmatpush1.bf16.msra.mxu0 0
  %4430 = vmatprep.subr.bf16.mxu0 0
  %4431 = vmatpush1.bf16.msra.mxu0 0
  %4432 = vmatprep.subr.bf16.mxu0 0
  %4433 = vmatpush1.bf16.msra.mxu0 0
  %4434 = vmatprep.subr.bf16.mxu0 0
  %4435 = vmatpush1.bf16.msra.mxu0 0
  %4436 = vmatprep.mubr.bf16.mxu0 0
  %4437 = vmatmul.mubr.bf16.gmra.mrb[0].mxu0 %v4402
  %v4438 = vpop.f32.mrb[0].mxu0
  %v4439 = vadd.f32 %v4387, %v4438
  %v4440 = vpop.f32.mrb[0].mxu0
  %v4441 = vpop.f32.mrb[0].mxu0
  %v4442 = vadd.f32 %v4387, %v4441
  %v4443 = vpop.f32.mrb[0].mxu0
  %4444 = vdwg.mxu0
  %vm4445 = vcmask 130048
  %4446 = vst.msk [vmem:[%s12] sm:$0xff] %vm4445, %v4439
  %4447 = vst.msk [vmem:[%s12 + $0x8] sm:$0xff] %vm4445, %v4442
  // Predicated region
  $region64: #{brain_lstm_forward.1} parent=0 // pred_check
    _
  $region65: #{brain_lstm_forward.1} parent=0 // pred_check_branch
    %4449 = sbr.rel (0) target = $region67
  $region66: #{brain_lstm_forward.1} parent=0 // pred_region
    _
  $region67: #{brain_lstm_forward.1} parent=0 // pred_fallthru
    _
  // Predicated region
  $region68: #{brain_lstm_forward.1} parent=0 // pred_check
    _
  $region69: #{brain_lstm_forward.1} parent=0 // pred_check_branch
    %4451 = sbr.rel (0) target = $region71
  $region70: #{brain_lstm_forward.1} parent=0 // pred_region
    _
  $region71: #{brain_lstm_forward.1} parent=0 // pred_fallthru
    _

</llo_original>
